<compile_context>
chip_gen: v7x
topology: tpu7x:2x2x1
jax: 0.10.0
libtpu: 0.0.40
codegen_flags: <defaults>
</compile_context>

<pallas_src>
import jax
import jax.numpy as jnp
from jax.experimental import pallas as pl
from jax.experimental.pallas import tpu as pltpu


def _roundup(v, m):
    return ((v + m - 1) // m) * m


def _largest_aligned_divisor(total, requested, align=128):
    """Largest multiple of `align` that divides `total` and is <= requested."""
    assert total % align == 0
    cand = min(requested, total)
    cand -= cand % align
    cand = max(cand, align)
    while cand > align and total % cand != 0:
        cand -= align
    assert total % cand == 0 and cand % align == 0
    return cand


def _multicore_tensorcore():
    """True only on chips with >1 TensorCore (v7x); safe fallback is False."""
    try:
        kind = (getattr(jax.devices()[0], "device_kind", "") or "").lower()
    except Exception:
        return False
    return "v7" in kind


def googlenet_trip_adaptive(x, params, *, tile_f=512, tile_d=2048, n_par=None):
    """x: [B, 9, H, W] float32 (NCHW).  Returns [B, num_classes] float32."""
    B, C9, H, W = x.shape
    assert C9 == 9, "expects a 9-channel input (3 slices of 3 channels)"
    D = 3 * H * W

    # ---- branch inputs stacked: (3, B, D) bf16 (channel-major flatten == torch)
    xs = jnp.transpose(x.reshape(B, 3, D), (1, 0, 2)).astype(jnp.bfloat16)

    # ---- feature weights / biases stacked over the 3 branches
    wf = jnp.stack([params["wf1"], params["wf2"], params["wf3"]],
                   axis=0).astype(jnp.bfloat16)                     # (3, D, F)
    bf = jnp.stack([params["bf1"], params["bf2"], params["bf3"]], axis=0)  # (3,1,F) f32

    # ---- adaptive branch weights: clamp at 0, normalize to sum 1 (as in forward),
    # then fold (linearly) into the per-branch classifier weights/biases.
    # NOTE: if all three entries clamp to 0 this is NaN, matching the torch module.
    w = jnp.maximum(params["weight"], 0.0)
    w = w / jnp.sum(w)
    wc = jnp.concatenate([params["wc1"] * w[0],
                          params["wc2"] * w[1],
                          params["wc3"] * w[2]],
                         axis=0).astype(jnp.bfloat16)               # (3F, NC), branch-major rows
    bc_total = w[0] * params["bc1"] + w[1] * params["bc2"] + w[2] * params["bc3"]

    F = wf.shape[2]            # num_ftrs (GoogleNet fc.in_features = 1024)
    NC = wc.shape[1]           # num_classes
    assert F % 128 == 0, "num_ftrs must be a multiple of 128"
    tile_f = _largest_aligned_divisor(F, tile_f, 128)

    # ---- pad D to a lane-aligned multiple of 128 (zero rows keep matmuls exact)
    D_pad = _roundup(D, 128)
    if D_pad != D:
        xs = jnp.pad(xs, ((0, 0), (0, 0), (0, D_pad - D)))
        wf = jnp.pad(wf, ((0, 0), (0, D_pad - D), (0, 0)))
    tile_d = _largest_aligned_divisor(D_pad, tile_d, 128)

    n_ftiles = F // tile_f
    n_dtiles = D_pad // tile_d

    # 2-way split of the feature-tile reduction only where a second TensorCore
    # exists (v7x). On single-core chips it is pure overhead.
    if n_par is None:
        n_par = 2 if (_multicore_tensorcore() and n_ftiles % 2 == 0) else 1
    assert n_ftiles % n_par == 0
    tiles_per_par = n_ftiles // n_par

    def kernel(x_ref, wf_ref, bf_ref, wc_ref, o_ref, facc_ref):
        p = pl.program_id(0)
        j = pl.program_id(1)          # feature tile within this core's share
        d = pl.program_id(2)          # D tile (innermost reduction)

        @pl.when(jnp.logical_and(j == 0, d == 0))
        def _init_out():
            o_ref[...] = jnp.zeros_like(o_ref)

        @pl.when(d == 0)
        def _init_facc():
            facc_ref[...] = jnp.zeros_like(facc_ref)

        # All three branches in one batched MXU matmul; bf16 in, f32 accumulate.
        # x_ref: (3, B, tile_d), wf_ref: (3, tile_d, tile_f)
        facc_ref[...] += jnp.einsum(
            "nbd,ndf->nbf", x_ref[...], wf_ref[...],
            preferred_element_type=jnp.float32)

        @pl.when(d == pl.num_programs(2) - 1)
        def _classify():
            # Add feature bias once, after the full D reduction.
            feats = (facc_ref[...] + bf_ref[...]).astype(jnp.bfloat16)  # (3,B,tile_f)
            t = p * pl.num_programs(1) + j          # global feature-tile index
            part = None
            for i in range(3):                      # tiny K=tile_f, N=NC matmuls
                row0 = pl.multiple_of(i * F + t * tile_f, tile_f)
                wct = wc_ref[pl.ds(row0, tile_f), :]                    # (tile_f, NC)
                di = jnp.dot(feats[i], wct, preferred_element_type=jnp.float32)
                part = di if part is None else part + di
            o_ref[...] += part

    x_spec = pl.BlockSpec((3, B, tile_d), lambda p, j, d: (0, 0, d))
    wf_spec = pl.BlockSpec((3, tile_d, tile_f),
                           lambda p, j, d: (0, d, p * tiles_per_par + j))
    bf_spec = pl.BlockSpec((3, 1, tile_f),
                           lambda p, j, d: (0, 0, p * tiles_per_par + j))
    wc_spec = pl.BlockSpec((3 * F, NC), lambda p, j, d: (0, 0))   # resident, pl.ds in-kernel
    out_spec = pl.BlockSpec((None, B, NC), lambda p, j, d: (p, 0, 0))

    # Explicit VMEM budget (defaults are only 16/32 MiB scoped); clamp under
    # v7x's 64 MiB physical with headroom.
    vmem_est = (
        2 * 3 * _roundup(B, 16) * tile_d * 2        # x blocks (double-buffered)
        + 2 * 3 * tile_d * tile_f * 2               # wf blocks
        + 2 * 3 * 8 * tile_f * 4                    # bf blocks
        + 2 * 3 * F * _roundup(NC, 128) * 2         # wc resident (lane-padded)
        + 3 * _roundup(B, 8) * tile_f * 4           # facc scratch
        + 2 * _roundup(B, 8) * _roundup(NC, 128) * 4
    )
    vmem_limit = int(min(max(vmem_est * 3 // 2 + (4 << 20), 32 << 20), 56 << 20))

    partials = pl.pallas_call(
        kernel,
        out_shape=jax.ShapeDtypeStruct((n_par, B, NC), jnp.float32),
        grid_spec=pltpu.PrefetchScalarGridSpec(
            num_scalar_prefetch=0,
            grid=(n_par, tiles_per_par, n_dtiles),
            in_specs=[x_spec, wf_spec, bf_spec, wc_spec],
            out_specs=out_spec,
            scratch_shapes=[pltpu.VMEM((3, B, tile_f), jnp.float32)],
        ),
        compiler_params=pltpu.CompilerParams(
            dimension_semantics=("parallel", "arbitrary", "arbitrary"),
            vmem_limit_bytes=vmem_limit),
    )(xs, wf, bf, wc)

    out = partials[0] if n_par == 1 else partials.sum(axis=0)
    return out + bc_total


def _reference(x, params):
    """Pure f32 JAX reference with the module's forward semantics."""
    B = x.shape[0]
    D = 3 * x.shape[2] * x.shape[3]
    x1 = x[:, 0:3].reshape(B, D)
    x2 = x[:, 3:6].reshape(B, D)
    x3 = x[:, 6:9].reshape(B, D)
    l1 = (x1 @ params["wf1"] + params["bf1"]) @ params["wc1"] + params["bc1"]
    l2 = (x2 @ params["wf2"] + params["bf2"]) @ params["wc2"] + params["bc2"]
    l3 = (x3 @ params["wf3"] + params["bf3"]) @ params["wc3"] + params["bc3"]
    w = jnp.maximum(params["weight"], 0.0)
    w = w / jnp.sum(w)
    return w[0] * l1 + w[1] * l2 + w[2] * l3


def make_params(key, D, num_ftrs=1024, num_classes=2):
    ks = jax.random.split(key, 12)
    s_f = 1.0 / jnp.sqrt(jnp.float32(D))
    s_c = 1.0 / jnp.sqrt(jnp.float32(num_ftrs))
    return {
        "wf1": jax.random.normal(ks[0], (D, num_ftrs), jnp.float32) * s_f,
        "bf1": jax.random.normal(ks[1], (1, num_ftrs), jnp.float32) * 0.01,
        "wf2": jax.random.normal(ks[2], (D, num_ftrs), jnp.float32) * s_f,
        "bf2": jax.random.normal(ks[3], (1, num_ftrs), jnp.float32) * 0.01,
        "wf3": jax.random.normal(ks[4], (D, num_ftrs), jnp.float32) * s_f,
        "bf3": jax.random.normal(ks[5], (1, num_ftrs), jnp.float32) * 0.01,
        "wc1": jax.random.normal(ks[6], (num_ftrs, num_classes), jnp.float32) * s_c,
        "bc1": jax.random.normal(ks[7], (1, num_classes), jnp.float32) * 0.01,
        "wc2": jax.random.normal(ks[8], (num_ftrs, num_classes), jnp.float32) * s_c,
        "bc2": jax.random.normal(ks[9], (1, num_classes), jnp.float32) * 0.01,
        "wc3": jax.random.normal(ks[10], (num_ftrs, num_classes), jnp.float32) * s_c,
        "bc3": jax.random.normal(ks[11], (1, num_classes), jnp.float32) * 0.01,
        # nn.Parameter([1/3, 1/3, 1/3]) from the module.
        "weight": jnp.array([1.0 / 3.0, 1.0 / 3.0, 1.0 / 3.0], jnp.float32),
    }


if __name__ == "__main__":
    key = jax.random.PRNGKey(0)
    k_x, k_p = jax.random.split(key)

    B, H, W = 2, 16, 16
    num_ftrs, num_classes = 1024, 2
    x = jax.random.normal(k_x, (B, 9, H, W), jnp.float32)
    params = make_params(k_p, D=3 * H * W, num_ftrs=num_ftrs,
                         num_classes=num_classes)

    out = googlenet_trip_adaptive(x, params)
    out = jax.block_until_ready(out)

    ref = _reference(x, params)
    assert out.shape == (B, num_classes)
    # bf16 streamed weights/activations (f32 accumulate) -> loosened tolerance.
    assert jnp.allclose(out, ref, rtol=3e-2, atol=3e-2), "mismatch vs reference"

    print("KERNEL_OK")
</pallas_src>

<mosaic_0001>
module attributes {stable_mosaic.version = 11 : i64} {
  func.func @kernel(%arg0: i32, %arg1: i32, %arg2: i32, %arg3: memref<3x2x768xbf16, #tpu.memory_space<vmem>>, %arg4: memref<3x768x512xbf16, #tpu.memory_space<vmem>>, %arg5: memref<3x1x512xf32, #tpu.memory_space<vmem>>, %arg6: memref<3072x2xbf16, #tpu.memory_space<vmem>>, %arg7: memref<1x2x2xf32, #tpu.memory_space<vmem>>, %arg8: memref<3x2x512xf32, #tpu.memory_space<vmem>>) attributes {dimension_semantics = [#tpu.dimension_semantics<parallel>, #tpu.dimension_semantics<arbitrary>, #tpu.dimension_semantics<arbitrary>], iteration_bounds = array<i64: 1, 2, 1>, scalar_prefetch = 0 : i64, scratch_operands = 1 : i64, tpu.core_type = #tpu.core_type<tc>, window_params = [{transform_indices = @transform_0, window_bounds = array<i64: 3, 2, 768>}, {transform_indices = @transform_1, window_bounds = array<i64: 3, 768, 512>}, {transform_indices = @transform_2, window_bounds = array<i64: 3, 1, 512>}, {pipeline_mode = #tpu.pipeline_mode<synchronous>, transform_indices = @transform_3, window_bounds = array<i64: 3072, 2>}, {transform_indices = @transform_4, window_bounds = array<i64: 1, 2, 2>}]} {
    %c0_i32 = arith.constant 0 : i32
    %0 = arith.cmpi eq, %arg1, %c0_i32 : i32
    %c0_i32_0 = arith.constant 0 : i32
    %1 = arith.cmpi eq, %arg2, %c0_i32_0 : i32
    %2 = arith.andi %0, %1 : i1
    %3 = arith.extui %2 : i1 to i32
    %c0_i32_1 = arith.constant 0 : i32
    %4 = arith.cmpi ne, %3, %c0_i32_1 : i32
    scf.if %4 {
      %cst_17 = arith.constant 0.000000e+00 : f32
      %17 = vector.broadcast %cst_17 : f32 to vector<2x2xf32>
      %c0_18 = arith.constant 0 : index
      %c0_19 = arith.constant 0 : index
      %c0_20 = arith.constant 0 : index
      %18 = vector.load %arg7[%c0_18, %c0_19, %c0_20] : memref<1x2x2xf32, #tpu.memory_space<vmem>>, vector<1x2x2xf32>
      %19 = vector.shape_cast %18 : vector<1x2x2xf32> to vector<2x2xf32>
      %20 = vector.shape_cast %17 : vector<2x2xf32> to vector<1x2x2xf32>
      tpu.vector_store %arg7[%c0_18, %c0_19, %c0_20], %20 {strides = array<i32>} : memref<1x2x2xf32, #tpu.memory_space<vmem>>, vector<1x2x2xf32>,
    } else {
    }
    %c0_i32_2 = arith.constant 0 : i32
    %5 = arith.cmpi eq, %arg2, %c0_i32_2 : i32
    %6 = arith.extui %5 : i1 to i32
    %c0_i32_3 = arith.constant 0 : i32
    %7 = arith.cmpi ne, %6, %c0_i32_3 : i32
    scf.if %7 {
      %cst_17 = arith.constant 0.000000e+00 : f32
      %17 = vector.broadcast %cst_17 : f32 to vector<3x2x512xf32>
      %c0_18 = arith.constant 0 : index
      %c0_19 = arith.constant 0 : index
      %c0_20 = arith.constant 0 : index
      %18 = vector.load %arg8[%c0_18, %c0_19, %c0_20] : memref<3x2x512xf32, #tpu.memory_space<vmem>>, vector<3x2x512xf32>
      tpu.vector_store %arg8[%c0_18, %c0_19, %c0_20], %17 {strides = array<i32>} : memref<3x2x512xf32, #tpu.memory_space<vmem>>, vector<3x2x512xf32>,
    } else {
    }
    %c0 = arith.constant 0 : index
    %c0_4 = arith.constant 0 : index
    %c0_5 = arith.constant 0 : index
    %8 = vector.load %arg8[%c0, %c0_4, %c0_5] : memref<3x2x512xf32, #tpu.memory_space<vmem>>, vector<3x2x512xf32>
    %c0_6 = arith.constant 0 : index
    %c0_7 = arith.constant 0 : index
    %c0_8 = arith.constant 0 : index
    %9 = vector.load %arg3[%c0_6, %c0_7, %c0_8] : memref<3x2x768xbf16, #tpu.memory_space<vmem>>, vector<3x2x768xbf16>
    %c0_9 = arith.constant 0 : index
    %c0_10 = arith.constant 0 : index
    %c0_11 = arith.constant 0 : index
    %10 = vector.load %arg4[%c0_9, %c0_10, %c0_11] : memref<3x768x512xbf16, #tpu.memory_space<vmem>>, vector<3x768x512xbf16>
    "tpu.trace_start"() <{level = 10 : i32, message = "nbd,ndf->nbf"}> : () -> ()
    %cst = arith.constant dense<0.000000e+00> : vector<3x2x512xf32>
    %11 = tpu.matmul %9, %10, %cst {dimension_numbers = #tpu.dot_dimension_numbers<[2], [1], [1], [2], [0, 0, 0, 1, 1, 2], [0], [0]>} : vector<3x2x768xbf16>, vector<3x768x512xbf16>, vector<3x2x512xf32> -> vector<3x2x512xf32>
    "tpu.trace_stop"() : () -> ()
    %12 = arith.addf %8, %11 : vector<3x2x512xf32>
    %c0_12 = arith.constant 0 : index
    %c0_13 = arith.constant 0 : index
    %c0_14 = arith.constant 0 : index
    %13 = vector.load %arg8[%c0_12, %c0_13, %c0_14] : memref<3x2x512xf32, #tpu.memory_space<vmem>>, vector<3x2x512xf32>
    tpu.vector_store %arg8[%c0_12, %c0_13, %c0_14], %12 {strides = array<i32>} : memref<3x2x512xf32, #tpu.memory_space<vmem>>, vector<3x2x512xf32>,
    %c0_i32_15 = arith.constant 0 : i32
    %14 = arith.cmpi eq, %arg2, %c0_i32_15 : i32
    %15 = arith.extui %14 : i1 to i32
    %c0_i32_16 = arith.constant 0 : i32
    %16 = arith.cmpi ne, %15, %c0_i32_16 : i32
    scf.if %16 {
      %c0_17 = arith.constant 0 : index
      %c0_18 = arith.constant 0 : index
      %c0_19 = arith.constant 0 : index
      %17 = vector.load %arg8[%c0_17, %c0_18, %c0_19] : memref<3x2x512xf32, #tpu.memory_space<vmem>>, vector<3x2x512xf32>
      %c0_20 = arith.constant 0 : index
      %c0_21 = arith.constant 0 : index
      %c0_22 = arith.constant 0 : index
      %18 = vector.load %arg5[%c0_20, %c0_21, %c0_22] : memref<3x1x512xf32, #tpu.memory_space<vmem>>, vector<3x1x512xf32>
      %19 = vector.broadcast %18 : vector<3x1x512xf32> to vector<3x2x512xf32>
      %20 = arith.addf %17, %19 : vector<3x2x512xf32>
      %21 = arith.truncf %20 : vector<3x2x512xf32> to vector<3x2x512xbf16>
      %c2_i32 = arith.constant 2 : i32
      %22 = arith.muli %arg0, %c2_i32 : i32
      %23 = arith.addi %22, %arg1 : i32
      %c512_i32 = arith.constant 512 : i32
      %24 = arith.muli %23, %c512_i32 : i32
      %c0_i32_23 = arith.constant 0 : i32
      %25 = arith.addi %c0_i32_23, %24 : i32
      %26 = tpu.assume_multiple %25, 512 : i32
      %27 = arith.index_cast %26 : i32 to index
      %c0_24 = arith.constant 0 : index
      %28 = vector.load %arg6[%27, %c0_24] : memref<3072x2xbf16, #tpu.memory_space<vmem>>, vector<512x2xbf16>
      %29 = vector.extract_strided_slice %21 {offsets = [0, 0, 0], sizes = [1, 2, 512], strides = [1, 1, 1]} : vector<3x2x512xbf16> to vector<1x2x512xbf16>
      %30 = vector.shape_cast %29 : vector<1x2x512xbf16> to vector<2x512xbf16>
      %cst_25 = arith.constant dense<0.000000e+00> : vector<2x2xf32>
      %31 = tpu.matmul %30, %28, %cst_25 {dimension_numbers = #tpu.dot_dimension_numbers<[1], [0], [0], [1], [0, 0, 1, 1], [], []>} : vector<2x512xbf16>, vector<512x2xbf16>, vector<2x2xf32> -> vector<2x2xf32>
      %c512_i32_26 = arith.constant 512 : i32
      %32 = arith.muli %23, %c512_i32_26 : i32
      %c1024_i32 = arith.constant 1024 : i32
      %33 = arith.addi %c1024_i32, %32 : i32
      %34 = tpu.assume_multiple %33, 512 : i32
      %35 = arith.index_cast %34 : i32 to index
      %c0_27 = arith.constant 0 : index
      %36 = vector.load %arg6[%35, %c0_27] : memref<3072x2xbf16, #tpu.memory_space<vmem>>, vector<512x2xbf16>
      %37 = vector.extract_strided_slice %21 {offsets = [1, 0, 0], sizes = [1, 2, 512], strides = [1, 1, 1]} : vector<3x2x512xbf16> to vector<1x2x512xbf16>
      %38 = vector.shape_cast %37 : vector<1x2x512xbf16> to vector<2x512xbf16>
      %cst_28 = arith.constant dense<0.000000e+00> : vector<2x2xf32>
      %39 = tpu.matmul %38, %36, %cst_28 {dimension_numbers = #tpu.dot_dimension_numbers<[1], [0], [0], [1], [0, 0, 1, 1], [], []>} : vector<2x512xbf16>, vector<512x2xbf16>, vector<2x2xf32> -> vector<2x2xf32>
      %40 = arith.addf %31, %39 : vector<2x2xf32>
      %c512_i32_29 = arith.constant 512 : i32
      %41 = arith.muli %23, %c512_i32_29 : i32
      %c2048_i32 = arith.constant 2048 : i32
      %42 = arith.addi %c2048_i32, %41 : i32
      %43 = tpu.assume_multiple %42, 512 : i32
      %44 = arith.index_cast %43 : i32 to index
      %c0_30 = arith.constant 0 : index
      %45 = vector.load %arg6[%44, %c0_30] : memref<3072x2xbf16, #tpu.memory_space<vmem>>, vector<512x2xbf16>
      %46 = vector.extract_strided_slice %21 {offsets = [2, 0, 0], sizes = [1, 2, 512], strides = [1, 1, 1]} : vector<3x2x512xbf16> to vector<1x2x512xbf16>
      %47 = vector.shape_cast %46 : vector<1x2x512xbf16> to vector<2x512xbf16>
      %cst_31 = arith.constant dense<0.000000e+00> : vector<2x2xf32>
      %48 = tpu.matmul %47, %45, %cst_31 {dimension_numbers = #tpu.dot_dimension_numbers<[1], [0], [0], [1], [0, 0, 1, 1], [], []>} : vector<2x512xbf16>, vector<512x2xbf16>, vector<2x2xf32> -> vector<2x2xf32>
      %49 = arith.addf %40, %48 : vector<2x2xf32>
      %c0_32 = arith.constant 0 : index
      %c0_33 = arith.constant 0 : index
      %c0_34 = arith.constant 0 : index
      %50 = vector.load %arg7[%c0_32, %c0_33, %c0_34] : memref<1x2x2xf32, #tpu.memory_space<vmem>>, vector<1x2x2xf32>
      %51 = vector.shape_cast %50 : vector<1x2x2xf32> to vector<2x2xf32>
      %52 = arith.addf %51, %49 : vector<2x2xf32>
      %c0_35 = arith.constant 0 : index
      %c0_36 = arith.constant 0 : index
      %c0_37 = arith.constant 0 : index
      %53 = vector.load %arg7[%c0_35, %c0_36, %c0_37] : memref<1x2x2xf32, #tpu.memory_space<vmem>>, vector<1x2x2xf32>
      %54 = vector.shape_cast %53 : vector<1x2x2xf32> to vector<2x2xf32>
      %55 = vector.shape_cast %52 : vector<2x2xf32> to vector<1x2x2xf32>
      tpu.vector_store %arg7[%c0_35, %c0_36, %c0_37], %55 {strides = array<i32>} : memref<1x2x2xf32, #tpu.memory_space<vmem>>, vector<1x2x2xf32>,
    } else {
    }
    return
  }
  func.func @transform_0(%arg0: i32, %arg1: i32, %arg2: i32) -> (i32, i32, i32) {
    %c0_i32 = arith.constant 0 : i32
    %c0_i32_0 = arith.constant 0 : i32
    %c0_i32_1 = arith.constant 0 : i32
    return %c0_i32, %c0_i32_0, %arg2 : i32, i32, i32
  }
  func.func @transform_1(%arg0: i32, %arg1: i32, %arg2: i32) -> (i32, i32, i32) {
    %c2_i32 = arith.constant 2 : i32
    %0 = arith.muli %arg0, %c2_i32 : i32
    %1 = arith.addi %0, %arg1 : i32
    %c0_i32 = arith.constant 0 : i32
    %c0_i32_0 = arith.constant 0 : i32
    return %c0_i32, %arg2, %1 : i32, i32, i32
  }
  func.func @transform_2(%arg0: i32, %arg1: i32, %arg2: i32) -> (i32, i32, i32) {
    %c2_i32 = arith.constant 2 : i32
    %0 = arith.muli %arg0, %c2_i32 : i32
    %1 = arith.addi %0, %arg1 : i32
    %c0_i32 = arith.constant 0 : i32
    %c0_i32_0 = arith.constant 0 : i32
    %c0_i32_1 = arith.constant 0 : i32
    return %c0_i32, %c0_i32_0, %1 : i32, i32, i32
  }
  func.func @transform_3(%arg0: i32, %arg1: i32, %arg2: i32) -> (i32, i32) {
    %c0_i32 = arith.constant 0 : i32
    %c0_i32_0 = arith.constant 0 : i32
    %c0_i32_1 = arith.constant 0 : i32
    return %c0_i32, %c0_i32_0 : i32, i32
  }
  func.func @transform_4(%arg0: i32, %arg1: i32, %arg2: i32) -> (i32, i32, i32) {
    %c0_i32 = arith.constant 0 : i32
    %c0_i32_0 = arith.constant 0 : i32
    %c0_i32_1 = arith.constant 0 : i32
    return %arg0, %c0_i32, %c0_i32_0 : i32, i32, i32
  }
}

</mosaic_0001>

<llo_original>
// kernel: tpu_custom_call.1
$region0: #{tpu_custom_call.1}
  #allocation0 [shape = 'u32[]', space=smem, size = 0x4, offset = 0x4, fixed_abs, tag = 'smem constant byte address 0x4 - core index']
  #allocation1 [shape = 'u32[144,128]{1,0:T(1,128)}', space=vmem, size = 0x12000, scoped, tag = 'internal scratch']
  #allocation2 [shape = 'f32[3,2,512]{2,1,0:T(2,128)}', space=vmem, size = 0x3000, scoped, tag = 'scratch operand']
  %s0 = inlined_call_operand.hbm [shape: bf16[3,2,768], index: 0, kind: input, shape index: {}]
  %s1 = inlined_call_operand.hbm [shape: bf16[3,768,1024], index: 1, kind: input, shape index: {}]
  %s2 = inlined_call_operand.hbm [shape: f32[3,1,1024], index: 2, kind: input, shape index: {}]
  %s3 = inlined_call_operand.vmem [shape: bf16[3072,2], index: 3, kind: input, shape index: {}]
  %s4 = inlined_call_operand.hbm [shape: f32[1,2,2], index: 4, kind: output, shape index: {}]
  %s5 = sld [smem:[#allocation0]]
  $region73: #{tpu_custom_call.1} parent=0
    _
  %s7 = ssub.s32 1, %s5
  %s8 = scalar_select 0, %s7, %s5
  $region1: #{tpu_custom_call.1} parent=0
    #allocation3 [shape = 'u8[9216]{0}', space=vmem, size = 0x2400, scoped, tag = 'input window, operand 0, single buffered']
    #allocation4 [shape = 's32[2]{0}', space=sflag, size = 0x8, scoped, tag = 'scoped memory for tpu_custom_call.1']
    #allocation5 [shape = 's32[2]{0}', space=sflag, size = 0x8, scoped, tag = 'scoped memory for tpu_custom_call.1']
    #allocation6 [shape = 'u8[4718592]{0}', space=vmem, size = 0x480000, scoped, tag = 'input window, operand 1']
    #allocation7 [shape = 's32[2]{0}', space=sflag, size = 0x8, scoped, tag = 'scoped memory for tpu_custom_call.1']
    #allocation8 [shape = 'u8[12288]{0}', space=vmem, size = 0x3000, scoped, tag = 'input window, operand 2']
    #allocation9 [shape = 'u8[1024]{0}', space=vmem, size = 0x400, scoped, tag = 'output window, operand 0, single buffered']
    %9 = vsyncpa [#allocation4], 0
    %10 = vsyncpa [#allocation7], 0
    %s11 = scalar_lea.sflag [#allocation7], 1
    %12 = vsyncpa %s11, 0
    %13 = vsyncpa [#allocation5], 0
    loop: start=0, step=1, limit=4
    $region2: #{tpu_custom_call.1} parent=1 // loop_pre_header
      _
    $region3: #{tpu_custom_call.1} parent=1 // loop_header
      %s15 = sphi 0, %s19
      %p16 = scmp.ge.s32.totalorder %s15, 4
      %s22 = sphi 0, %s41
      %s23 = sphi 0, %s37
      %s24 = sphi 0, %s33
      %s25 = sphi 0, %s22
      %s26 = sphi 0, %s23
      %s27 = sphi 0, %s24
      %s28 = sphi 0, %s25
      %s29 = sphi 0, %s26
      %s30 = sphi 0, %s27
      %s44 = sphi 0, %s46
      %s47 = sphi 0, %s44
      %s48 = sphi 0, %s47
      %s64 = sphi 0, %s48
      %s76 = sphi 0, %s78
      %s79 = sphi 0, %s76
      %s80 = sphi 0, %s79
      %s96 = sphi 0, %s80
      %s106 = sphi 0, %s108
      %s109 = sphi 0, %s106
      %s110 = sphi 0, %s109
      %s126 = sphi 0, %s110
      %s130 = sphi 0, %s130
      %s132 = sphi 0, %s130
      %s133 = sphi 0, %s132
      %s147 = sphi 0, %s133
      %s153 = sphi 0, %s155
      %s156 = sphi 0, %s153
      %s157 = sphi 0, %s156
      %s173 = sphi 0, %s157
    $region4: #{tpu_custom_call.1} parent=1 // loop_header_branch
      %18 = sbr.rel (%p16) target = $region8
    $region5: #{tpu_custom_call.1} parent=1 // loop_body
      %s20 = ssub.s32 %s15, 1
      %s21 = ssub.s32 %s15, 2
      %s31 = sadd.s32 1, %s24
      %p32 = scmp.ge.s32.totalorder %s31, 1
      %s33 = scalar_select %p32, 0, %s31
      %s34 = sadd.s32 1, %s23
      %s35 = scalar_select %p32, %s34, %s23
      %p36 = scmp.ge.s32.totalorder %s35, 2
      %s37 = scalar_select %p36, 0, %s35
      %s38 = sadd.s32 1, %s22
      %s39 = scalar_select %p36, %s38, %s22
      %p40 = scmp.ge.s32.totalorder %s39, 1
      %s41 = scalar_select %p40, 0, %s39
      %s42 = ssub.s32 %s24, %s33
      %p43 = scmp.eq.s32.totalorder %s42, 0
      %s45 = sadd.s32 %s44, 1
      %s46 = scalar_select %p43, %s44, %s45
      %p49 = pneg %p43
      %p50 = scmp.eq.s32.totalorder %s15, 1
      %p51 = por %p49, %p50
      %p52 = scmp.ne.s32.totalorder %s44, %s47
      %p53 = scmp.eq.s32.totalorder %s15, 0
      %p54 = por %p52, %p53
      %p55 = scmp.ne.s32.totalorder %s44, %s47
      %p56 = scmp.eq.s32.totalorder %s20, 1
      %p57 = por %p55, %p56
      %p58 = scmp.ne.s32.totalorder %s47, %s48
      %p59 = scmp.eq.s32.totalorder %s20, 0
      %p60 = por %p58, %p59
      %p61 = scmp.ne.s32.totalorder %s47, %s48
      %p62 = scmp.eq.s32.totalorder %s21, 1
      %p63 = por %p61, %p62
      %p65 = scmp.ne.s32.totalorder %s48, %s64
      %p66 = scmp.eq.s32.totalorder %s21, 0
      %p67 = por %p65, %p66
      %s68 = smul.u32 %s22, 2
      %s69 = sadd.s32 %s68, %s23
      %s70 = smul.u32 %s41, 2
      %s71 = sadd.s32 %s70, %s37
      %s72 = ssub.s32 %s24, %s33
      %s73 = ssub.s32 %s69, %s71
      %s74 = sor.u32 %s72, %s73
      %p75 = scmp.eq.s32.totalorder %s74, 0
      %s77 = sadd.s32 %s76, 1
      %s78 = scalar_select %p75, %s76, %s77
      %p81 = pneg %p75
      %p82 = scmp.eq.s32.totalorder %s15, 1
      %p83 = por %p81, %p82
      %p84 = scmp.ne.s32.totalorder %s76, %s79
      %p85 = scmp.eq.s32.totalorder %s15, 0
      %p86 = por %p84, %p85
      %p87 = scmp.ne.s32.totalorder %s76, %s79
      %p88 = scmp.eq.s32.totalorder %s20, 1
      %p89 = por %p87, %p88
      %p90 = scmp.ne.s32.totalorder %s79, %s80
      %p91 = scmp.eq.s32.totalorder %s20, 0
      %p92 = por %p90, %p91
      %p93 = scmp.ne.s32.totalorder %s79, %s80
      %p94 = scmp.eq.s32.totalorder %s21, 1
      %p95 = por %p93, %p94
      %p97 = scmp.ne.s32.totalorder %s80, %s96
      %p98 = scmp.eq.s32.totalorder %s21, 0
      %p99 = por %p97, %p98
      %s100 = smul.u32 %s22, 2
      %s101 = sadd.s32 %s100, %s23
      %s102 = smul.u32 %s41, 2
      %s103 = sadd.s32 %s102, %s37
      %s104 = ssub.s32 %s101, %s103
      %p105 = scmp.eq.s32.totalorder %s104, 0
      %s107 = sadd.s32 %s106, 1
      %s108 = scalar_select %p105, %s106, %s107
      %p111 = pneg %p105
      %p112 = scmp.eq.s32.totalorder %s15, 1
      %p113 = por %p111, %p112
      %p114 = scmp.ne.s32.totalorder %s106, %s109
      %p115 = scmp.eq.s32.totalorder %s15, 0
      %p116 = por %p114, %p115
      %p117 = scmp.ne.s32.totalorder %s106, %s109
      %p118 = scmp.eq.s32.totalorder %s20, 1
      %p119 = por %p117, %p118
      %p120 = scmp.ne.s32.totalorder %s109, %s110
      %p121 = scmp.eq.s32.totalorder %s20, 0
      %p122 = por %p120, %p121
      %p123 = scmp.ne.s32.totalorder %s109, %s110
      %p124 = scmp.eq.s32.totalorder %s21, 1
      %p125 = por %p123, %p124
      %p127 = scmp.ne.s32.totalorder %s110, %s126
      %p128 = scmp.eq.s32.totalorder %s21, 0
      %p129 = por %p127, %p128
      %s131 = sadd.s32 %s130, 1
      %p134 = scmp.eq.s32.totalorder %s15, 1
      %p135 = scmp.ne.s32.totalorder %s130, %s132
      %p136 = scmp.eq.s32.totalorder %s15, 0
      %p137 = por %p135, %p136
      %p138 = scmp.ne.s32.totalorder %s130, %s132
      %p139 = scmp.eq.s32.totalorder %s20, 1
      %p140 = por %p138, %p139
      %p141 = scmp.ne.s32.totalorder %s132, %s133
      %p142 = scmp.eq.s32.totalorder %s20, 0
      %p143 = por %p141, %p142
      %p144 = scmp.ne.s32.totalorder %s132, %s133
      %p145 = scmp.eq.s32.totalorder %s21, 1
      %p146 = por %p144, %p145
      %p148 = scmp.ne.s32.totalorder %s133, %s147
      %p149 = scmp.eq.s32.totalorder %s21, 0
      %p150 = por %p148, %p149
      %s151 = ssub.s32 %s22, %s41
      %p152 = scmp.eq.s32.totalorder %s151, 0
      %s154 = sadd.s32 %s153, 1
      %s155 = scalar_select %p152, %s153, %s154
      %p158 = pneg %p152
      %p159 = scmp.eq.s32.totalorder %s15, 1
      %p160 = por %p158, %p159
      %p161 = scmp.ne.s32.totalorder %s153, %s156
      %p162 = scmp.eq.s32.totalorder %s15, 0
      %p163 = por %p161, %p162
      %p164 = scmp.ne.s32.totalorder %s153, %s156
      %p165 = scmp.eq.s32.totalorder %s20, 1
      %p166 = por %p164, %p165
      %p167 = scmp.ne.s32.totalorder %s156, %s157
      %p168 = scmp.eq.s32.totalorder %s20, 0
      %p169 = por %p167, %p168
      %p170 = scmp.ne.s32.totalorder %s156, %s157
      %p171 = scmp.eq.s32.totalorder %s21, 1
      %p172 = por %p170, %p171
      %p174 = scmp.ne.s32.totalorder %s157, %s173
      %p175 = scmp.eq.s32.totalorder %s21, 0
      %p176 = por %p174, %p175
      %p177 = scmp.le.s32.totalorder 1, %s15
      %p178 = scmp.lt.s32.totalorder %s15, 3
      %p179 = pnand %p177, %p178
      %p180 = pneg %p179
      // Predicated region
      $region9: #{tpu_custom_call.1} parent=5 // pred_check
        _
      $region10: #{tpu_custom_call.1} parent=5 // pred_check_branch
        %182 = sbr.rel (%p179) target = $region12
      $region11: #{tpu_custom_call.1} parent=5 // pred_region
        %s183 = ssub.s32 %s15, 1
        // Predicated region
        $region13: #{tpu_custom_call.1} parent=11 // pred_check
          %p184 = pneg %p60
        $region14: #{tpu_custom_call.1} parent=11 // pred_check_branch
          %186 = sbr.rel (%p184) target = $region16
        $region15: #{tpu_custom_call.1} parent=11 // pred_region
          %s187 = smul.u32 6, %s27
          %s189 = ssub.s32 288, 288
          %190 = vsyncadd [#allocation4], %s189
          %s191 = smul.addr %s187, 16
          %s192 = scalar_lea.hbm %s0, %s191
          %s193 = sshll.u32 [#allocation3], 4
          %s194 = int_to_ptr.vmem [resolvable:$true] %s193
          %199 = dma.hbm_to_vmem [thread:$0]  %s192, 288, %s194, [#allocation4], 96, 96, 6
        $region16: #{tpu_custom_call.1} parent=11 // pred_fallthru
          _
        // Predicated region
        $region17: #{tpu_custom_call.1} parent=11 // pred_check
          %p200 = pneg %p143
        $region18: #{tpu_custom_call.1} parent=11 // pred_check_branch
          %202 = sbr.rel (%p200) target = $region20
        $region19: #{tpu_custom_call.1} parent=11 // pred_region
          _
        $region20: #{tpu_custom_call.1} parent=11 // pred_fallthru
          _
      $region12: #{tpu_custom_call.1} parent=5 // pred_fallthru
        _
      %p203 = scmp.lt.s32.totalorder %s15, 2
      // Predicated region
      $region21: #{tpu_custom_call.1} parent=5 // pred_check
        %p204 = pneg %p203
      $region22: #{tpu_custom_call.1} parent=5 // pred_check_branch
        %206 = sbr.rel (%p204) target = $region24
      $region23: #{tpu_custom_call.1} parent=5 // pred_region
        // Predicated region
        $region25: #{tpu_custom_call.1} parent=23 // pred_check
          %p207 = pneg %p86
        $region26: #{tpu_custom_call.1} parent=23 // pred_check_branch
          %209 = sbr.rel (%p207) target = $region28
        $region27: #{tpu_custom_call.1} parent=23 // pred_region
          %s210 = sand.u32 %s15, 1
          %s211 = scalar_lea.sflag [#allocation7], %s210
          %s212 = sand.u32 %s76, 1
          %s213 = smul.addr %s212, 4608
          %s214 = scalar_lea.vmem [#allocation6], %s213
          %s215 = smul.u32 %s22, 2
          %s216 = sadd.s32 %s215, %s23
          %s217 = smul.u32 96, %s24
          %s218 = smul.u32 4, %s216
          %s220 = ssub.s32 73728, 73728
          %221 = vsyncadd %s211, %s220
          %s222 = smul.addr %s217, 8
          %s223 = sadd.s32 %s218, %s222
          %s224 = smul.addr %s223, 64
          %s225 = scalar_lea.hbm %s1, %s224
          %s226 = sshll.u32 %s214, 4
          %s227 = int_to_ptr.vmem [resolvable:$true] %s226
          %232 = dma.hbm_to_vmem [thread:$0]  %s225, 73728, %s227, %s211, 512, 256, 16
        $region28: #{tpu_custom_call.1} parent=23 // pred_fallthru
          _
        // Predicated region
        $region29: #{tpu_custom_call.1} parent=23 // pred_check
          %p233 = pneg %p116
        $region30: #{tpu_custom_call.1} parent=23 // pred_check_branch
          %235 = sbr.rel (%p233) target = $region32
        $region31: #{tpu_custom_call.1} parent=23 // pred_region
          %s236 = sand.u32 %s15, 1
          %s237 = scalar_lea.sflag [#allocation7], %s236
          %s238 = sand.u32 %s106, 1
          %s239 = smul.addr %s238, 12
          %s240 = scalar_lea.vmem [#allocation8], %s239
          %s241 = smul.u32 %s22, 2
          %s242 = sadd.s32 %s241, %s23
          %s243 = smul.u32 4, %s242
          %s245 = ssub.s32 192, 192
          %246 = vsyncadd %s237, %s245
          %s247 = smul.addr %s243, 16
          %s248 = scalar_lea.hbm %s2, %s247
          %s249 = sshll.u32 %s240, 4
          %s250 = int_to_ptr.vmem [resolvable:$true] %s249
          %255 = dma.hbm_to_vmem [thread:$0]  %s248, 192, %s250, %s237, 128, 64, 4
        $region32: #{tpu_custom_call.1} parent=23 // pred_fallthru
          _
      $region24: #{tpu_custom_call.1} parent=5 // pred_fallthru
        _
      %p256 = scmp.le.s32.totalorder 1, %s15
      %p257 = scmp.lt.s32.totalorder %s15, 3
      %p258 = pnand %p256, %p257
      %p259 = pneg %p258
      // Predicated region
      $region33: #{tpu_custom_call.1} parent=5 // pred_check
        _
      $region34: #{tpu_custom_call.1} parent=5 // pred_check_branch
        %261 = sbr.rel (%p258) target = $region36
      $region35: #{tpu_custom_call.1} parent=5 // pred_region
        %s262 = ssub.s32 %s15, 1
        // Predicated region
        $region37: #{tpu_custom_call.1} parent=35 // pred_check
          %p263 = pneg %p60
        $region38: #{tpu_custom_call.1} parent=35 // pred_check_branch
          %265 = sbr.rel (%p263) target = $region40
        $region39: #{tpu_custom_call.1} parent=35 // pred_region
          %266 = dma.done [#allocation4], 288
        $region40: #{tpu_custom_call.1} parent=35 // pred_fallthru
          _
        %s267 = sand.u32 %s20, 1
        %s268 = scalar_lea.sflag [#allocation7], %s267
        %s269 = sand.u32 %s79, 1
        %s270 = smul.addr %s269, 4608
        %s271 = scalar_lea.vmem [#allocation6], %s270
        // Predicated region
        $region41: #{tpu_custom_call.1} parent=35 // pred_check
          %p272 = pneg %p92
        $region42: #{tpu_custom_call.1} parent=35 // pred_check_branch
          %274 = sbr.rel (%p272) target = $region44
        $region43: #{tpu_custom_call.1} parent=35 // pred_region
          %275 = dma.done %s268, 73728
        $region44: #{tpu_custom_call.1} parent=35 // pred_fallthru
          _
        %s276 = sand.u32 %s20, 1
        %s277 = scalar_lea.sflag [#allocation7], %s276
        %s278 = sand.u32 %s109, 1
        %s279 = smul.addr %s278, 12
        %s280 = scalar_lea.vmem [#allocation8], %s279
        // Predicated region
        $region45: #{tpu_custom_call.1} parent=35 // pred_check
          %p281 = pneg %p122
        $region46: #{tpu_custom_call.1} parent=35 // pred_check_branch
          %283 = sbr.rel (%p281) target = $region48
        $region47: #{tpu_custom_call.1} parent=35 // pred_region
          %284 = dma.done %s277, 192
        $region48: #{tpu_custom_call.1} parent=35 // pred_fallthru
          _
        %p285 = pneg %p60
        %p286 = pneg %p57
        %s287 = sand.u32 %s20, 1
        %s288 = scalar_lea.sflag [#allocation7], %s287
        %s289 = sand.u32 %s79, 1
        %s290 = smul.addr %s289, 4608
        %s291 = scalar_lea.vmem [#allocation6], %s290
        %p292 = pneg %p92
        %p293 = pneg %p89
        %s294 = sand.u32 %s20, 1
        %s295 = scalar_lea.sflag [#allocation7], %s294
        %s296 = sand.u32 %s109, 1
        %s297 = smul.addr %s296, 12
        %s298 = scalar_lea.vmem [#allocation8], %s297
        %p299 = pneg %p122
        %p300 = pneg %p119
        %p301 = pneg %p143
        %p302 = pneg %p140
        %p303 = pneg %p169
        %p304 = pneg %p166
        %s305 = smul.u32 6, %s27
        %s306 = smul.u32 %s25, 2
        %s307 = sadd.s32 %s306, %s26
        %s308 = smul.u32 96, %s27
        %s309 = smul.u32 4, %s307
        %s310 = smul.u32 %s25, 2
        %s311 = sadd.s32 %s310, %s26
        %s312 = smul.u32 4, %s311
        %p314 = scmp.eq.s32.totalorder %s26, 0
        %p315 = scmp.eq.s32.totalorder %s27, 0
        %p316 = pnand %p314, %p315
        %p317 = pneg %p316
        // Predicated region
        $region49: #{tpu_custom_call.1} parent=35 // pred_check
          _
        $region50: #{tpu_custom_call.1} parent=35 // pred_check_branch
          %319 = sbr.rel (%p316) target = $region52
        $region51: #{tpu_custom_call.1} parent=35 // pred_region
          %vm320 = vcmask 9216
          %321 = vst.msk [vmem:[#allocation9] sm:$0x3] %vm320, 0.0
        $region52: #{tpu_custom_call.1} parent=35 // pred_fallthru
          _
        // Predicated region
        $region53: #{tpu_custom_call.1} parent=35 // pred_check
          %p322 = pneg %p315
        $region54: #{tpu_custom_call.1} parent=35 // pred_check_branch
          %324 = sbr.rel (%p322) target = $region56
        $region55: #{tpu_custom_call.1} parent=35 // pred_region
          %325 = vst [vmem:[#allocation2] sm:$0xff] 0.0
          %326 = vst [vmem:[#allocation2 + $0x8] sm:$0xff] 0.0
          %327 = vst [vmem:[#allocation2 + $0x10] sm:$0xff] 0.0
        $region56: #{tpu_custom_call.1} parent=35 // pred_fallthru
          _
        %v328 = vld [vmem:[#allocation2] sm:$0xff]
        %v329 = vld [vmem:[#allocation2 + $0x8] sm:$0xff]
        %v330 = vld [vmem:[#allocation2 + $0x10] sm:$0xff]
        %v331 = vld [vmem:[#allocation3] sm:$0x3f]
        %v332 = vld [vmem:[#allocation3 + $0x6] sm:$0x3f]
        %v333 = vld [vmem:[#allocation3 + $0xc] sm:$0x3f]
        %v334 = vld [vmem:[%s271] sm:$0xff]
        %v335 = vld [vmem:[%s271 + $0x8] sm:$0xff]
        %v336 = vld [vmem:[%s271 + $0x10] sm:$0xff]
        %v337 = vld [vmem:[%s271 + $0x18] sm:$0xff]
        %v338 = vld [vmem:[%s271 + $0x20] sm:$0xff]
        %v339 = vld [vmem:[%s271 + $0x28] sm:$0xff]
        %v340 = vld [vmem:[%s271 + $0x30] sm:$0xff]
        %v341 = vld [vmem:[%s271 + $0x38] sm:$0xff]
        %v342 = vld [vmem:[%s271 + $0x40] sm:$0xff]
        %v343 = vld [vmem:[%s271 + $0x48] sm:$0xff]
        %v344 = vld [vmem:[%s271 + $0x50] sm:$0xff]
        %v345 = vld [vmem:[%s271 + $0x58] sm:$0xff]
        %v346 = vld [vmem:[%s271 + $0x60] sm:$0xff]
        %v347 = vld [vmem:[%s271 + $0x68] sm:$0xff]
        %v348 = vld [vmem:[%s271 + $0x70] sm:$0xff]
        %v349 = vld [vmem:[%s271 + $0x78] sm:$0xff]
        %v350 = vld [vmem:[%s271 + $0x80] sm:$0xff]
        %v351 = vld [vmem:[%s271 + $0x88] sm:$0xff]
        %v352 = vld [vmem:[%s271 + $0x90] sm:$0xff]
        %v353 = vld [vmem:[%s271 + $0x98] sm:$0xff]
        %v354 = vld [vmem:[%s271 + $0xa0] sm:$0xff]
        %v355 = vld [vmem:[%s271 + $0xa8] sm:$0xff]
        %v356 = vld [vmem:[%s271 + $0xb0] sm:$0xff]
        %v357 = vld [vmem:[%s271 + $0xb8] sm:$0xff]
        %v358 = vld [vmem:[%s271 + $0xc0] sm:$0xff]
        %v359 = vld [vmem:[%s271 + $0xc8] sm:$0xff]
        %v360 = vld [vmem:[%s271 + $0xd0] sm:$0xff]
        %v361 = vld [vmem:[%s271 + $0xd8] sm:$0xff]
        %v362 = vld [vmem:[%s271 + $0xe0] sm:$0xff]
        %v363 = vld [vmem:[%s271 + $0xe8] sm:$0xff]
        %v364 = vld [vmem:[%s271 + $0xf0] sm:$0xff]
        %v365 = vld [vmem:[%s271 + $0xf8] sm:$0xff]
        %v366 = vld [vmem:[%s271 + $0x100] sm:$0xff]
        %v367 = vld [vmem:[%s271 + $0x108] sm:$0xff]
        %v368 = vld [vmem:[%s271 + $0x110] sm:$0xff]
        %v369 = vld [vmem:[%s271 + $0x118] sm:$0xff]
        %v370 = vld [vmem:[%s271 + $0x120] sm:$0xff]
        %v371 = vld [vmem:[%s271 + $0x128] sm:$0xff]
        %v372 = vld [vmem:[%s271 + $0x130] sm:$0xff]
        %v373 = vld [vmem:[%s271 + $0x138] sm:$0xff]
        %v374 = vld [vmem:[%s271 + $0x140] sm:$0xff]
        %v375 = vld [vmem:[%s271 + $0x148] sm:$0xff]
        %v376 = vld [vmem:[%s271 + $0x150] sm:$0xff]
        %v377 = vld [vmem:[%s271 + $0x158] sm:$0xff]
        %v378 = vld [vmem:[%s271 + $0x160] sm:$0xff]
        %v379 = vld [vmem:[%s271 + $0x168] sm:$0xff]
        %v380 = vld [vmem:[%s271 + $0x170] sm:$0xff]
        %v381 = vld [vmem:[%s271 + $0x178] sm:$0xff]
        %v382 = vld [vmem:[%s271 + $0x180] sm:$0xff]
        %v383 = vld [vmem:[%s271 + $0x188] sm:$0xff]
        %v384 = vld [vmem:[%s271 + $0x190] sm:$0xff]
        %v385 = vld [vmem:[%s271 + $0x198] sm:$0xff]
        %v386 = vld [vmem:[%s271 + $0x1a0] sm:$0xff]
        %v387 = vld [vmem:[%s271 + $0x1a8] sm:$0xff]
        %v388 = vld [vmem:[%s271 + $0x1b0] sm:$0xff]
        %v389 = vld [vmem:[%s271 + $0x1b8] sm:$0xff]
        %v390 = vld [vmem:[%s271 + $0x1c0] sm:$0xff]
        %v391 = vld [vmem:[%s271 + $0x1c8] sm:$0xff]
        %v392 = vld [vmem:[%s271 + $0x1d0] sm:$0xff]
        %v393 = vld [vmem:[%s271 + $0x1d8] sm:$0xff]
        %v394 = vld [vmem:[%s271 + $0x1e0] sm:$0xff]
        %v395 = vld [vmem:[%s271 + $0x1e8] sm:$0xff]
        %v396 = vld [vmem:[%s271 + $0x1f0] sm:$0xff]
        %v397 = vld [vmem:[%s271 + $0x1f8] sm:$0xff]
        %v398 = vld [vmem:[%s271 + $0x200] sm:$0xff]
        %v399 = vld [vmem:[%s271 + $0x208] sm:$0xff]
        %v400 = vld [vmem:[%s271 + $0x210] sm:$0xff]
        %v401 = vld [vmem:[%s271 + $0x218] sm:$0xff]
        %v402 = vld [vmem:[%s271 + $0x220] sm:$0xff]
        %v403 = vld [vmem:[%s271 + $0x228] sm:$0xff]
        %v404 = vld [vmem:[%s271 + $0x230] sm:$0xff]
        %v405 = vld [vmem:[%s271 + $0x238] sm:$0xff]
        %v406 = vld [vmem:[%s271 + $0x240] sm:$0xff]
        %v407 = vld [vmem:[%s271 + $0x248] sm:$0xff]
        %v408 = vld [vmem:[%s271 + $0x250] sm:$0xff]
        %v409 = vld [vmem:[%s271 + $0x258] sm:$0xff]
        %v410 = vld [vmem:[%s271 + $0x260] sm:$0xff]
        %v411 = vld [vmem:[%s271 + $0x268] sm:$0xff]
        %v412 = vld [vmem:[%s271 + $0x270] sm:$0xff]
        %v413 = vld [vmem:[%s271 + $0x278] sm:$0xff]
        %v414 = vld [vmem:[%s271 + $0x280] sm:$0xff]
        %v415 = vld [vmem:[%s271 + $0x288] sm:$0xff]
        %v416 = vld [vmem:[%s271 + $0x290] sm:$0xff]
        %v417 = vld [vmem:[%s271 + $0x298] sm:$0xff]
        %v418 = vld [vmem:[%s271 + $0x2a0] sm:$0xff]
        %v419 = vld [vmem:[%s271 + $0x2a8] sm:$0xff]
        %v420 = vld [vmem:[%s271 + $0x2b0] sm:$0xff]
        %v421 = vld [vmem:[%s271 + $0x2b8] sm:$0xff]
        %v422 = vld [vmem:[%s271 + $0x2c0] sm:$0xff]
        %v423 = vld [vmem:[%s271 + $0x2c8] sm:$0xff]
        %v424 = vld [vmem:[%s271 + $0x2d0] sm:$0xff]
        %v425 = vld [vmem:[%s271 + $0x2d8] sm:$0xff]
        %v426 = vld [vmem:[%s271 + $0x2e0] sm:$0xff]
        %v427 = vld [vmem:[%s271 + $0x2e8] sm:$0xff]
        %v428 = vld [vmem:[%s271 + $0x2f0] sm:$0xff]
        %v429 = vld [vmem:[%s271 + $0x2f8] sm:$0xff]
        %v430 = vld [vmem:[%s271 + $0x300] sm:$0xff]
        %v431 = vld [vmem:[%s271 + $0x308] sm:$0xff]
        %v432 = vld [vmem:[%s271 + $0x310] sm:$0xff]
        %v433 = vld [vmem:[%s271 + $0x318] sm:$0xff]
        %v434 = vld [vmem:[%s271 + $0x320] sm:$0xff]
        %v435 = vld [vmem:[%s271 + $0x328] sm:$0xff]
        %v436 = vld [vmem:[%s271 + $0x330] sm:$0xff]
        %v437 = vld [vmem:[%s271 + $0x338] sm:$0xff]
        %v438 = vld [vmem:[%s271 + $0x340] sm:$0xff]
        %v439 = vld [vmem:[%s271 + $0x348] sm:$0xff]
        %v440 = vld [vmem:[%s271 + $0x350] sm:$0xff]
        %v441 = vld [vmem:[%s271 + $0x358] sm:$0xff]
        %v442 = vld [vmem:[%s271 + $0x360] sm:$0xff]
        %v443 = vld [vmem:[%s271 + $0x368] sm:$0xff]
        %v444 = vld [vmem:[%s271 + $0x370] sm:$0xff]
        %v445 = vld [vmem:[%s271 + $0x378] sm:$0xff]
        %v446 = vld [vmem:[%s271 + $0x380] sm:$0xff]
        %v447 = vld [vmem:[%s271 + $0x388] sm:$0xff]
        %v448 = vld [vmem:[%s271 + $0x390] sm:$0xff]
        %v449 = vld [vmem:[%s271 + $0x398] sm:$0xff]
        %v450 = vld [vmem:[%s271 + $0x3a0] sm:$0xff]
        %v451 = vld [vmem:[%s271 + $0x3a8] sm:$0xff]
        %v452 = vld [vmem:[%s271 + $0x3b0] sm:$0xff]
        %v453 = vld [vmem:[%s271 + $0x3b8] sm:$0xff]
        %v454 = vld [vmem:[%s271 + $0x3c0] sm:$0xff]
        %v455 = vld [vmem:[%s271 + $0x3c8] sm:$0xff]
        %v456 = vld [vmem:[%s271 + $0x3d0] sm:$0xff]
        %v457 = vld [vmem:[%s271 + $0x3d8] sm:$0xff]
        %v458 = vld [vmem:[%s271 + $0x3e0] sm:$0xff]
        %v459 = vld [vmem:[%s271 + $0x3e8] sm:$0xff]
        %v460 = vld [vmem:[%s271 + $0x3f0] sm:$0xff]
        %v461 = vld [vmem:[%s271 + $0x3f8] sm:$0xff]
        %v462 = vld [vmem:[%s271 + $0x400] sm:$0xff]
        %v463 = vld [vmem:[%s271 + $0x408] sm:$0xff]
        %v464 = vld [vmem:[%s271 + $0x410] sm:$0xff]
        %v465 = vld [vmem:[%s271 + $0x418] sm:$0xff]
        %v466 = vld [vmem:[%s271 + $0x420] sm:$0xff]
        %v467 = vld [vmem:[%s271 + $0x428] sm:$0xff]
        %v468 = vld [vmem:[%s271 + $0x430] sm:$0xff]
        %v469 = vld [vmem:[%s271 + $0x438] sm:$0xff]
        %v470 = vld [vmem:[%s271 + $0x440] sm:$0xff]
        %v471 = vld [vmem:[%s271 + $0x448] sm:$0xff]
        %v472 = vld [vmem:[%s271 + $0x450] sm:$0xff]
        %v473 = vld [vmem:[%s271 + $0x458] sm:$0xff]
        %v474 = vld [vmem:[%s271 + $0x460] sm:$0xff]
        %v475 = vld [vmem:[%s271 + $0x468] sm:$0xff]
        %v476 = vld [vmem:[%s271 + $0x470] sm:$0xff]
        %v477 = vld [vmem:[%s271 + $0x478] sm:$0xff]
        %v478 = vld [vmem:[%s271 + $0x480] sm:$0xff]
        %v479 = vld [vmem:[%s271 + $0x488] sm:$0xff]
        %v480 = vld [vmem:[%s271 + $0x490] sm:$0xff]
        %v481 = vld [vmem:[%s271 + $0x498] sm:$0xff]
        %v482 = vld [vmem:[%s271 + $0x4a0] sm:$0xff]
        %v483 = vld [vmem:[%s271 + $0x4a8] sm:$0xff]
        %v484 = vld [vmem:[%s271 + $0x4b0] sm:$0xff]
        %v485 = vld [vmem:[%s271 + $0x4b8] sm:$0xff]
        %v486 = vld [vmem:[%s271 + $0x4c0] sm:$0xff]
        %v487 = vld [vmem:[%s271 + $0x4c8] sm:$0xff]
        %v488 = vld [vmem:[%s271 + $0x4d0] sm:$0xff]
        %v489 = vld [vmem:[%s271 + $0x4d8] sm:$0xff]
        %v490 = vld [vmem:[%s271 + $0x4e0] sm:$0xff]
        %v491 = vld [vmem:[%s271 + $0x4e8] sm:$0xff]
        %v492 = vld [vmem:[%s271 + $0x4f0] sm:$0xff]
        %v493 = vld [vmem:[%s271 + $0x4f8] sm:$0xff]
        %v494 = vld [vmem:[%s271 + $0x500] sm:$0xff]
        %v495 = vld [vmem:[%s271 + $0x508] sm:$0xff]
        %v496 = vld [vmem:[%s271 + $0x510] sm:$0xff]
        %v497 = vld [vmem:[%s271 + $0x518] sm:$0xff]
        %v498 = vld [vmem:[%s271 + $0x520] sm:$0xff]
        %v499 = vld [vmem:[%s271 + $0x528] sm:$0xff]
        %v500 = vld [vmem:[%s271 + $0x530] sm:$0xff]
        %v501 = vld [vmem:[%s271 + $0x538] sm:$0xff]
        %v502 = vld [vmem:[%s271 + $0x540] sm:$0xff]
        %v503 = vld [vmem:[%s271 + $0x548] sm:$0xff]
        %v504 = vld [vmem:[%s271 + $0x550] sm:$0xff]
        %v505 = vld [vmem:[%s271 + $0x558] sm:$0xff]
        %v506 = vld [vmem:[%s271 + $0x560] sm:$0xff]
        %v507 = vld [vmem:[%s271 + $0x568] sm:$0xff]
        %v508 = vld [vmem:[%s271 + $0x570] sm:$0xff]
        %v509 = vld [vmem:[%s271 + $0x578] sm:$0xff]
        %v510 = vld [vmem:[%s271 + $0x580] sm:$0xff]
        %v511 = vld [vmem:[%s271 + $0x588] sm:$0xff]
        %v512 = vld [vmem:[%s271 + $0x590] sm:$0xff]
        %v513 = vld [vmem:[%s271 + $0x598] sm:$0xff]
        %v514 = vld [vmem:[%s271 + $0x5a0] sm:$0xff]
        %v515 = vld [vmem:[%s271 + $0x5a8] sm:$0xff]
        %v516 = vld [vmem:[%s271 + $0x5b0] sm:$0xff]
        %v517 = vld [vmem:[%s271 + $0x5b8] sm:$0xff]
        %v518 = vld [vmem:[%s271 + $0x5c0] sm:$0xff]
        %v519 = vld [vmem:[%s271 + $0x5c8] sm:$0xff]
        %v520 = vld [vmem:[%s271 + $0x5d0] sm:$0xff]
        %v521 = vld [vmem:[%s271 + $0x5d8] sm:$0xff]
        %v522 = vld [vmem:[%s271 + $0x5e0] sm:$0xff]
        %v523 = vld [vmem:[%s271 + $0x5e8] sm:$0xff]
        %v524 = vld [vmem:[%s271 + $0x5f0] sm:$0xff]
        %v525 = vld [vmem:[%s271 + $0x5f8] sm:$0xff]
        %v526 = vld [vmem:[%s271 + $0x600] sm:$0xff]
        %v527 = vld [vmem:[%s271 + $0x608] sm:$0xff]
        %v528 = vld [vmem:[%s271 + $0x610] sm:$0xff]
        %v529 = vld [vmem:[%s271 + $0x618] sm:$0xff]
        %v530 = vld [vmem:[%s271 + $0x620] sm:$0xff]
        %v531 = vld [vmem:[%s271 + $0x628] sm:$0xff]
        %v532 = vld [vmem:[%s271 + $0x630] sm:$0xff]
        %v533 = vld [vmem:[%s271 + $0x638] sm:$0xff]
        %v534 = vld [vmem:[%s271 + $0x640] sm:$0xff]
        %v535 = vld [vmem:[%s271 + $0x648] sm:$0xff]
        %v536 = vld [vmem:[%s271 + $0x650] sm:$0xff]
        %v537 = vld [vmem:[%s271 + $0x658] sm:$0xff]
        %v538 = vld [vmem:[%s271 + $0x660] sm:$0xff]
        %v539 = vld [vmem:[%s271 + $0x668] sm:$0xff]
        %v540 = vld [vmem:[%s271 + $0x670] sm:$0xff]
        %v541 = vld [vmem:[%s271 + $0x678] sm:$0xff]
        %v542 = vld [vmem:[%s271 + $0x680] sm:$0xff]
        %v543 = vld [vmem:[%s271 + $0x688] sm:$0xff]
        %v544 = vld [vmem:[%s271 + $0x690] sm:$0xff]
        %v545 = vld [vmem:[%s271 + $0x698] sm:$0xff]
        %v546 = vld [vmem:[%s271 + $0x6a0] sm:$0xff]
        %v547 = vld [vmem:[%s271 + $0x6a8] sm:$0xff]
        %v548 = vld [vmem:[%s271 + $0x6b0] sm:$0xff]
        %v549 = vld [vmem:[%s271 + $0x6b8] sm:$0xff]
        %v550 = vld [vmem:[%s271 + $0x6c0] sm:$0xff]
        %v551 = vld [vmem:[%s271 + $0x6c8] sm:$0xff]
        %v552 = vld [vmem:[%s271 + $0x6d0] sm:$0xff]
        %v553 = vld [vmem:[%s271 + $0x6d8] sm:$0xff]
        %v554 = vld [vmem:[%s271 + $0x6e0] sm:$0xff]
        %v555 = vld [vmem:[%s271 + $0x6e8] sm:$0xff]
        %v556 = vld [vmem:[%s271 + $0x6f0] sm:$0xff]
        %v557 = vld [vmem:[%s271 + $0x6f8] sm:$0xff]
        %v558 = vld [vmem:[%s271 + $0x700] sm:$0xff]
        %v559 = vld [vmem:[%s271 + $0x708] sm:$0xff]
        %v560 = vld [vmem:[%s271 + $0x710] sm:$0xff]
        %v561 = vld [vmem:[%s271 + $0x718] sm:$0xff]
        %v562 = vld [vmem:[%s271 + $0x720] sm:$0xff]
        %v563 = vld [vmem:[%s271 + $0x728] sm:$0xff]
        %v564 = vld [vmem:[%s271 + $0x730] sm:$0xff]
        %v565 = vld [vmem:[%s271 + $0x738] sm:$0xff]
        %v566 = vld [vmem:[%s271 + $0x740] sm:$0xff]
        %v567 = vld [vmem:[%s271 + $0x748] sm:$0xff]
        %v568 = vld [vmem:[%s271 + $0x750] sm:$0xff]
        %v569 = vld [vmem:[%s271 + $0x758] sm:$0xff]
        %v570 = vld [vmem:[%s271 + $0x760] sm:$0xff]
        %v571 = vld [vmem:[%s271 + $0x768] sm:$0xff]
        %v572 = vld [vmem:[%s271 + $0x770] sm:$0xff]
        %v573 = vld [vmem:[%s271 + $0x778] sm:$0xff]
        %v574 = vld [vmem:[%s271 + $0x780] sm:$0xff]
        %v575 = vld [vmem:[%s271 + $0x788] sm:$0xff]
        %v576 = vld [vmem:[%s271 + $0x790] sm:$0xff]
        %v577 = vld [vmem:[%s271 + $0x798] sm:$0xff]
        %v578 = vld [vmem:[%s271 + $0x7a0] sm:$0xff]
        %v579 = vld [vmem:[%s271 + $0x7a8] sm:$0xff]
        %v580 = vld [vmem:[%s271 + $0x7b0] sm:$0xff]
        %v581 = vld [vmem:[%s271 + $0x7b8] sm:$0xff]
        %v582 = vld [vmem:[%s271 + $0x7c0] sm:$0xff]
        %v583 = vld [vmem:[%s271 + $0x7c8] sm:$0xff]
        %v584 = vld [vmem:[%s271 + $0x7d0] sm:$0xff]
        %v585 = vld [vmem:[%s271 + $0x7d8] sm:$0xff]
        %v586 = vld [vmem:[%s271 + $0x7e0] sm:$0xff]
        %v587 = vld [vmem:[%s271 + $0x7e8] sm:$0xff]
        %v588 = vld [vmem:[%s271 + $0x7f0] sm:$0xff]
        %v589 = vld [vmem:[%s271 + $0x7f8] sm:$0xff]
        %v590 = vld [vmem:[%s271 + $0x800] sm:$0xff]
        %v591 = vld [vmem:[%s271 + $0x808] sm:$0xff]
        %v592 = vld [vmem:[%s271 + $0x810] sm:$0xff]
        %v593 = vld [vmem:[%s271 + $0x818] sm:$0xff]
        %v594 = vld [vmem:[%s271 + $0x820] sm:$0xff]
        %v595 = vld [vmem:[%s271 + $0x828] sm:$0xff]
        %v596 = vld [vmem:[%s271 + $0x830] sm:$0xff]
        %v597 = vld [vmem:[%s271 + $0x838] sm:$0xff]
        %v598 = vld [vmem:[%s271 + $0x840] sm:$0xff]
        %v599 = vld [vmem:[%s271 + $0x848] sm:$0xff]
        %v600 = vld [vmem:[%s271 + $0x850] sm:$0xff]
        %v601 = vld [vmem:[%s271 + $0x858] sm:$0xff]
        %v602 = vld [vmem:[%s271 + $0x860] sm:$0xff]
        %v603 = vld [vmem:[%s271 + $0x868] sm:$0xff]
        %v604 = vld [vmem:[%s271 + $0x870] sm:$0xff]
        %v605 = vld [vmem:[%s271 + $0x878] sm:$0xff]
        %v606 = vld [vmem:[%s271 + $0x880] sm:$0xff]
        %v607 = vld [vmem:[%s271 + $0x888] sm:$0xff]
        %v608 = vld [vmem:[%s271 + $0x890] sm:$0xff]
        %v609 = vld [vmem:[%s271 + $0x898] sm:$0xff]
        %v610 = vld [vmem:[%s271 + $0x8a0] sm:$0xff]
        %v611 = vld [vmem:[%s271 + $0x8a8] sm:$0xff]
        %v612 = vld [vmem:[%s271 + $0x8b0] sm:$0xff]
        %v613 = vld [vmem:[%s271 + $0x8b8] sm:$0xff]
        %v614 = vld [vmem:[%s271 + $0x8c0] sm:$0xff]
        %v615 = vld [vmem:[%s271 + $0x8c8] sm:$0xff]
        %v616 = vld [vmem:[%s271 + $0x8d0] sm:$0xff]
        %v617 = vld [vmem:[%s271 + $0x8d8] sm:$0xff]
        %v618 = vld [vmem:[%s271 + $0x8e0] sm:$0xff]
        %v619 = vld [vmem:[%s271 + $0x8e8] sm:$0xff]
        %v620 = vld [vmem:[%s271 + $0x8f0] sm:$0xff]
        %v621 = vld [vmem:[%s271 + $0x8f8] sm:$0xff]
        %v622 = vld [vmem:[%s271 + $0x900] sm:$0xff]
        %v623 = vld [vmem:[%s271 + $0x908] sm:$0xff]
        %v624 = vld [vmem:[%s271 + $0x910] sm:$0xff]
        %v625 = vld [vmem:[%s271 + $0x918] sm:$0xff]
        %v626 = vld [vmem:[%s271 + $0x920] sm:$0xff]
        %v627 = vld [vmem:[%s271 + $0x928] sm:$0xff]
        %v628 = vld [vmem:[%s271 + $0x930] sm:$0xff]
        %v629 = vld [vmem:[%s271 + $0x938] sm:$0xff]
        %v630 = vld [vmem:[%s271 + $0x940] sm:$0xff]
        %v631 = vld [vmem:[%s271 + $0x948] sm:$0xff]
        %v632 = vld [vmem:[%s271 + $0x950] sm:$0xff]
        %v633 = vld [vmem:[%s271 + $0x958] sm:$0xff]
        %v634 = vld [vmem:[%s271 + $0x960] sm:$0xff]
        %v635 = vld [vmem:[%s271 + $0x968] sm:$0xff]
        %v636 = vld [vmem:[%s271 + $0x970] sm:$0xff]
        %v637 = vld [vmem:[%s271 + $0x978] sm:$0xff]
        %v638 = vld [vmem:[%s271 + $0x980] sm:$0xff]
        %v639 = vld [vmem:[%s271 + $0x988] sm:$0xff]
        %v640 = vld [vmem:[%s271 + $0x990] sm:$0xff]
        %v641 = vld [vmem:[%s271 + $0x998] sm:$0xff]
        %v642 = vld [vmem:[%s271 + $0x9a0] sm:$0xff]
        %v643 = vld [vmem:[%s271 + $0x9a8] sm:$0xff]
        %v644 = vld [vmem:[%s271 + $0x9b0] sm:$0xff]
        %v645 = vld [vmem:[%s271 + $0x9b8] sm:$0xff]
        %v646 = vld [vmem:[%s271 + $0x9c0] sm:$0xff]
        %v647 = vld [vmem:[%s271 + $0x9c8] sm:$0xff]
        %v648 = vld [vmem:[%s271 + $0x9d0] sm:$0xff]
        %v649 = vld [vmem:[%s271 + $0x9d8] sm:$0xff]
        %v650 = vld [vmem:[%s271 + $0x9e0] sm:$0xff]
        %v651 = vld [vmem:[%s271 + $0x9e8] sm:$0xff]
        %v652 = vld [vmem:[%s271 + $0x9f0] sm:$0xff]
        %v653 = vld [vmem:[%s271 + $0x9f8] sm:$0xff]
        %v654 = vld [vmem:[%s271 + $0xa00] sm:$0xff]
        %v655 = vld [vmem:[%s271 + $0xa08] sm:$0xff]
        %v656 = vld [vmem:[%s271 + $0xa10] sm:$0xff]
        %v657 = vld [vmem:[%s271 + $0xa18] sm:$0xff]
        %v658 = vld [vmem:[%s271 + $0xa20] sm:$0xff]
        %v659 = vld [vmem:[%s271 + $0xa28] sm:$0xff]
        %v660 = vld [vmem:[%s271 + $0xa30] sm:$0xff]
        %v661 = vld [vmem:[%s271 + $0xa38] sm:$0xff]
        %v662 = vld [vmem:[%s271 + $0xa40] sm:$0xff]
        %v663 = vld [vmem:[%s271 + $0xa48] sm:$0xff]
        %v664 = vld [vmem:[%s271 + $0xa50] sm:$0xff]
        %v665 = vld [vmem:[%s271 + $0xa58] sm:$0xff]
        %v666 = vld [vmem:[%s271 + $0xa60] sm:$0xff]
        %v667 = vld [vmem:[%s271 + $0xa68] sm:$0xff]
        %v668 = vld [vmem:[%s271 + $0xa70] sm:$0xff]
        %v669 = vld [vmem:[%s271 + $0xa78] sm:$0xff]
        %v670 = vld [vmem:[%s271 + $0xa80] sm:$0xff]
        %v671 = vld [vmem:[%s271 + $0xa88] sm:$0xff]
        %v672 = vld [vmem:[%s271 + $0xa90] sm:$0xff]
        %v673 = vld [vmem:[%s271 + $0xa98] sm:$0xff]
        %v674 = vld [vmem:[%s271 + $0xaa0] sm:$0xff]
        %v675 = vld [vmem:[%s271 + $0xaa8] sm:$0xff]
        %v676 = vld [vmem:[%s271 + $0xab0] sm:$0xff]
        %v677 = vld [vmem:[%s271 + $0xab8] sm:$0xff]
        %v678 = vld [vmem:[%s271 + $0xac0] sm:$0xff]
        %v679 = vld [vmem:[%s271 + $0xac8] sm:$0xff]
        %v680 = vld [vmem:[%s271 + $0xad0] sm:$0xff]
        %v681 = vld [vmem:[%s271 + $0xad8] sm:$0xff]
        %v682 = vld [vmem:[%s271 + $0xae0] sm:$0xff]
        %v683 = vld [vmem:[%s271 + $0xae8] sm:$0xff]
        %v684 = vld [vmem:[%s271 + $0xaf0] sm:$0xff]
        %v685 = vld [vmem:[%s271 + $0xaf8] sm:$0xff]
        %v686 = vld [vmem:[%s271 + $0xb00] sm:$0xff]
        %v687 = vld [vmem:[%s271 + $0xb08] sm:$0xff]
        %v688 = vld [vmem:[%s271 + $0xb10] sm:$0xff]
        %v689 = vld [vmem:[%s271 + $0xb18] sm:$0xff]
        %v690 = vld [vmem:[%s271 + $0xb20] sm:$0xff]
        %v691 = vld [vmem:[%s271 + $0xb28] sm:$0xff]
        %v692 = vld [vmem:[%s271 + $0xb30] sm:$0xff]
        %v693 = vld [vmem:[%s271 + $0xb38] sm:$0xff]
        %v694 = vld [vmem:[%s271 + $0xb40] sm:$0xff]
        %v695 = vld [vmem:[%s271 + $0xb48] sm:$0xff]
        %v696 = vld [vmem:[%s271 + $0xb50] sm:$0xff]
        %v697 = vld [vmem:[%s271 + $0xb58] sm:$0xff]
        %v698 = vld [vmem:[%s271 + $0xb60] sm:$0xff]
        %v699 = vld [vmem:[%s271 + $0xb68] sm:$0xff]
        %v700 = vld [vmem:[%s271 + $0xb70] sm:$0xff]
        %v701 = vld [vmem:[%s271 + $0xb78] sm:$0xff]
        %v702 = vld [vmem:[%s271 + $0xb80] sm:$0xff]
        %v703 = vld [vmem:[%s271 + $0xb88] sm:$0xff]
        %v704 = vld [vmem:[%s271 + $0xb90] sm:$0xff]
        %v705 = vld [vmem:[%s271 + $0xb98] sm:$0xff]
        %v706 = vld [vmem:[%s271 + $0xba0] sm:$0xff]
        %v707 = vld [vmem:[%s271 + $0xba8] sm:$0xff]
        %v708 = vld [vmem:[%s271 + $0xbb0] sm:$0xff]
        %v709 = vld [vmem:[%s271 + $0xbb8] sm:$0xff]
        %v710 = vld [vmem:[%s271 + $0xbc0] sm:$0xff]
        %v711 = vld [vmem:[%s271 + $0xbc8] sm:$0xff]
        %v712 = vld [vmem:[%s271 + $0xbd0] sm:$0xff]
        %v713 = vld [vmem:[%s271 + $0xbd8] sm:$0xff]
        %v714 = vld [vmem:[%s271 + $0xbe0] sm:$0xff]
        %v715 = vld [vmem:[%s271 + $0xbe8] sm:$0xff]
        %v716 = vld [vmem:[%s271 + $0xbf0] sm:$0xff]
        %v717 = vld [vmem:[%s271 + $0xbf8] sm:$0xff]
        %v718 = vld [vmem:[%s271 + $0xc00] sm:$0xff]
        %v719 = vld [vmem:[%s271 + $0xc08] sm:$0xff]
        %v720 = vld [vmem:[%s271 + $0xc10] sm:$0xff]
        %v721 = vld [vmem:[%s271 + $0xc18] sm:$0xff]
        %v722 = vld [vmem:[%s271 + $0xc20] sm:$0xff]
        %v723 = vld [vmem:[%s271 + $0xc28] sm:$0xff]
        %v724 = vld [vmem:[%s271 + $0xc30] sm:$0xff]
        %v725 = vld [vmem:[%s271 + $0xc38] sm:$0xff]
        %v726 = vld [vmem:[%s271 + $0xc40] sm:$0xff]
        %v727 = vld [vmem:[%s271 + $0xc48] sm:$0xff]
        %v728 = vld [vmem:[%s271 + $0xc50] sm:$0xff]
        %v729 = vld [vmem:[%s271 + $0xc58] sm:$0xff]
        %v730 = vld [vmem:[%s271 + $0xc60] sm:$0xff]
        %v731 = vld [vmem:[%s271 + $0xc68] sm:$0xff]
        %v732 = vld [vmem:[%s271 + $0xc70] sm:$0xff]
        %v733 = vld [vmem:[%s271 + $0xc78] sm:$0xff]
        %v734 = vld [vmem:[%s271 + $0xc80] sm:$0xff]
        %v735 = vld [vmem:[%s271 + $0xc88] sm:$0xff]
        %v736 = vld [vmem:[%s271 + $0xc90] sm:$0xff]
        %v737 = vld [vmem:[%s271 + $0xc98] sm:$0xff]
        %v738 = vld [vmem:[%s271 + $0xca0] sm:$0xff]
        %v739 = vld [vmem:[%s271 + $0xca8] sm:$0xff]
        %v740 = vld [vmem:[%s271 + $0xcb0] sm:$0xff]
        %v741 = vld [vmem:[%s271 + $0xcb8] sm:$0xff]
        %v742 = vld [vmem:[%s271 + $0xcc0] sm:$0xff]
        %v743 = vld [vmem:[%s271 + $0xcc8] sm:$0xff]
        %v744 = vld [vmem:[%s271 + $0xcd0] sm:$0xff]
        %v745 = vld [vmem:[%s271 + $0xcd8] sm:$0xff]
        %v746 = vld [vmem:[%s271 + $0xce0] sm:$0xff]
        %v747 = vld [vmem:[%s271 + $0xce8] sm:$0xff]
        %v748 = vld [vmem:[%s271 + $0xcf0] sm:$0xff]
        %v749 = vld [vmem:[%s271 + $0xcf8] sm:$0xff]
        %v750 = vld [vmem:[%s271 + $0xd00] sm:$0xff]
        %v751 = vld [vmem:[%s271 + $0xd08] sm:$0xff]
        %v752 = vld [vmem:[%s271 + $0xd10] sm:$0xff]
        %v753 = vld [vmem:[%s271 + $0xd18] sm:$0xff]
        %v754 = vld [vmem:[%s271 + $0xd20] sm:$0xff]
        %v755 = vld [vmem:[%s271 + $0xd28] sm:$0xff]
        %v756 = vld [vmem:[%s271 + $0xd30] sm:$0xff]
        %v757 = vld [vmem:[%s271 + $0xd38] sm:$0xff]
        %v758 = vld [vmem:[%s271 + $0xd40] sm:$0xff]
        %v759 = vld [vmem:[%s271 + $0xd48] sm:$0xff]
        %v760 = vld [vmem:[%s271 + $0xd50] sm:$0xff]
        %v761 = vld [vmem:[%s271 + $0xd58] sm:$0xff]
        %v762 = vld [vmem:[%s271 + $0xd60] sm:$0xff]
        %v763 = vld [vmem:[%s271 + $0xd68] sm:$0xff]
        %v764 = vld [vmem:[%s271 + $0xd70] sm:$0xff]
        %v765 = vld [vmem:[%s271 + $0xd78] sm:$0xff]
        %v766 = vld [vmem:[%s271 + $0xd80] sm:$0xff]
        %v767 = vld [vmem:[%s271 + $0xd88] sm:$0xff]
        %v768 = vld [vmem:[%s271 + $0xd90] sm:$0xff]
        %v769 = vld [vmem:[%s271 + $0xd98] sm:$0xff]
        %v770 = vld [vmem:[%s271 + $0xda0] sm:$0xff]
        %v771 = vld [vmem:[%s271 + $0xda8] sm:$0xff]
        %v772 = vld [vmem:[%s271 + $0xdb0] sm:$0xff]
        %v773 = vld [vmem:[%s271 + $0xdb8] sm:$0xff]
        %v774 = vld [vmem:[%s271 + $0xdc0] sm:$0xff]
        %v775 = vld [vmem:[%s271 + $0xdc8] sm:$0xff]
        %v776 = vld [vmem:[%s271 + $0xdd0] sm:$0xff]
        %v777 = vld [vmem:[%s271 + $0xdd8] sm:$0xff]
        %v778 = vld [vmem:[%s271 + $0xde0] sm:$0xff]
        %v779 = vld [vmem:[%s271 + $0xde8] sm:$0xff]
        %v780 = vld [vmem:[%s271 + $0xdf0] sm:$0xff]
        %v781 = vld [vmem:[%s271 + $0xdf8] sm:$0xff]
        %v782 = vld [vmem:[%s271 + $0xe00] sm:$0xff]
        %v783 = vld [vmem:[%s271 + $0xe08] sm:$0xff]
        %v784 = vld [vmem:[%s271 + $0xe10] sm:$0xff]
        %v785 = vld [vmem:[%s271 + $0xe18] sm:$0xff]
        %v786 = vld [vmem:[%s271 + $0xe20] sm:$0xff]
        %v787 = vld [vmem:[%s271 + $0xe28] sm:$0xff]
        %v788 = vld [vmem:[%s271 + $0xe30] sm:$0xff]
        %v789 = vld [vmem:[%s271 + $0xe38] sm:$0xff]
        %v790 = vld [vmem:[%s271 + $0xe40] sm:$0xff]
        %v791 = vld [vmem:[%s271 + $0xe48] sm:$0xff]
        %v792 = vld [vmem:[%s271 + $0xe50] sm:$0xff]
        %v793 = vld [vmem:[%s271 + $0xe58] sm:$0xff]
        %v794 = vld [vmem:[%s271 + $0xe60] sm:$0xff]
        %v795 = vld [vmem:[%s271 + $0xe68] sm:$0xff]
        %v796 = vld [vmem:[%s271 + $0xe70] sm:$0xff]
        %v797 = vld [vmem:[%s271 + $0xe78] sm:$0xff]
        %v798 = vld [vmem:[%s271 + $0xe80] sm:$0xff]
        %v799 = vld [vmem:[%s271 + $0xe88] sm:$0xff]
        %v800 = vld [vmem:[%s271 + $0xe90] sm:$0xff]
        %v801 = vld [vmem:[%s271 + $0xe98] sm:$0xff]
        %v802 = vld [vmem:[%s271 + $0xea0] sm:$0xff]
        %v803 = vld [vmem:[%s271 + $0xea8] sm:$0xff]
        %v804 = vld [vmem:[%s271 + $0xeb0] sm:$0xff]
        %v805 = vld [vmem:[%s271 + $0xeb8] sm:$0xff]
        %v806 = vld [vmem:[%s271 + $0xec0] sm:$0xff]
        %v807 = vld [vmem:[%s271 + $0xec8] sm:$0xff]
        %v808 = vld [vmem:[%s271 + $0xed0] sm:$0xff]
        %v809 = vld [vmem:[%s271 + $0xed8] sm:$0xff]
        %v810 = vld [vmem:[%s271 + $0xee0] sm:$0xff]
        %v811 = vld [vmem:[%s271 + $0xee8] sm:$0xff]
        %v812 = vld [vmem:[%s271 + $0xef0] sm:$0xff]
        %v813 = vld [vmem:[%s271 + $0xef8] sm:$0xff]
        %v814 = vld [vmem:[%s271 + $0xf00] sm:$0xff]
        %v815 = vld [vmem:[%s271 + $0xf08] sm:$0xff]
        %v816 = vld [vmem:[%s271 + $0xf10] sm:$0xff]
        %v817 = vld [vmem:[%s271 + $0xf18] sm:$0xff]
        %v818 = vld [vmem:[%s271 + $0xf20] sm:$0xff]
        %v819 = vld [vmem:[%s271 + $0xf28] sm:$0xff]
        %v820 = vld [vmem:[%s271 + $0xf30] sm:$0xff]
        %v821 = vld [vmem:[%s271 + $0xf38] sm:$0xff]
        %v822 = vld [vmem:[%s271 + $0xf40] sm:$0xff]
        %v823 = vld [vmem:[%s271 + $0xf48] sm:$0xff]
        %v824 = vld [vmem:[%s271 + $0xf50] sm:$0xff]
        %v825 = vld [vmem:[%s271 + $0xf58] sm:$0xff]
        %v826 = vld [vmem:[%s271 + $0xf60] sm:$0xff]
        %v827 = vld [vmem:[%s271 + $0xf68] sm:$0xff]
        %v828 = vld [vmem:[%s271 + $0xf70] sm:$0xff]
        %v829 = vld [vmem:[%s271 + $0xf78] sm:$0xff]
        %v830 = vld [vmem:[%s271 + $0xf80] sm:$0xff]
        %v831 = vld [vmem:[%s271 + $0xf88] sm:$0xff]
        %v832 = vld [vmem:[%s271 + $0xf90] sm:$0xff]
        %v833 = vld [vmem:[%s271 + $0xf98] sm:$0xff]
        %v834 = vld [vmem:[%s271 + $0xfa0] sm:$0xff]
        %v835 = vld [vmem:[%s271 + $0xfa8] sm:$0xff]
        %v836 = vld [vmem:[%s271 + $0xfb0] sm:$0xff]
        %v837 = vld [vmem:[%s271 + $0xfb8] sm:$0xff]
        %v838 = vld [vmem:[%s271 + $0xfc0] sm:$0xff]
        %v839 = vld [vmem:[%s271 + $0xfc8] sm:$0xff]
        %v840 = vld [vmem:[%s271 + $0xfd0] sm:$0xff]
        %v841 = vld [vmem:[%s271 + $0xfd8] sm:$0xff]
        %v842 = vld [vmem:[%s271 + $0xfe0] sm:$0xff]
        %v843 = vld [vmem:[%s271 + $0xfe8] sm:$0xff]
        %v844 = vld [vmem:[%s271 + $0xff0] sm:$0xff]
        %v845 = vld [vmem:[%s271 + $0xff8] sm:$0xff]
        %v846 = vld [vmem:[%s271 + $0x1000] sm:$0xff]
        %v847 = vld [vmem:[%s271 + $0x1008] sm:$0xff]
        %v848 = vld [vmem:[%s271 + $0x1010] sm:$0xff]
        %v849 = vld [vmem:[%s271 + $0x1018] sm:$0xff]
        %v850 = vld [vmem:[%s271 + $0x1020] sm:$0xff]
        %v851 = vld [vmem:[%s271 + $0x1028] sm:$0xff]
        %v852 = vld [vmem:[%s271 + $0x1030] sm:$0xff]
        %v853 = vld [vmem:[%s271 + $0x1038] sm:$0xff]
        %v854 = vld [vmem:[%s271 + $0x1040] sm:$0xff]
        %v855 = vld [vmem:[%s271 + $0x1048] sm:$0xff]
        %v856 = vld [vmem:[%s271 + $0x1050] sm:$0xff]
        %v857 = vld [vmem:[%s271 + $0x1058] sm:$0xff]
        %v858 = vld [vmem:[%s271 + $0x1060] sm:$0xff]
        %v859 = vld [vmem:[%s271 + $0x1068] sm:$0xff]
        %v860 = vld [vmem:[%s271 + $0x1070] sm:$0xff]
        %v861 = vld [vmem:[%s271 + $0x1078] sm:$0xff]
        %v862 = vld [vmem:[%s271 + $0x1080] sm:$0xff]
        %v863 = vld [vmem:[%s271 + $0x1088] sm:$0xff]
        %v864 = vld [vmem:[%s271 + $0x1090] sm:$0xff]
        %v865 = vld [vmem:[%s271 + $0x1098] sm:$0xff]
        %v866 = vld [vmem:[%s271 + $0x10a0] sm:$0xff]
        %v867 = vld [vmem:[%s271 + $0x10a8] sm:$0xff]
        %v868 = vld [vmem:[%s271 + $0x10b0] sm:$0xff]
        %v869 = vld [vmem:[%s271 + $0x10b8] sm:$0xff]
        %v870 = vld [vmem:[%s271 + $0x10c0] sm:$0xff]
        %v871 = vld [vmem:[%s271 + $0x10c8] sm:$0xff]
        %v872 = vld [vmem:[%s271 + $0x10d0] sm:$0xff]
        %v873 = vld [vmem:[%s271 + $0x10d8] sm:$0xff]
        %v874 = vld [vmem:[%s271 + $0x10e0] sm:$0xff]
        %v875 = vld [vmem:[%s271 + $0x10e8] sm:$0xff]
        %v876 = vld [vmem:[%s271 + $0x10f0] sm:$0xff]
        %v877 = vld [vmem:[%s271 + $0x10f8] sm:$0xff]
        %v878 = vld [vmem:[%s271 + $0x1100] sm:$0xff]
        %v879 = vld [vmem:[%s271 + $0x1108] sm:$0xff]
        %v880 = vld [vmem:[%s271 + $0x1110] sm:$0xff]
        %v881 = vld [vmem:[%s271 + $0x1118] sm:$0xff]
        %v882 = vld [vmem:[%s271 + $0x1120] sm:$0xff]
        %v883 = vld [vmem:[%s271 + $0x1128] sm:$0xff]
        %v884 = vld [vmem:[%s271 + $0x1130] sm:$0xff]
        %v885 = vld [vmem:[%s271 + $0x1138] sm:$0xff]
        %v886 = vld [vmem:[%s271 + $0x1140] sm:$0xff]
        %v887 = vld [vmem:[%s271 + $0x1148] sm:$0xff]
        %v888 = vld [vmem:[%s271 + $0x1150] sm:$0xff]
        %v889 = vld [vmem:[%s271 + $0x1158] sm:$0xff]
        %v890 = vld [vmem:[%s271 + $0x1160] sm:$0xff]
        %v891 = vld [vmem:[%s271 + $0x1168] sm:$0xff]
        %v892 = vld [vmem:[%s271 + $0x1170] sm:$0xff]
        %v893 = vld [vmem:[%s271 + $0x1178] sm:$0xff]
        %v894 = vld [vmem:[%s271 + $0x1180] sm:$0xff]
        %v895 = vld [vmem:[%s271 + $0x1188] sm:$0xff]
        %v896 = vld [vmem:[%s271 + $0x1190] sm:$0xff]
        %v897 = vld [vmem:[%s271 + $0x1198] sm:$0xff]
        %v898 = vld [vmem:[%s271 + $0x11a0] sm:$0xff]
        %v899 = vld [vmem:[%s271 + $0x11a8] sm:$0xff]
        %v900 = vld [vmem:[%s271 + $0x11b0] sm:$0xff]
        %v901 = vld [vmem:[%s271 + $0x11b8] sm:$0xff]
        %v902 = vld [vmem:[%s271 + $0x11c0] sm:$0xff]
        %v903 = vld [vmem:[%s271 + $0x11c8] sm:$0xff]
        %v904 = vld [vmem:[%s271 + $0x11d0] sm:$0xff]
        %v905 = vld [vmem:[%s271 + $0x11d8] sm:$0xff]
        %v906 = vld [vmem:[%s271 + $0x11e0] sm:$0xff]
        %v907 = vld [vmem:[%s271 + $0x11e8] sm:$0xff]
        %v908 = vld [vmem:[%s271 + $0x11f0] sm:$0xff]
        %v909 = vld [vmem:[%s271 + $0x11f8] sm:$0xff]
        %v911 = vcombine.high %v331, %v331
        %v913 = vunpack.c.l.s4 1966171168
        %v914 = vunpack.c.0.s8 %v913
        %v915 = vlaneseq
        %v916 = vshrl.u32 %v915, 7
        %v917 = vsub.s32 %v914, %v916
        %v918 = vrot.slane %v331, %v917
        %v920 = vunpack.c.l.s4 1966171168
        %v921 = vunpack.c.0.s8 %v920
        %v922 = vlaneseq
        %v923 = vshrl.u32 %v922, 7
        %v924 = vsub.s32 %v921, %v923
        %v925 = vrot.slane %v911, %v924
        %v926 = vcombine.high %v918, %v918
        %v927 = vcombine.high %v925, %v925
        %v929 = vunpack.c.l.s4 1966171168
        %v930 = vunpack.c.0.s8 %v929
        %v931 = vlaneseq
        %v932 = vshrl.u32 %v931, 7
        %v933 = vsub.s32 %v930, %v932
        %v934 = vrot.slane %v918, %v933
        %v936 = vunpack.c.l.s4 1966171168
        %v937 = vunpack.c.0.s8 %v936
        %v938 = vlaneseq
        %v939 = vshrl.u32 %v938, 7
        %v940 = vsub.s32 %v937, %v939
        %v941 = vrot.slane %v925, %v940
        %v943 = vunpack.c.l.s4 1966171168
        %v944 = vunpack.c.0.s8 %v943
        %v945 = vlaneseq
        %v946 = vshrl.u32 %v945, 7
        %v947 = vsub.s32 %v944, %v946
        %v948 = vrot.slane %v926, %v947
        %v950 = vunpack.c.l.s4 1966171168
        %v951 = vunpack.c.0.s8 %v950
        %v952 = vlaneseq
        %v953 = vshrl.u32 %v952, 7
        %v954 = vsub.s32 %v951, %v953
        %v955 = vrot.slane %v927, %v954
        %v956 = vcombine.high %v934, %v934
        %v957 = vcombine.high %v948, %v948
        %v1156 = vunpack.c.l.b16 %v334
        %v1157 = vunpack.c.h.b16 %v334
        %v1158 = vunpack.c.l.b16 %v335
        %v1159 = vunpack.c.h.b16 %v335
        %v1160 = vunpack.c.l.b16 %v336
        %v1161 = vunpack.c.h.b16 %v336
        %v1162 = vunpack.c.l.b16 %v337
        %v1163 = vunpack.c.h.b16 %v337
        %v1164 = vunpack.c.l.b16 %v338
        %v1165 = vunpack.c.h.b16 %v338
        %v1166 = vunpack.c.l.b16 %v339
        %v1167 = vunpack.c.h.b16 %v339
        %v1168 = vunpack.c.l.b16 %v340
        %v1169 = vunpack.c.h.b16 %v340
        %v1170 = vunpack.c.l.b16 %v341
        %v1171 = vunpack.c.h.b16 %v341
        %v1172 = vunpack.c.l.b16 %v342
        %v1173 = vunpack.c.h.b16 %v342
        %v1174 = vunpack.c.l.b16 %v343
        %v1175 = vunpack.c.h.b16 %v343
        %v1176 = vunpack.c.l.b16 %v344
        %v1177 = vunpack.c.h.b16 %v344
        %v1178 = vunpack.c.l.b16 %v345
        %v1179 = vunpack.c.h.b16 %v345
        %v1180 = vunpack.c.l.b16 %v346
        %v1181 = vunpack.c.h.b16 %v346
        %v1182 = vunpack.c.l.b16 %v347
        %v1183 = vunpack.c.h.b16 %v347
        %v1184 = vunpack.c.l.b16 %v348
        %v1185 = vunpack.c.h.b16 %v348
        %v1186 = vunpack.c.l.b16 %v349
        %v1187 = vunpack.c.h.b16 %v349
        %v1188 = vunpack.c.l.b16 %v350
        %v1189 = vunpack.c.h.b16 %v350
        %v1190 = vunpack.c.l.b16 %v351
        %v1191 = vunpack.c.h.b16 %v351
        %v1192 = vunpack.c.l.b16 %v352
        %v1193 = vunpack.c.h.b16 %v352
        %v1194 = vunpack.c.l.b16 %v353
        %v1195 = vunpack.c.h.b16 %v353
        %v1196 = vunpack.c.l.b16 %v354
        %v1197 = vunpack.c.h.b16 %v354
        %v1198 = vunpack.c.l.b16 %v355
        %v1199 = vunpack.c.h.b16 %v355
        %v1200 = vunpack.c.l.b16 %v356
        %v1201 = vunpack.c.h.b16 %v356
        %v1202 = vunpack.c.l.b16 %v357
        %v1203 = vunpack.c.h.b16 %v357
        %v1204 = vunpack.c.l.b16 %v358
        %v1205 = vunpack.c.h.b16 %v358
        %v1206 = vunpack.c.l.b16 %v359
        %v1207 = vunpack.c.h.b16 %v359
        %v1208 = vunpack.c.l.b16 %v360
        %v1209 = vunpack.c.h.b16 %v360
        %v1210 = vunpack.c.l.b16 %v361
        %v1211 = vunpack.c.h.b16 %v361
        %v1212 = vunpack.c.l.b16 %v362
        %v1213 = vunpack.c.h.b16 %v362
        %v1214 = vunpack.c.l.b16 %v363
        %v1215 = vunpack.c.h.b16 %v363
        %v1216 = vunpack.c.l.b16 %v364
        %v1217 = vunpack.c.h.b16 %v364
        %v1218 = vunpack.c.l.b16 %v365
        %v1219 = vunpack.c.h.b16 %v365
        %v1220 = vunpack.c.l.b16 %v366
        %v1221 = vunpack.c.h.b16 %v366
        %v1222 = vunpack.c.l.b16 %v367
        %v1223 = vunpack.c.h.b16 %v367
        %v1224 = vunpack.c.l.b16 %v368
        %v1225 = vunpack.c.h.b16 %v368
        %v1226 = vunpack.c.l.b16 %v369
        %v1227 = vunpack.c.h.b16 %v369
        %v1228 = vunpack.c.l.b16 %v370
        %v1229 = vunpack.c.h.b16 %v370
        %v1230 = vunpack.c.l.b16 %v371
        %v1231 = vunpack.c.h.b16 %v371
        %v1232 = vunpack.c.l.b16 %v372
        %v1233 = vunpack.c.h.b16 %v372
        %v1234 = vunpack.c.l.b16 %v373
        %v1235 = vunpack.c.h.b16 %v373
        %v1236 = vunpack.c.l.b16 %v374
        %v1237 = vunpack.c.h.b16 %v374
        %v1238 = vunpack.c.l.b16 %v375
        %v1239 = vunpack.c.h.b16 %v375
        %v1240 = vunpack.c.l.b16 %v376
        %v1241 = vunpack.c.h.b16 %v376
        %v1242 = vunpack.c.l.b16 %v377
        %v1243 = vunpack.c.h.b16 %v377
        %v1244 = vunpack.c.l.b16 %v378
        %v1245 = vunpack.c.h.b16 %v378
        %v1246 = vunpack.c.l.b16 %v379
        %v1247 = vunpack.c.h.b16 %v379
        %v1248 = vunpack.c.l.b16 %v380
        %v1249 = vunpack.c.h.b16 %v380
        %v1250 = vunpack.c.l.b16 %v381
        %v1251 = vunpack.c.h.b16 %v381
        %v1252 = vunpack.c.l.b16 %v382
        %v1253 = vunpack.c.h.b16 %v382
        %v1254 = vunpack.c.l.b16 %v383
        %v1255 = vunpack.c.h.b16 %v383
        %v1256 = vunpack.c.l.b16 %v384
        %v1257 = vunpack.c.h.b16 %v384
        %v1258 = vunpack.c.l.b16 %v385
        %v1259 = vunpack.c.h.b16 %v385
        %v1260 = vunpack.c.l.b16 %v386
        %v1261 = vunpack.c.h.b16 %v386
        %v1262 = vunpack.c.l.b16 %v387
        %v1263 = vunpack.c.h.b16 %v387
        %v1264 = vunpack.c.l.b16 %v388
        %v1265 = vunpack.c.h.b16 %v388
        %v1266 = vunpack.c.l.b16 %v389
        %v1267 = vunpack.c.h.b16 %v389
        %v1268 = vunpack.c.l.b16 %v390
        %v1269 = vunpack.c.h.b16 %v390
        %v1270 = vunpack.c.l.b16 %v391
        %v1271 = vunpack.c.h.b16 %v391
        %v1272 = vunpack.c.l.b16 %v392
        %v1273 = vunpack.c.h.b16 %v392
        %v1274 = vunpack.c.l.b16 %v393
        %v1275 = vunpack.c.h.b16 %v393
        %v1276 = vunpack.c.l.b16 %v394
        %v1277 = vunpack.c.h.b16 %v394
        %v1278 = vunpack.c.l.b16 %v395
        %v1279 = vunpack.c.h.b16 %v395
        %v1280 = vunpack.c.l.b16 %v396
        %v1281 = vunpack.c.h.b16 %v396
        %v1282 = vunpack.c.l.b16 %v397
        %v1283 = vunpack.c.h.b16 %v397
        %v1284 = vunpack.c.l.b16 %v398
        %v1285 = vunpack.c.h.b16 %v398
        %v1286 = vunpack.c.l.b16 %v399
        %v1287 = vunpack.c.h.b16 %v399
        %v1288 = vunpack.c.l.b16 %v400
        %v1289 = vunpack.c.h.b16 %v400
        %v1290 = vunpack.c.l.b16 %v401
        %v1291 = vunpack.c.h.b16 %v401
        %v1292 = vunpack.c.l.b16 %v402
        %v1293 = vunpack.c.h.b16 %v402
        %v1294 = vunpack.c.l.b16 %v403
        %v1295 = vunpack.c.h.b16 %v403
        %v1296 = vunpack.c.l.b16 %v404
        %v1297 = vunpack.c.h.b16 %v404
        %v1298 = vunpack.c.l.b16 %v405
        %v1299 = vunpack.c.h.b16 %v405
        %v1300 = vunpack.c.l.b16 %v406
        %v1301 = vunpack.c.h.b16 %v406
        %v1302 = vunpack.c.l.b16 %v407
        %v1303 = vunpack.c.h.b16 %v407
        %v1304 = vunpack.c.l.b16 %v408
        %v1305 = vunpack.c.h.b16 %v408
        %v1306 = vunpack.c.l.b16 %v409
        %v1307 = vunpack.c.h.b16 %v409
        %v1308 = vunpack.c.l.b16 %v410
        %v1309 = vunpack.c.h.b16 %v410
        %v1310 = vunpack.c.l.b16 %v411
        %v1311 = vunpack.c.h.b16 %v411
        %v1312 = vunpack.c.l.b16 %v412
        %v1313 = vunpack.c.h.b16 %v412
        %v1314 = vunpack.c.l.b16 %v413
        %v1315 = vunpack.c.h.b16 %v413
        %v1316 = vunpack.c.l.b16 %v414
        %v1317 = vunpack.c.h.b16 %v414
        %v1318 = vunpack.c.l.b16 %v415
        %v1319 = vunpack.c.h.b16 %v415
        %v1320 = vunpack.c.l.b16 %v416
        %v1321 = vunpack.c.h.b16 %v416
        %v1322 = vunpack.c.l.b16 %v417
        %v1323 = vunpack.c.h.b16 %v417
        %v1324 = vunpack.c.l.b16 %v418
        %v1325 = vunpack.c.h.b16 %v418
        %v1326 = vunpack.c.l.b16 %v419
        %v1327 = vunpack.c.h.b16 %v419
        %v1328 = vunpack.c.l.b16 %v420
        %v1329 = vunpack.c.h.b16 %v420
        %v1330 = vunpack.c.l.b16 %v421
        %v1331 = vunpack.c.h.b16 %v421
        %v1332 = vunpack.c.l.b16 %v422
        %v1333 = vunpack.c.h.b16 %v422
        %v1334 = vunpack.c.l.b16 %v423
        %v1335 = vunpack.c.h.b16 %v423
        %v1336 = vunpack.c.l.b16 %v424
        %v1337 = vunpack.c.h.b16 %v424
        %v1338 = vunpack.c.l.b16 %v425
        %v1339 = vunpack.c.h.b16 %v425
        %v1340 = vunpack.c.l.b16 %v426
        %v1341 = vunpack.c.h.b16 %v426
        %v1342 = vunpack.c.l.b16 %v427
        %v1343 = vunpack.c.h.b16 %v427
        %v1344 = vunpack.c.l.b16 %v428
        %v1345 = vunpack.c.h.b16 %v428
        %v1346 = vunpack.c.l.b16 %v429
        %v1347 = vunpack.c.h.b16 %v429
        %v1348 = vunpack.c.l.b16 %v430
        %v1349 = vunpack.c.h.b16 %v430
        %v1350 = vunpack.c.l.b16 %v431
        %v1351 = vunpack.c.h.b16 %v431
        %v1352 = vunpack.c.l.b16 %v432
        %v1353 = vunpack.c.h.b16 %v432
        %v1354 = vunpack.c.l.b16 %v433
        %v1355 = vunpack.c.h.b16 %v433
        %v1356 = vunpack.c.l.b16 %v434
        %v1357 = vunpack.c.h.b16 %v434
        %v1358 = vunpack.c.l.b16 %v435
        %v1359 = vunpack.c.h.b16 %v435
        %v1360 = vunpack.c.l.b16 %v436
        %v1361 = vunpack.c.h.b16 %v436
        %v1362 = vunpack.c.l.b16 %v437
        %v1363 = vunpack.c.h.b16 %v437
        %v1364 = vunpack.c.l.b16 %v438
        %v1365 = vunpack.c.h.b16 %v438
        %v1366 = vunpack.c.l.b16 %v439
        %v1367 = vunpack.c.h.b16 %v439
        %v1368 = vunpack.c.l.b16 %v440
        %v1369 = vunpack.c.h.b16 %v440
        %v1370 = vunpack.c.l.b16 %v441
        %v1371 = vunpack.c.h.b16 %v441
        %v1372 = vunpack.c.l.b16 %v442
        %v1373 = vunpack.c.h.b16 %v442
        %v1374 = vunpack.c.l.b16 %v443
        %v1375 = vunpack.c.h.b16 %v443
        %v1376 = vunpack.c.l.b16 %v444
        %v1377 = vunpack.c.h.b16 %v444
        %v1378 = vunpack.c.l.b16 %v445
        %v1379 = vunpack.c.h.b16 %v445
        %v1380 = vunpack.c.l.b16 %v446
        %v1381 = vunpack.c.h.b16 %v446
        %v1382 = vunpack.c.l.b16 %v447
        %v1383 = vunpack.c.h.b16 %v447
        %v1384 = vunpack.c.l.b16 %v448
        %v1385 = vunpack.c.h.b16 %v448
        %v1386 = vunpack.c.l.b16 %v449
        %v1387 = vunpack.c.h.b16 %v449
        %v1388 = vunpack.c.l.b16 %v450
        %v1389 = vunpack.c.h.b16 %v450
        %v1390 = vunpack.c.l.b16 %v451
        %v1391 = vunpack.c.h.b16 %v451
        %v1392 = vunpack.c.l.b16 %v452
        %v1393 = vunpack.c.h.b16 %v452
        %v1394 = vunpack.c.l.b16 %v453
        %v1395 = vunpack.c.h.b16 %v453
        %v1396 = vunpack.c.l.b16 %v454
        %v1397 = vunpack.c.h.b16 %v454
        %v1398 = vunpack.c.l.b16 %v455
        %v1399 = vunpack.c.h.b16 %v455
        %v1400 = vunpack.c.l.b16 %v456
        %v1401 = vunpack.c.h.b16 %v456
        %v1402 = vunpack.c.l.b16 %v457
        %v1403 = vunpack.c.h.b16 %v457
        %v1404 = vunpack.c.l.b16 %v458
        %v1405 = vunpack.c.h.b16 %v458
        %v1406 = vunpack.c.l.b16 %v459
        %v1407 = vunpack.c.h.b16 %v459
        %v1408 = vunpack.c.l.b16 %v460
        %v1409 = vunpack.c.h.b16 %v460
        %v1410 = vunpack.c.l.b16 %v461
        %v1411 = vunpack.c.h.b16 %v461
        %v1412 = vunpack.c.l.b16 %v462
        %v1413 = vunpack.c.h.b16 %v462
        %v1414 = vunpack.c.l.b16 %v463
        %v1415 = vunpack.c.h.b16 %v463
        %v1416 = vunpack.c.l.b16 %v464
        %v1417 = vunpack.c.h.b16 %v464
        %v1418 = vunpack.c.l.b16 %v465
        %v1419 = vunpack.c.h.b16 %v465
        %v1420 = vunpack.c.l.b16 %v466
        %v1421 = vunpack.c.h.b16 %v466
        %v1422 = vunpack.c.l.b16 %v467
        %v1423 = vunpack.c.h.b16 %v467
        %v1424 = vunpack.c.l.b16 %v468
        %v1425 = vunpack.c.h.b16 %v468
        %v1426 = vunpack.c.l.b16 %v469
        %v1427 = vunpack.c.h.b16 %v469
        %v1428 = vunpack.c.l.b16 %v470
        %v1429 = vunpack.c.h.b16 %v470
        %v1430 = vunpack.c.l.b16 %v471
        %v1431 = vunpack.c.h.b16 %v471
        %v1432 = vunpack.c.l.b16 %v472
        %v1433 = vunpack.c.h.b16 %v472
        %v1434 = vunpack.c.l.b16 %v473
        %v1435 = vunpack.c.h.b16 %v473
        %v1436 = vunpack.c.l.b16 %v474
        %v1437 = vunpack.c.h.b16 %v474
        %v1438 = vunpack.c.l.b16 %v475
        %v1439 = vunpack.c.h.b16 %v475
        %v1440 = vunpack.c.l.b16 %v476
        %v1441 = vunpack.c.h.b16 %v476
        %v1442 = vunpack.c.l.b16 %v477
        %v1443 = vunpack.c.h.b16 %v477
        %v1444 = vunpack.c.l.b16 %v478
        %v1445 = vunpack.c.h.b16 %v478
        %v1446 = vunpack.c.l.b16 %v479
        %v1447 = vunpack.c.h.b16 %v479
        %v1448 = vunpack.c.l.b16 %v480
        %v1449 = vunpack.c.h.b16 %v480
        %v1450 = vunpack.c.l.b16 %v481
        %v1451 = vunpack.c.h.b16 %v481
        %v1452 = vunpack.c.l.b16 %v482
        %v1453 = vunpack.c.h.b16 %v482
        %v1454 = vunpack.c.l.b16 %v483
        %v1455 = vunpack.c.h.b16 %v483
        %v1456 = vunpack.c.l.b16 %v484
        %v1457 = vunpack.c.h.b16 %v484
        %v1458 = vunpack.c.l.b16 %v485
        %v1459 = vunpack.c.h.b16 %v485
        %v1460 = vunpack.c.l.b16 %v486
        %v1461 = vunpack.c.h.b16 %v486
        %v1462 = vunpack.c.l.b16 %v487
        %v1463 = vunpack.c.h.b16 %v487
        %v1464 = vunpack.c.l.b16 %v488
        %v1465 = vunpack.c.h.b16 %v488
        %v1466 = vunpack.c.l.b16 %v489
        %v1467 = vunpack.c.h.b16 %v489
        %v1468 = vunpack.c.l.b16 %v490
        %v1469 = vunpack.c.h.b16 %v490
        %v1470 = vunpack.c.l.b16 %v491
        %v1471 = vunpack.c.h.b16 %v491
        %v1472 = vunpack.c.l.b16 %v492
        %v1473 = vunpack.c.h.b16 %v492
        %v1474 = vunpack.c.l.b16 %v493
        %v1475 = vunpack.c.h.b16 %v493
        %v1476 = vunpack.c.l.b16 %v494
        %v1477 = vunpack.c.h.b16 %v494
        %v1478 = vunpack.c.l.b16 %v495
        %v1479 = vunpack.c.h.b16 %v495
        %v1480 = vunpack.c.l.b16 %v496
        %v1481 = vunpack.c.h.b16 %v496
        %v1482 = vunpack.c.l.b16 %v497
        %v1483 = vunpack.c.h.b16 %v497
        %v1484 = vunpack.c.l.b16 %v498
        %v1485 = vunpack.c.h.b16 %v498
        %v1486 = vunpack.c.l.b16 %v499
        %v1487 = vunpack.c.h.b16 %v499
        %v1488 = vunpack.c.l.b16 %v500
        %v1489 = vunpack.c.h.b16 %v500
        %v1490 = vunpack.c.l.b16 %v501
        %v1491 = vunpack.c.h.b16 %v501
        %v1492 = vunpack.c.l.b16 %v502
        %v1493 = vunpack.c.h.b16 %v502
        %v1494 = vunpack.c.l.b16 %v503
        %v1495 = vunpack.c.h.b16 %v503
        %v1496 = vunpack.c.l.b16 %v504
        %v1497 = vunpack.c.h.b16 %v504
        %v1498 = vunpack.c.l.b16 %v505
        %v1499 = vunpack.c.h.b16 %v505
        %v1500 = vunpack.c.l.b16 %v506
        %v1501 = vunpack.c.h.b16 %v506
        %v1502 = vunpack.c.l.b16 %v507
        %v1503 = vunpack.c.h.b16 %v507
        %v1504 = vunpack.c.l.b16 %v508
        %v1505 = vunpack.c.h.b16 %v508
        %v1506 = vunpack.c.l.b16 %v509
        %v1507 = vunpack.c.h.b16 %v509
        %v1508 = vunpack.c.l.b16 %v510
        %v1509 = vunpack.c.h.b16 %v510
        %v1510 = vunpack.c.l.b16 %v511
        %v1511 = vunpack.c.h.b16 %v511
        %v1512 = vunpack.c.l.b16 %v512
        %v1513 = vunpack.c.h.b16 %v512
        %v1514 = vunpack.c.l.b16 %v513
        %v1515 = vunpack.c.h.b16 %v513
        %v1516 = vunpack.c.l.b16 %v514
        %v1517 = vunpack.c.h.b16 %v514
        %v1518 = vunpack.c.l.b16 %v515
        %v1519 = vunpack.c.h.b16 %v515
        %v1520 = vunpack.c.l.b16 %v516
        %v1521 = vunpack.c.h.b16 %v516
        %v1522 = vunpack.c.l.b16 %v517
        %v1523 = vunpack.c.h.b16 %v517
        %v1524 = vunpack.c.l.b16 %v518
        %v1525 = vunpack.c.h.b16 %v518
        %v1526 = vunpack.c.l.b16 %v519
        %v1527 = vunpack.c.h.b16 %v519
        %v1528 = vunpack.c.l.b16 %v520
        %v1529 = vunpack.c.h.b16 %v520
        %v1530 = vunpack.c.l.b16 %v521
        %v1531 = vunpack.c.h.b16 %v521
        %v1532 = vunpack.c.l.b16 %v522
        %v1533 = vunpack.c.h.b16 %v522
        %v1534 = vunpack.c.l.b16 %v523
        %v1535 = vunpack.c.h.b16 %v523
        %v1536 = vunpack.c.l.b16 %v524
        %v1537 = vunpack.c.h.b16 %v524
        %v1538 = vunpack.c.l.b16 %v525
        %v1539 = vunpack.c.h.b16 %v525
        %v1540 = vpack.c.b16 %v1160, %v1156
        %v1541 = vpack.c.b16 %v1161, %v1157
        %v1542 = vpack.c.b16 %v1162, %v1158
        %v1543 = vpack.c.b16 %v1163, %v1159
        %v1544 = vpack.c.b16 %v1168, %v1164
        %v1545 = vpack.c.b16 %v1169, %v1165
        %v1546 = vpack.c.b16 %v1170, %v1166
        %v1547 = vpack.c.b16 %v1171, %v1167
        %v1548 = vpack.c.b16 %v1176, %v1172
        %v1549 = vpack.c.b16 %v1177, %v1173
        %v1550 = vpack.c.b16 %v1178, %v1174
        %v1551 = vpack.c.b16 %v1179, %v1175
        %v1552 = vpack.c.b16 %v1184, %v1180
        %v1553 = vpack.c.b16 %v1185, %v1181
        %v1554 = vpack.c.b16 %v1186, %v1182
        %v1555 = vpack.c.b16 %v1187, %v1183
        %v1556 = vpack.c.b16 %v1192, %v1188
        %v1557 = vpack.c.b16 %v1193, %v1189
        %v1558 = vpack.c.b16 %v1194, %v1190
        %v1559 = vpack.c.b16 %v1195, %v1191
        %v1560 = vpack.c.b16 %v1200, %v1196
        %v1561 = vpack.c.b16 %v1201, %v1197
        %v1562 = vpack.c.b16 %v1202, %v1198
        %v1563 = vpack.c.b16 %v1203, %v1199
        %v1564 = vpack.c.b16 %v1208, %v1204
        %v1565 = vpack.c.b16 %v1209, %v1205
        %v1566 = vpack.c.b16 %v1210, %v1206
        %v1567 = vpack.c.b16 %v1211, %v1207
        %v1568 = vpack.c.b16 %v1216, %v1212
        %v1569 = vpack.c.b16 %v1217, %v1213
        %v1570 = vpack.c.b16 %v1218, %v1214
        %v1571 = vpack.c.b16 %v1219, %v1215
        %v1572 = vpack.c.b16 %v1224, %v1220
        %v1573 = vpack.c.b16 %v1225, %v1221
        %v1574 = vpack.c.b16 %v1226, %v1222
        %v1575 = vpack.c.b16 %v1227, %v1223
        %v1576 = vpack.c.b16 %v1232, %v1228
        %v1577 = vpack.c.b16 %v1233, %v1229
        %v1578 = vpack.c.b16 %v1234, %v1230
        %v1579 = vpack.c.b16 %v1235, %v1231
        %v1580 = vpack.c.b16 %v1240, %v1236
        %v1581 = vpack.c.b16 %v1241, %v1237
        %v1582 = vpack.c.b16 %v1242, %v1238
        %v1583 = vpack.c.b16 %v1243, %v1239
        %v1584 = vpack.c.b16 %v1248, %v1244
        %v1585 = vpack.c.b16 %v1249, %v1245
        %v1586 = vpack.c.b16 %v1250, %v1246
        %v1587 = vpack.c.b16 %v1251, %v1247
        %v1588 = vpack.c.b16 %v1256, %v1252
        %v1589 = vpack.c.b16 %v1257, %v1253
        %v1590 = vpack.c.b16 %v1258, %v1254
        %v1591 = vpack.c.b16 %v1259, %v1255
        %v1592 = vpack.c.b16 %v1264, %v1260
        %v1593 = vpack.c.b16 %v1265, %v1261
        %v1594 = vpack.c.b16 %v1266, %v1262
        %v1595 = vpack.c.b16 %v1267, %v1263
        %v1596 = vpack.c.b16 %v1272, %v1268
        %v1597 = vpack.c.b16 %v1273, %v1269
        %v1598 = vpack.c.b16 %v1274, %v1270
        %v1599 = vpack.c.b16 %v1275, %v1271
        %v1600 = vpack.c.b16 %v1280, %v1276
        %v1601 = vpack.c.b16 %v1281, %v1277
        %v1602 = vpack.c.b16 %v1282, %v1278
        %v1603 = vpack.c.b16 %v1283, %v1279
        %v1604 = vpack.c.b16 %v1288, %v1284
        %v1605 = vpack.c.b16 %v1289, %v1285
        %v1606 = vpack.c.b16 %v1290, %v1286
        %v1607 = vpack.c.b16 %v1291, %v1287
        %v1608 = vpack.c.b16 %v1296, %v1292
        %v1609 = vpack.c.b16 %v1297, %v1293
        %v1610 = vpack.c.b16 %v1298, %v1294
        %v1611 = vpack.c.b16 %v1299, %v1295
        %v1612 = vpack.c.b16 %v1304, %v1300
        %v1613 = vpack.c.b16 %v1305, %v1301
        %v1614 = vpack.c.b16 %v1306, %v1302
        %v1615 = vpack.c.b16 %v1307, %v1303
        %v1616 = vpack.c.b16 %v1312, %v1308
        %v1617 = vpack.c.b16 %v1313, %v1309
        %v1618 = vpack.c.b16 %v1314, %v1310
        %v1619 = vpack.c.b16 %v1315, %v1311
        %v1620 = vpack.c.b16 %v1320, %v1316
        %v1621 = vpack.c.b16 %v1321, %v1317
        %v1622 = vpack.c.b16 %v1322, %v1318
        %v1623 = vpack.c.b16 %v1323, %v1319
        %v1624 = vpack.c.b16 %v1328, %v1324
        %v1625 = vpack.c.b16 %v1329, %v1325
        %v1626 = vpack.c.b16 %v1330, %v1326
        %v1627 = vpack.c.b16 %v1331, %v1327
        %v1628 = vpack.c.b16 %v1336, %v1332
        %v1629 = vpack.c.b16 %v1337, %v1333
        %v1630 = vpack.c.b16 %v1338, %v1334
        %v1631 = vpack.c.b16 %v1339, %v1335
        %v1632 = vpack.c.b16 %v1344, %v1340
        %v1633 = vpack.c.b16 %v1345, %v1341
        %v1634 = vpack.c.b16 %v1346, %v1342
        %v1635 = vpack.c.b16 %v1347, %v1343
        %v1636 = vpack.c.b16 %v1352, %v1348
        %v1637 = vpack.c.b16 %v1353, %v1349
        %v1638 = vpack.c.b16 %v1354, %v1350
        %v1639 = vpack.c.b16 %v1355, %v1351
        %v1640 = vpack.c.b16 %v1360, %v1356
        %v1641 = vpack.c.b16 %v1361, %v1357
        %v1642 = vpack.c.b16 %v1362, %v1358
        %v1643 = vpack.c.b16 %v1363, %v1359
        %v1644 = vpack.c.b16 %v1368, %v1364
        %v1645 = vpack.c.b16 %v1369, %v1365
        %v1646 = vpack.c.b16 %v1370, %v1366
        %v1647 = vpack.c.b16 %v1371, %v1367
        %v1648 = vpack.c.b16 %v1376, %v1372
        %v1649 = vpack.c.b16 %v1377, %v1373
        %v1650 = vpack.c.b16 %v1378, %v1374
        %v1651 = vpack.c.b16 %v1379, %v1375
        %v1652 = vpack.c.b16 %v1384, %v1380
        %v1653 = vpack.c.b16 %v1385, %v1381
        %v1654 = vpack.c.b16 %v1386, %v1382
        %v1655 = vpack.c.b16 %v1387, %v1383
        %v1656 = vpack.c.b16 %v1392, %v1388
        %v1657 = vpack.c.b16 %v1393, %v1389
        %v1658 = vpack.c.b16 %v1394, %v1390
        %v1659 = vpack.c.b16 %v1395, %v1391
        %v1660 = vpack.c.b16 %v1400, %v1396
        %v1661 = vpack.c.b16 %v1401, %v1397
        %v1662 = vpack.c.b16 %v1402, %v1398
        %v1663 = vpack.c.b16 %v1403, %v1399
        %v1664 = vpack.c.b16 %v1408, %v1404
        %v1665 = vpack.c.b16 %v1409, %v1405
        %v1666 = vpack.c.b16 %v1410, %v1406
        %v1667 = vpack.c.b16 %v1411, %v1407
        %v1668 = vpack.c.b16 %v1416, %v1412
        %v1669 = vpack.c.b16 %v1417, %v1413
        %v1670 = vpack.c.b16 %v1418, %v1414
        %v1671 = vpack.c.b16 %v1419, %v1415
        %v1672 = vpack.c.b16 %v1424, %v1420
        %v1673 = vpack.c.b16 %v1425, %v1421
        %v1674 = vpack.c.b16 %v1426, %v1422
        %v1675 = vpack.c.b16 %v1427, %v1423
        %v1676 = vpack.c.b16 %v1432, %v1428
        %v1677 = vpack.c.b16 %v1433, %v1429
        %v1678 = vpack.c.b16 %v1434, %v1430
        %v1679 = vpack.c.b16 %v1435, %v1431
        %v1680 = vpack.c.b16 %v1440, %v1436
        %v1681 = vpack.c.b16 %v1441, %v1437
        %v1682 = vpack.c.b16 %v1442, %v1438
        %v1683 = vpack.c.b16 %v1443, %v1439
        %v1684 = vpack.c.b16 %v1448, %v1444
        %v1685 = vpack.c.b16 %v1449, %v1445
        %v1686 = vpack.c.b16 %v1450, %v1446
        %v1687 = vpack.c.b16 %v1451, %v1447
        %v1688 = vpack.c.b16 %v1456, %v1452
        %v1689 = vpack.c.b16 %v1457, %v1453
        %v1690 = vpack.c.b16 %v1458, %v1454
        %v1691 = vpack.c.b16 %v1459, %v1455
        %v1692 = vpack.c.b16 %v1464, %v1460
        %v1693 = vpack.c.b16 %v1465, %v1461
        %v1694 = vpack.c.b16 %v1466, %v1462
        %v1695 = vpack.c.b16 %v1467, %v1463
        %v1696 = vpack.c.b16 %v1472, %v1468
        %v1697 = vpack.c.b16 %v1473, %v1469
        %v1698 = vpack.c.b16 %v1474, %v1470
        %v1699 = vpack.c.b16 %v1475, %v1471
        %v1700 = vpack.c.b16 %v1480, %v1476
        %v1701 = vpack.c.b16 %v1481, %v1477
        %v1702 = vpack.c.b16 %v1482, %v1478
        %v1703 = vpack.c.b16 %v1483, %v1479
        %v1704 = vpack.c.b16 %v1488, %v1484
        %v1705 = vpack.c.b16 %v1489, %v1485
        %v1706 = vpack.c.b16 %v1490, %v1486
        %v1707 = vpack.c.b16 %v1491, %v1487
        %v1708 = vpack.c.b16 %v1496, %v1492
        %v1709 = vpack.c.b16 %v1497, %v1493
        %v1710 = vpack.c.b16 %v1498, %v1494
        %v1711 = vpack.c.b16 %v1499, %v1495
        %v1712 = vpack.c.b16 %v1504, %v1500
        %v1713 = vpack.c.b16 %v1505, %v1501
        %v1714 = vpack.c.b16 %v1506, %v1502
        %v1715 = vpack.c.b16 %v1507, %v1503
        %v1716 = vpack.c.b16 %v1512, %v1508
        %v1717 = vpack.c.b16 %v1513, %v1509
        %v1718 = vpack.c.b16 %v1514, %v1510
        %v1719 = vpack.c.b16 %v1515, %v1511
        %v1720 = vpack.c.b16 %v1520, %v1516
        %v1721 = vpack.c.b16 %v1521, %v1517
        %v1722 = vpack.c.b16 %v1522, %v1518
        %v1723 = vpack.c.b16 %v1523, %v1519
        %v1724 = vpack.c.b16 %v1528, %v1524
        %v1725 = vpack.c.b16 %v1529, %v1525
        %v1726 = vpack.c.b16 %v1530, %v1526
        %v1727 = vpack.c.b16 %v1531, %v1527
        %v1728 = vpack.c.b16 %v1536, %v1532
        %v1729 = vpack.c.b16 %v1537, %v1533
        %v1730 = vpack.c.b16 %v1538, %v1534
        %v1731 = vpack.c.b16 %v1539, %v1535
        %1924 = vmatprep.subr.bf16.mxu0 %v1541
        %1925 = vmatpush1.bf16.msra.mxu0 %v1540
        %1926 = vmatprep.subr.bf16.mxu0 %v1545
        %1927 = vmatpush1.bf16.msra.mxu0 %v1544
        %1928 = vmatprep.subr.bf16.mxu0 %v1549
        %1929 = vmatpush1.bf16.msra.mxu0 %v1548
        %1930 = vmatprep.subr.bf16.mxu0 %v1553
        %1931 = vmatpush1.bf16.msra.mxu0 %v1552
        %1932 = vmatprep.subr.bf16.mxu0 %v1557
        %1933 = vmatpush1.bf16.msra.mxu0 %v1556
        %1934 = vmatprep.subr.bf16.mxu0 %v1561
        %1935 = vmatpush1.bf16.msra.mxu0 %v1560
        %1936 = vmatprep.subr.bf16.mxu0 %v1565
        %1937 = vmatpush1.bf16.msra.mxu0 %v1564
        %1938 = vmatprep.subr.bf16.mxu0 %v1569
        %1939 = vmatpush1.bf16.msra.mxu0 %v1568
        %1940 = vmatprep.subr.bf16.mxu0 %v1573
        %1941 = vmatpush1.bf16.msra.mxu0 %v1572
        %1942 = vmatprep.subr.bf16.mxu0 %v1577
        %1943 = vmatpush1.bf16.msra.mxu0 %v1576
        %1944 = vmatprep.subr.bf16.mxu0 %v1581
        %1945 = vmatpush1.bf16.msra.mxu0 %v1580
        %1946 = vmatprep.subr.bf16.mxu0 %v1585
        %1947 = vmatpush1.bf16.msra.mxu0 %v1584
        %1948 = vmatprep.subr.bf16.mxu0 %v1589
        %1949 = vmatpush1.bf16.msra.mxu0 %v1588
        %1950 = vmatprep.subr.bf16.mxu0 %v1593
        %1951 = vmatpush1.bf16.msra.mxu0 %v1592
        %1952 = vmatprep.subr.bf16.mxu0 %v1597
        %1953 = vmatpush1.bf16.msra.mxu0 %v1596
        %1954 = vmatprep.subr.bf16.mxu0 %v1601
        %1955 = vmatpush1.bf16.msra.mxu0 %v1600
        %1956 = vmatprep.mubr.bf16.mxu0 %v948
        %1957 = vmatmul.mubr.bf16.gmra.mrb[0].mxu0 %v934
        %v1958 = vpop.f32.mrb[0].mxu0
        %v1959 = vadd.f32 0.0, %v1958
        %v1960 = vpop.f32.mrb[0].mxu0
        %v1961 = vadd.f32 0.0, %v1960
        %v1962 = vpop.f32.mrb[0].mxu0
        %v1963 = vpop.f32.mrb[0].mxu0
        %1964 = vdwg.mxu0
        %1965 = vmatprep.subr.bf16.mxu0 %v1605
        %1966 = vmatpush1.bf16.msra.mxu0 %v1604
        %1967 = vmatprep.subr.bf16.mxu0 %v1609
        %1968 = vmatpush1.bf16.msra.mxu0 %v1608
        %1969 = vmatprep.subr.bf16.mxu0 %v1613
        %1970 = vmatpush1.bf16.msra.mxu0 %v1612
        %1971 = vmatprep.subr.bf16.mxu0 %v1617
        %1972 = vmatpush1.bf16.msra.mxu0 %v1616
        %1973 = vmatprep.subr.bf16.mxu0 %v1621
        %1974 = vmatpush1.bf16.msra.mxu0 %v1620
        %1975 = vmatprep.subr.bf16.mxu0 %v1625
        %1976 = vmatpush1.bf16.msra.mxu0 %v1624
        %1977 = vmatprep.subr.bf16.mxu0 %v1629
        %1978 = vmatpush1.bf16.msra.mxu0 %v1628
        %1979 = vmatprep.subr.bf16.mxu0 %v1633
        %1980 = vmatpush1.bf16.msra.mxu0 %v1632
        %1981 = vmatprep.subr.bf16.mxu0 %v1637
        %1982 = vmatpush1.bf16.msra.mxu0 %v1636
        %1983 = vmatprep.subr.bf16.mxu0 %v1641
        %1984 = vmatpush1.bf16.msra.mxu0 %v1640
        %1985 = vmatprep.subr.bf16.mxu0 %v1645
        %1986 = vmatpush1.bf16.msra.mxu0 %v1644
        %1987 = vmatprep.subr.bf16.mxu0 %v1649
        %1988 = vmatpush1.bf16.msra.mxu0 %v1648
        %1989 = vmatprep.subr.bf16.mxu0 %v1653
        %1990 = vmatpush1.bf16.msra.mxu0 %v1652
        %1991 = vmatprep.subr.bf16.mxu0 %v1657
        %1992 = vmatpush1.bf16.msra.mxu0 %v1656
        %1993 = vmatprep.subr.bf16.mxu0 %v1661
        %1994 = vmatpush1.bf16.msra.mxu0 %v1660
        %1995 = vmatprep.subr.bf16.mxu0 %v1665
        %1996 = vmatpush1.bf16.msra.mxu0 %v1664
        %1997 = vmatprep.mubr.bf16.mxu0 %v957
        %1998 = vmatmul.mubr.bf16.gmra.mrb[0].mxu0 %v956
        %v1999 = vpop.f32.mrb[0].mxu0
        %v2000 = vadd.f32 %v1959, %v1999
        %v2001 = vpop.f32.mrb[0].mxu0
        %v2002 = vadd.f32 %v1961, %v2001
        %v2003 = vpop.f32.mrb[0].mxu0
        %v2004 = vpop.f32.mrb[0].mxu0
        %2005 = vdwg.mxu0
        %2006 = vmatprep.subr.bf16.mxu0 %v1669
        %2007 = vmatpush1.bf16.msra.mxu0 %v1668
        %2008 = vmatprep.subr.bf16.mxu0 %v1673
        %2009 = vmatpush1.bf16.msra.mxu0 %v1672
        %2010 = vmatprep.subr.bf16.mxu0 %v1677
        %2011 = vmatpush1.bf16.msra.mxu0 %v1676
        %2012 = vmatprep.subr.bf16.mxu0 %v1681
        %2013 = vmatpush1.bf16.msra.mxu0 %v1680
        %2014 = vmatprep.subr.bf16.mxu0 %v1685
        %2015 = vmatpush1.bf16.msra.mxu0 %v1684
        %2016 = vmatprep.subr.bf16.mxu0 %v1689
        %2017 = vmatpush1.bf16.msra.mxu0 %v1688
        %2018 = vmatprep.subr.bf16.mxu0 %v1693
        %2019 = vmatpush1.bf16.msra.mxu0 %v1692
        %2020 = vmatprep.subr.bf16.mxu0 %v1697
        %2021 = vmatpush1.bf16.msra.mxu0 %v1696
        %2022 = vmatprep.subr.bf16.mxu0 %v1701
        %2023 = vmatpush1.bf16.msra.mxu0 %v1700
        %2024 = vmatprep.subr.bf16.mxu0 %v1705
        %2025 = vmatpush1.bf16.msra.mxu0 %v1704
        %2026 = vmatprep.subr.bf16.mxu0 %v1709
        %2027 = vmatpush1.bf16.msra.mxu0 %v1708
        %2028 = vmatprep.subr.bf16.mxu0 %v1713
        %2029 = vmatpush1.bf16.msra.mxu0 %v1712
        %2030 = vmatprep.subr.bf16.mxu0 %v1717
        %2031 = vmatpush1.bf16.msra.mxu0 %v1716
        %2032 = vmatprep.subr.bf16.mxu0 %v1721
        %2033 = vmatpush1.bf16.msra.mxu0 %v1720
        %2034 = vmatprep.subr.bf16.mxu0 %v1725
        %2035 = vmatpush1.bf16.msra.mxu0 %v1724
        %2036 = vmatprep.subr.bf16.mxu0 %v1729
        %2037 = vmatpush1.bf16.msra.mxu0 %v1728
        %2038 = vmatprep.mubr.bf16.mxu0 %v955
        %2039 = vmatmul.mubr.bf16.gmra.mrb[0].mxu0 %v941
        %v2040 = vpop.f32.mrb[0].mxu0
        %v2041 = vadd.f32 %v2000, %v2040
        %v2042 = vpop.f32.mrb[0].mxu0
        %v2043 = vadd.f32 %v2002, %v2042
        %v2044 = vpop.f32.mrb[0].mxu0
        %v2045 = vpop.f32.mrb[0].mxu0
        %2046 = vdwg.mxu0
        %2047 = vmatprep.subr.bf16.mxu0 %v1543
        %2048 = vmatpush1.bf16.msra.mxu0 %v1542
        %2049 = vmatprep.subr.bf16.mxu0 %v1547
        %2050 = vmatpush1.bf16.msra.mxu0 %v1546
        %2051 = vmatprep.subr.bf16.mxu0 %v1551
        %2052 = vmatpush1.bf16.msra.mxu0 %v1550
        %2053 = vmatprep.subr.bf16.mxu0 %v1555
        %2054 = vmatpush1.bf16.msra.mxu0 %v1554
        %2055 = vmatprep.subr.bf16.mxu0 %v1559
        %2056 = vmatpush1.bf16.msra.mxu0 %v1558
        %2057 = vmatprep.subr.bf16.mxu0 %v1563
        %2058 = vmatpush1.bf16.msra.mxu0 %v1562
        %2059 = vmatprep.subr.bf16.mxu0 %v1567
        %2060 = vmatpush1.bf16.msra.mxu0 %v1566
        %2061 = vmatprep.subr.bf16.mxu0 %v1571
        %2062 = vmatpush1.bf16.msra.mxu0 %v1570
        %2063 = vmatprep.subr.bf16.mxu0 %v1575
        %2064 = vmatpush1.bf16.msra.mxu0 %v1574
        %2065 = vmatprep.subr.bf16.mxu0 %v1579
        %2066 = vmatpush1.bf16.msra.mxu0 %v1578
        %2067 = vmatprep.subr.bf16.mxu0 %v1583
        %2068 = vmatpush1.bf16.msra.mxu0 %v1582
        %2069 = vmatprep.subr.bf16.mxu0 %v1587
        %2070 = vmatpush1.bf16.msra.mxu0 %v1586
        %2071 = vmatprep.subr.bf16.mxu0 %v1591
        %2072 = vmatpush1.bf16.msra.mxu0 %v1590
        %2073 = vmatprep.subr.bf16.mxu0 %v1595
        %2074 = vmatpush1.bf16.msra.mxu0 %v1594
        %2075 = vmatprep.subr.bf16.mxu0 %v1599
        %2076 = vmatpush1.bf16.msra.mxu0 %v1598
        %2077 = vmatprep.subr.bf16.mxu0 %v1603
        %2078 = vmatpush1.bf16.msra.mxu0 %v1602
        %2079 = vmatprep.mubr.bf16.mxu0 %v948
        %2080 = vmatmul.mubr.bf16.gmra.mrb[0].mxu0 %v934
        %v2081 = vpop.f32.mrb[0].mxu0
        %v2082 = vadd.f32 0.0, %v2081
        %v2083 = vpop.f32.mrb[0].mxu0
        %v2084 = vadd.f32 0.0, %v2083
        %v2085 = vpop.f32.mrb[0].mxu0
        %v2086 = vpop.f32.mrb[0].mxu0
        %2087 = vdwg.mxu0
        %2088 = vmatprep.subr.bf16.mxu0 %v1607
        %2089 = vmatpush1.bf16.msra.mxu0 %v1606
        %2090 = vmatprep.subr.bf16.mxu0 %v1611
        %2091 = vmatpush1.bf16.msra.mxu0 %v1610
        %2092 = vmatprep.subr.bf16.mxu0 %v1615
        %2093 = vmatpush1.bf16.msra.mxu0 %v1614
        %2094 = vmatprep.subr.bf16.mxu0 %v1619
        %2095 = vmatpush1.bf16.msra.mxu0 %v1618
        %2096 = vmatprep.subr.bf16.mxu0 %v1623
        %2097 = vmatpush1.bf16.msra.mxu0 %v1622
        %2098 = vmatprep.subr.bf16.mxu0 %v1627
        %2099 = vmatpush1.bf16.msra.mxu0 %v1626
        %2100 = vmatprep.subr.bf16.mxu0 %v1631
        %2101 = vmatpush1.bf16.msra.mxu0 %v1630
        %2102 = vmatprep.subr.bf16.mxu0 %v1635
        %2103 = vmatpush1.bf16.msra.mxu0 %v1634
        %2104 = vmatprep.subr.bf16.mxu0 %v1639
        %2105 = vmatpush1.bf16.msra.mxu0 %v1638
        %2106 = vmatprep.subr.bf16.mxu0 %v1643
        %2107 = vmatpush1.bf16.msra.mxu0 %v1642
        %2108 = vmatprep.subr.bf16.mxu0 %v1647
        %2109 = vmatpush1.bf16.msra.mxu0 %v1646
        %2110 = vmatprep.subr.bf16.mxu0 %v1651
        %2111 = vmatpush1.bf16.msra.mxu0 %v1650
        %2112 = vmatprep.subr.bf16.mxu0 %v1655
        %2113 = vmatpush1.bf16.msra.mxu0 %v1654
        %2114 = vmatprep.subr.bf16.mxu0 %v1659
        %2115 = vmatpush1.bf16.msra.mxu0 %v1658
        %2116 = vmatprep.subr.bf16.mxu0 %v1663
        %2117 = vmatpush1.bf16.msra.mxu0 %v1662
        %2118 = vmatprep.subr.bf16.mxu0 %v1667
        %2119 = vmatpush1.bf16.msra.mxu0 %v1666
        %2120 = vmatprep.mubr.bf16.mxu0 %v957
        %2121 = vmatmul.mubr.bf16.gmra.mrb[0].mxu0 %v956
        %v2122 = vpop.f32.mrb[0].mxu0
        %v2123 = vadd.f32 %v2082, %v2122
        %v2124 = vpop.f32.mrb[0].mxu0
        %v2125 = vadd.f32 %v2084, %v2124
        %v2126 = vpop.f32.mrb[0].mxu0
        %v2127 = vpop.f32.mrb[0].mxu0
        %2128 = vdwg.mxu0
        %2129 = vmatprep.subr.bf16.mxu0 %v1671
        %2130 = vmatpush1.bf16.msra.mxu0 %v1670
        %2131 = vmatprep.subr.bf16.mxu0 %v1675
        %2132 = vmatpush1.bf16.msra.mxu0 %v1674
        %2133 = vmatprep.subr.bf16.mxu0 %v1679
        %2134 = vmatpush1.bf16.msra.mxu0 %v1678
        %2135 = vmatprep.subr.bf16.mxu0 %v1683
        %2136 = vmatpush1.bf16.msra.mxu0 %v1682
        %2137 = vmatprep.subr.bf16.mxu0 %v1687
        %2138 = vmatpush1.bf16.msra.mxu0 %v1686
        %2139 = vmatprep.subr.bf16.mxu0 %v1691
        %2140 = vmatpush1.bf16.msra.mxu0 %v1690
        %2141 = vmatprep.subr.bf16.mxu0 %v1695
        %2142 = vmatpush1.bf16.msra.mxu0 %v1694
        %2143 = vmatprep.subr.bf16.mxu0 %v1699
        %2144 = vmatpush1.bf16.msra.mxu0 %v1698
        %2145 = vmatprep.subr.bf16.mxu0 %v1703
        %2146 = vmatpush1.bf16.msra.mxu0 %v1702
        %2147 = vmatprep.subr.bf16.mxu0 %v1707
        %2148 = vmatpush1.bf16.msra.mxu0 %v1706
        %2149 = vmatprep.subr.bf16.mxu0 %v1711
        %2150 = vmatpush1.bf16.msra.mxu0 %v1710
        %2151 = vmatprep.subr.bf16.mxu0 %v1715
        %2152 = vmatpush1.bf16.msra.mxu0 %v1714
        %2153 = vmatprep.subr.bf16.mxu0 %v1719
        %2154 = vmatpush1.bf16.msra.mxu0 %v1718
        %2155 = vmatprep.subr.bf16.mxu0 %v1723
        %2156 = vmatpush1.bf16.msra.mxu0 %v1722
        %2157 = vmatprep.subr.bf16.mxu0 %v1727
        %2158 = vmatpush1.bf16.msra.mxu0 %v1726
        %2159 = vmatprep.subr.bf16.mxu0 %v1731
        %2160 = vmatpush1.bf16.msra.mxu0 %v1730
        %2161 = vmatprep.mubr.bf16.mxu0 %v955
        %2162 = vmatmul.mubr.bf16.gmra.mrb[0].mxu0 %v941
        %v2163 = vpop.f32.mrb[0].mxu0
        %v2164 = vadd.f32 %v2123, %v2163
        %v2165 = vpop.f32.mrb[0].mxu0
        %v2166 = vadd.f32 %v2125, %v2165
        %v2167 = vpop.f32.mrb[0].mxu0
        %v2168 = vpop.f32.mrb[0].mxu0
        %2169 = vdwg.mxu0
        %v2171 = vcombine.high %v332, %v332
        %v2173 = vunpack.c.l.s4 1966171168
        %v2174 = vunpack.c.0.s8 %v2173
        %v2175 = vlaneseq
        %v2176 = vshrl.u32 %v2175, 7
        %v2177 = vsub.s32 %v2174, %v2176
        %v2178 = vrot.slane %v332, %v2177
        %v2180 = vunpack.c.l.s4 1966171168
        %v2181 = vunpack.c.0.s8 %v2180
        %v2182 = vlaneseq
        %v2183 = vshrl.u32 %v2182, 7
        %v2184 = vsub.s32 %v2181, %v2183
        %v2185 = vrot.slane %v2171, %v2184
        %v2186 = vcombine.high %v2178, %v2178
        %v2187 = vcombine.high %v2185, %v2185
        %v2189 = vunpack.c.l.s4 1966171168
        %v2190 = vunpack.c.0.s8 %v2189
        %v2191 = vlaneseq
        %v2192 = vshrl.u32 %v2191, 7
        %v2193 = vsub.s32 %v2190, %v2192
        %v2194 = vrot.slane %v2178, %v2193
        %v2196 = vunpack.c.l.s4 1966171168
        %v2197 = vunpack.c.0.s8 %v2196
        %v2198 = vlaneseq
        %v2199 = vshrl.u32 %v2198, 7
        %v2200 = vsub.s32 %v2197, %v2199
        %v2201 = vrot.slane %v2185, %v2200
        %v2203 = vunpack.c.l.s4 1966171168
        %v2204 = vunpack.c.0.s8 %v2203
        %v2205 = vlaneseq
        %v2206 = vshrl.u32 %v2205, 7
        %v2207 = vsub.s32 %v2204, %v2206
        %v2208 = vrot.slane %v2186, %v2207
        %v2210 = vunpack.c.l.s4 1966171168
        %v2211 = vunpack.c.0.s8 %v2210
        %v2212 = vlaneseq
        %v2213 = vshrl.u32 %v2212, 7
        %v2214 = vsub.s32 %v2211, %v2213
        %v2215 = vrot.slane %v2187, %v2214
        %v2216 = vcombine.high %v2194, %v2194
        %v2217 = vcombine.high %v2208, %v2208
        %v2416 = vunpack.c.l.b16 %v526
        %v2417 = vunpack.c.h.b16 %v526
        %v2418 = vunpack.c.l.b16 %v527
        %v2419 = vunpack.c.h.b16 %v527
        %v2420 = vunpack.c.l.b16 %v528
        %v2421 = vunpack.c.h.b16 %v528
        %v2422 = vunpack.c.l.b16 %v529
        %v2423 = vunpack.c.h.b16 %v529
        %v2424 = vunpack.c.l.b16 %v530
        %v2425 = vunpack.c.h.b16 %v530
        %v2426 = vunpack.c.l.b16 %v531
        %v2427 = vunpack.c.h.b16 %v531
        %v2428 = vunpack.c.l.b16 %v532
        %v2429 = vunpack.c.h.b16 %v532
        %v2430 = vunpack.c.l.b16 %v533
        %v2431 = vunpack.c.h.b16 %v533
        %v2432 = vunpack.c.l.b16 %v534
        %v2433 = vunpack.c.h.b16 %v534
        %v2434 = vunpack.c.l.b16 %v535
        %v2435 = vunpack.c.h.b16 %v535
        %v2436 = vunpack.c.l.b16 %v536
        %v2437 = vunpack.c.h.b16 %v536
        %v2438 = vunpack.c.l.b16 %v537
        %v2439 = vunpack.c.h.b16 %v537
        %v2440 = vunpack.c.l.b16 %v538
        %v2441 = vunpack.c.h.b16 %v538
        %v2442 = vunpack.c.l.b16 %v539
        %v2443 = vunpack.c.h.b16 %v539
        %v2444 = vunpack.c.l.b16 %v540
        %v2445 = vunpack.c.h.b16 %v540
        %v2446 = vunpack.c.l.b16 %v541
        %v2447 = vunpack.c.h.b16 %v541
        %v2448 = vunpack.c.l.b16 %v542
        %v2449 = vunpack.c.h.b16 %v542
        %v2450 = vunpack.c.l.b16 %v543
        %v2451 = vunpack.c.h.b16 %v543
        %v2452 = vunpack.c.l.b16 %v544
        %v2453 = vunpack.c.h.b16 %v544
        %v2454 = vunpack.c.l.b16 %v545
        %v2455 = vunpack.c.h.b16 %v545
        %v2456 = vunpack.c.l.b16 %v546
        %v2457 = vunpack.c.h.b16 %v546
        %v2458 = vunpack.c.l.b16 %v547
        %v2459 = vunpack.c.h.b16 %v547
        %v2460 = vunpack.c.l.b16 %v548
        %v2461 = vunpack.c.h.b16 %v548
        %v2462 = vunpack.c.l.b16 %v549
        %v2463 = vunpack.c.h.b16 %v549
        %v2464 = vunpack.c.l.b16 %v550
        %v2465 = vunpack.c.h.b16 %v550
        %v2466 = vunpack.c.l.b16 %v551
        %v2467 = vunpack.c.h.b16 %v551
        %v2468 = vunpack.c.l.b16 %v552
        %v2469 = vunpack.c.h.b16 %v552
        %v2470 = vunpack.c.l.b16 %v553
        %v2471 = vunpack.c.h.b16 %v553
        %v2472 = vunpack.c.l.b16 %v554
        %v2473 = vunpack.c.h.b16 %v554
        %v2474 = vunpack.c.l.b16 %v555
        %v2475 = vunpack.c.h.b16 %v555
        %v2476 = vunpack.c.l.b16 %v556
        %v2477 = vunpack.c.h.b16 %v556
        %v2478 = vunpack.c.l.b16 %v557
        %v2479 = vunpack.c.h.b16 %v557
        %v2480 = vunpack.c.l.b16 %v558
        %v2481 = vunpack.c.h.b16 %v558
        %v2482 = vunpack.c.l.b16 %v559
        %v2483 = vunpack.c.h.b16 %v559
        %v2484 = vunpack.c.l.b16 %v560
        %v2485 = vunpack.c.h.b16 %v560
        %v2486 = vunpack.c.l.b16 %v561
        %v2487 = vunpack.c.h.b16 %v561
        %v2488 = vunpack.c.l.b16 %v562
        %v2489 = vunpack.c.h.b16 %v562
        %v2490 = vunpack.c.l.b16 %v563
        %v2491 = vunpack.c.h.b16 %v563
        %v2492 = vunpack.c.l.b16 %v564
        %v2493 = vunpack.c.h.b16 %v564
        %v2494 = vunpack.c.l.b16 %v565
        %v2495 = vunpack.c.h.b16 %v565
        %v2496 = vunpack.c.l.b16 %v566
        %v2497 = vunpack.c.h.b16 %v566
        %v2498 = vunpack.c.l.b16 %v567
        %v2499 = vunpack.c.h.b16 %v567
        %v2500 = vunpack.c.l.b16 %v568
        %v2501 = vunpack.c.h.b16 %v568
        %v2502 = vunpack.c.l.b16 %v569
        %v2503 = vunpack.c.h.b16 %v569
        %v2504 = vunpack.c.l.b16 %v570
        %v2505 = vunpack.c.h.b16 %v570
        %v2506 = vunpack.c.l.b16 %v571
        %v2507 = vunpack.c.h.b16 %v571
        %v2508 = vunpack.c.l.b16 %v572
        %v2509 = vunpack.c.h.b16 %v572
        %v2510 = vunpack.c.l.b16 %v573
        %v2511 = vunpack.c.h.b16 %v573
        %v2512 = vunpack.c.l.b16 %v574
        %v2513 = vunpack.c.h.b16 %v574
        %v2514 = vunpack.c.l.b16 %v575
        %v2515 = vunpack.c.h.b16 %v575
        %v2516 = vunpack.c.l.b16 %v576
        %v2517 = vunpack.c.h.b16 %v576
        %v2518 = vunpack.c.l.b16 %v577
        %v2519 = vunpack.c.h.b16 %v577
        %v2520 = vunpack.c.l.b16 %v578
        %v2521 = vunpack.c.h.b16 %v578
        %v2522 = vunpack.c.l.b16 %v579
        %v2523 = vunpack.c.h.b16 %v579
        %v2524 = vunpack.c.l.b16 %v580
        %v2525 = vunpack.c.h.b16 %v580
        %v2526 = vunpack.c.l.b16 %v581
        %v2527 = vunpack.c.h.b16 %v581
        %v2528 = vunpack.c.l.b16 %v582
        %v2529 = vunpack.c.h.b16 %v582
        %v2530 = vunpack.c.l.b16 %v583
        %v2531 = vunpack.c.h.b16 %v583
        %v2532 = vunpack.c.l.b16 %v584
        %v2533 = vunpack.c.h.b16 %v584
        %v2534 = vunpack.c.l.b16 %v585
        %v2535 = vunpack.c.h.b16 %v585
        %v2536 = vunpack.c.l.b16 %v586
        %v2537 = vunpack.c.h.b16 %v586
        %v2538 = vunpack.c.l.b16 %v587
        %v2539 = vunpack.c.h.b16 %v587
        %v2540 = vunpack.c.l.b16 %v588
        %v2541 = vunpack.c.h.b16 %v588
        %v2542 = vunpack.c.l.b16 %v589
        %v2543 = vunpack.c.h.b16 %v589
        %v2544 = vunpack.c.l.b16 %v590
        %v2545 = vunpack.c.h.b16 %v590
        %v2546 = vunpack.c.l.b16 %v591
        %v2547 = vunpack.c.h.b16 %v591
        %v2548 = vunpack.c.l.b16 %v592
        %v2549 = vunpack.c.h.b16 %v592
        %v2550 = vunpack.c.l.b16 %v593
        %v2551 = vunpack.c.h.b16 %v593
        %v2552 = vunpack.c.l.b16 %v594
        %v2553 = vunpack.c.h.b16 %v594
        %v2554 = vunpack.c.l.b16 %v595
        %v2555 = vunpack.c.h.b16 %v595
        %v2556 = vunpack.c.l.b16 %v596
        %v2557 = vunpack.c.h.b16 %v596
        %v2558 = vunpack.c.l.b16 %v597
        %v2559 = vunpack.c.h.b16 %v597
        %v2560 = vunpack.c.l.b16 %v598
        %v2561 = vunpack.c.h.b16 %v598
        %v2562 = vunpack.c.l.b16 %v599
        %v2563 = vunpack.c.h.b16 %v599
        %v2564 = vunpack.c.l.b16 %v600
        %v2565 = vunpack.c.h.b16 %v600
        %v2566 = vunpack.c.l.b16 %v601
        %v2567 = vunpack.c.h.b16 %v601
        %v2568 = vunpack.c.l.b16 %v602
        %v2569 = vunpack.c.h.b16 %v602
        %v2570 = vunpack.c.l.b16 %v603
        %v2571 = vunpack.c.h.b16 %v603
        %v2572 = vunpack.c.l.b16 %v604
        %v2573 = vunpack.c.h.b16 %v604
        %v2574 = vunpack.c.l.b16 %v605
        %v2575 = vunpack.c.h.b16 %v605
        %v2576 = vunpack.c.l.b16 %v606
        %v2577 = vunpack.c.h.b16 %v606
        %v2578 = vunpack.c.l.b16 %v607
        %v2579 = vunpack.c.h.b16 %v607
        %v2580 = vunpack.c.l.b16 %v608
        %v2581 = vunpack.c.h.b16 %v608
        %v2582 = vunpack.c.l.b16 %v609
        %v2583 = vunpack.c.h.b16 %v609
        %v2584 = vunpack.c.l.b16 %v610
        %v2585 = vunpack.c.h.b16 %v610
        %v2586 = vunpack.c.l.b16 %v611
        %v2587 = vunpack.c.h.b16 %v611
        %v2588 = vunpack.c.l.b16 %v612
        %v2589 = vunpack.c.h.b16 %v612
        %v2590 = vunpack.c.l.b16 %v613
        %v2591 = vunpack.c.h.b16 %v613
        %v2592 = vunpack.c.l.b16 %v614
        %v2593 = vunpack.c.h.b16 %v614
        %v2594 = vunpack.c.l.b16 %v615
        %v2595 = vunpack.c.h.b16 %v615
        %v2596 = vunpack.c.l.b16 %v616
        %v2597 = vunpack.c.h.b16 %v616
        %v2598 = vunpack.c.l.b16 %v617
        %v2599 = vunpack.c.h.b16 %v617
        %v2600 = vunpack.c.l.b16 %v618
        %v2601 = vunpack.c.h.b16 %v618
        %v2602 = vunpack.c.l.b16 %v619
        %v2603 = vunpack.c.h.b16 %v619
        %v2604 = vunpack.c.l.b16 %v620
        %v2605 = vunpack.c.h.b16 %v620
        %v2606 = vunpack.c.l.b16 %v621
        %v2607 = vunpack.c.h.b16 %v621
        %v2608 = vunpack.c.l.b16 %v622
        %v2609 = vunpack.c.h.b16 %v622
        %v2610 = vunpack.c.l.b16 %v623
        %v2611 = vunpack.c.h.b16 %v623
        %v2612 = vunpack.c.l.b16 %v624
        %v2613 = vunpack.c.h.b16 %v624
        %v2614 = vunpack.c.l.b16 %v625
        %v2615 = vunpack.c.h.b16 %v625
        %v2616 = vunpack.c.l.b16 %v626
        %v2617 = vunpack.c.h.b16 %v626
        %v2618 = vunpack.c.l.b16 %v627
        %v2619 = vunpack.c.h.b16 %v627
        %v2620 = vunpack.c.l.b16 %v628
        %v2621 = vunpack.c.h.b16 %v628
        %v2622 = vunpack.c.l.b16 %v629
        %v2623 = vunpack.c.h.b16 %v629
        %v2624 = vunpack.c.l.b16 %v630
        %v2625 = vunpack.c.h.b16 %v630
        %v2626 = vunpack.c.l.b16 %v631
        %v2627 = vunpack.c.h.b16 %v631
        %v2628 = vunpack.c.l.b16 %v632
        %v2629 = vunpack.c.h.b16 %v632
        %v2630 = vunpack.c.l.b16 %v633
        %v2631 = vunpack.c.h.b16 %v633
        %v2632 = vunpack.c.l.b16 %v634
        %v2633 = vunpack.c.h.b16 %v634
        %v2634 = vunpack.c.l.b16 %v635
        %v2635 = vunpack.c.h.b16 %v635
        %v2636 = vunpack.c.l.b16 %v636
        %v2637 = vunpack.c.h.b16 %v636
        %v2638 = vunpack.c.l.b16 %v637
        %v2639 = vunpack.c.h.b16 %v637
        %v2640 = vunpack.c.l.b16 %v638
        %v2641 = vunpack.c.h.b16 %v638
        %v2642 = vunpack.c.l.b16 %v639
        %v2643 = vunpack.c.h.b16 %v639
        %v2644 = vunpack.c.l.b16 %v640
        %v2645 = vunpack.c.h.b16 %v640
        %v2646 = vunpack.c.l.b16 %v641
        %v2647 = vunpack.c.h.b16 %v641
        %v2648 = vunpack.c.l.b16 %v642
        %v2649 = vunpack.c.h.b16 %v642
        %v2650 = vunpack.c.l.b16 %v643
        %v2651 = vunpack.c.h.b16 %v643
        %v2652 = vunpack.c.l.b16 %v644
        %v2653 = vunpack.c.h.b16 %v644
        %v2654 = vunpack.c.l.b16 %v645
        %v2655 = vunpack.c.h.b16 %v645
        %v2656 = vunpack.c.l.b16 %v646
        %v2657 = vunpack.c.h.b16 %v646
        %v2658 = vunpack.c.l.b16 %v647
        %v2659 = vunpack.c.h.b16 %v647
        %v2660 = vunpack.c.l.b16 %v648
        %v2661 = vunpack.c.h.b16 %v648
        %v2662 = vunpack.c.l.b16 %v649
        %v2663 = vunpack.c.h.b16 %v649
        %v2664 = vunpack.c.l.b16 %v650
        %v2665 = vunpack.c.h.b16 %v650
        %v2666 = vunpack.c.l.b16 %v651
        %v2667 = vunpack.c.h.b16 %v651
        %v2668 = vunpack.c.l.b16 %v652
        %v2669 = vunpack.c.h.b16 %v652
        %v2670 = vunpack.c.l.b16 %v653
        %v2671 = vunpack.c.h.b16 %v653
        %v2672 = vunpack.c.l.b16 %v654
        %v2673 = vunpack.c.h.b16 %v654
        %v2674 = vunpack.c.l.b16 %v655
        %v2675 = vunpack.c.h.b16 %v655
        %v2676 = vunpack.c.l.b16 %v656
        %v2677 = vunpack.c.h.b16 %v656
        %v2678 = vunpack.c.l.b16 %v657
        %v2679 = vunpack.c.h.b16 %v657
        %v2680 = vunpack.c.l.b16 %v658
        %v2681 = vunpack.c.h.b16 %v658
        %v2682 = vunpack.c.l.b16 %v659
        %v2683 = vunpack.c.h.b16 %v659
        %v2684 = vunpack.c.l.b16 %v660
        %v2685 = vunpack.c.h.b16 %v660
        %v2686 = vunpack.c.l.b16 %v661
        %v2687 = vunpack.c.h.b16 %v661
        %v2688 = vunpack.c.l.b16 %v662
        %v2689 = vunpack.c.h.b16 %v662
        %v2690 = vunpack.c.l.b16 %v663
        %v2691 = vunpack.c.h.b16 %v663
        %v2692 = vunpack.c.l.b16 %v664
        %v2693 = vunpack.c.h.b16 %v664
        %v2694 = vunpack.c.l.b16 %v665
        %v2695 = vunpack.c.h.b16 %v665
        %v2696 = vunpack.c.l.b16 %v666
        %v2697 = vunpack.c.h.b16 %v666
        %v2698 = vunpack.c.l.b16 %v667
        %v2699 = vunpack.c.h.b16 %v667
        %v2700 = vunpack.c.l.b16 %v668
        %v2701 = vunpack.c.h.b16 %v668
        %v2702 = vunpack.c.l.b16 %v669
        %v2703 = vunpack.c.h.b16 %v669
        %v2704 = vunpack.c.l.b16 %v670
        %v2705 = vunpack.c.h.b16 %v670
        %v2706 = vunpack.c.l.b16 %v671
        %v2707 = vunpack.c.h.b16 %v671
        %v2708 = vunpack.c.l.b16 %v672
        %v2709 = vunpack.c.h.b16 %v672
        %v2710 = vunpack.c.l.b16 %v673
        %v2711 = vunpack.c.h.b16 %v673
        %v2712 = vunpack.c.l.b16 %v674
        %v2713 = vunpack.c.h.b16 %v674
        %v2714 = vunpack.c.l.b16 %v675
        %v2715 = vunpack.c.h.b16 %v675
        %v2716 = vunpack.c.l.b16 %v676
        %v2717 = vunpack.c.h.b16 %v676
        %v2718 = vunpack.c.l.b16 %v677
        %v2719 = vunpack.c.h.b16 %v677
        %v2720 = vunpack.c.l.b16 %v678
        %v2721 = vunpack.c.h.b16 %v678
        %v2722 = vunpack.c.l.b16 %v679
        %v2723 = vunpack.c.h.b16 %v679
        %v2724 = vunpack.c.l.b16 %v680
        %v2725 = vunpack.c.h.b16 %v680
        %v2726 = vunpack.c.l.b16 %v681
        %v2727 = vunpack.c.h.b16 %v681
        %v2728 = vunpack.c.l.b16 %v682
        %v2729 = vunpack.c.h.b16 %v682
        %v2730 = vunpack.c.l.b16 %v683
        %v2731 = vunpack.c.h.b16 %v683
        %v2732 = vunpack.c.l.b16 %v684
        %v2733 = vunpack.c.h.b16 %v684
        %v2734 = vunpack.c.l.b16 %v685
        %v2735 = vunpack.c.h.b16 %v685
        %v2736 = vunpack.c.l.b16 %v686
        %v2737 = vunpack.c.h.b16 %v686
        %v2738 = vunpack.c.l.b16 %v687
        %v2739 = vunpack.c.h.b16 %v687
        %v2740 = vunpack.c.l.b16 %v688
        %v2741 = vunpack.c.h.b16 %v688
        %v2742 = vunpack.c.l.b16 %v689
        %v2743 = vunpack.c.h.b16 %v689
        %v2744 = vunpack.c.l.b16 %v690
        %v2745 = vunpack.c.h.b16 %v690
        %v2746 = vunpack.c.l.b16 %v691
        %v2747 = vunpack.c.h.b16 %v691
        %v2748 = vunpack.c.l.b16 %v692
        %v2749 = vunpack.c.h.b16 %v692
        %v2750 = vunpack.c.l.b16 %v693
        %v2751 = vunpack.c.h.b16 %v693
        %v2752 = vunpack.c.l.b16 %v694
        %v2753 = vunpack.c.h.b16 %v694
        %v2754 = vunpack.c.l.b16 %v695
        %v2755 = vunpack.c.h.b16 %v695
        %v2756 = vunpack.c.l.b16 %v696
        %v2757 = vunpack.c.h.b16 %v696
        %v2758 = vunpack.c.l.b16 %v697
        %v2759 = vunpack.c.h.b16 %v697
        %v2760 = vunpack.c.l.b16 %v698
        %v2761 = vunpack.c.h.b16 %v698
        %v2762 = vunpack.c.l.b16 %v699
        %v2763 = vunpack.c.h.b16 %v699
        %v2764 = vunpack.c.l.b16 %v700
        %v2765 = vunpack.c.h.b16 %v700
        %v2766 = vunpack.c.l.b16 %v701
        %v2767 = vunpack.c.h.b16 %v701
        %v2768 = vunpack.c.l.b16 %v702
        %v2769 = vunpack.c.h.b16 %v702
        %v2770 = vunpack.c.l.b16 %v703
        %v2771 = vunpack.c.h.b16 %v703
        %v2772 = vunpack.c.l.b16 %v704
        %v2773 = vunpack.c.h.b16 %v704
        %v2774 = vunpack.c.l.b16 %v705
        %v2775 = vunpack.c.h.b16 %v705
        %v2776 = vunpack.c.l.b16 %v706
        %v2777 = vunpack.c.h.b16 %v706
        %v2778 = vunpack.c.l.b16 %v707
        %v2779 = vunpack.c.h.b16 %v707
        %v2780 = vunpack.c.l.b16 %v708
        %v2781 = vunpack.c.h.b16 %v708
        %v2782 = vunpack.c.l.b16 %v709
        %v2783 = vunpack.c.h.b16 %v709
        %v2784 = vunpack.c.l.b16 %v710
        %v2785 = vunpack.c.h.b16 %v710
        %v2786 = vunpack.c.l.b16 %v711
        %v2787 = vunpack.c.h.b16 %v711
        %v2788 = vunpack.c.l.b16 %v712
        %v2789 = vunpack.c.h.b16 %v712
        %v2790 = vunpack.c.l.b16 %v713
        %v2791 = vunpack.c.h.b16 %v713
        %v2792 = vunpack.c.l.b16 %v714
        %v2793 = vunpack.c.h.b16 %v714
        %v2794 = vunpack.c.l.b16 %v715
        %v2795 = vunpack.c.h.b16 %v715
        %v2796 = vunpack.c.l.b16 %v716
        %v2797 = vunpack.c.h.b16 %v716
        %v2798 = vunpack.c.l.b16 %v717
        %v2799 = vunpack.c.h.b16 %v717
        %v2800 = vpack.c.b16 %v2420, %v2416
        %v2801 = vpack.c.b16 %v2421, %v2417
        %v2802 = vpack.c.b16 %v2422, %v2418
        %v2803 = vpack.c.b16 %v2423, %v2419
        %v2804 = vpack.c.b16 %v2428, %v2424
        %v2805 = vpack.c.b16 %v2429, %v2425
        %v2806 = vpack.c.b16 %v2430, %v2426
        %v2807 = vpack.c.b16 %v2431, %v2427
        %v2808 = vpack.c.b16 %v2436, %v2432
        %v2809 = vpack.c.b16 %v2437, %v2433
        %v2810 = vpack.c.b16 %v2438, %v2434
        %v2811 = vpack.c.b16 %v2439, %v2435
        %v2812 = vpack.c.b16 %v2444, %v2440
        %v2813 = vpack.c.b16 %v2445, %v2441
        %v2814 = vpack.c.b16 %v2446, %v2442
        %v2815 = vpack.c.b16 %v2447, %v2443
        %v2816 = vpack.c.b16 %v2452, %v2448
        %v2817 = vpack.c.b16 %v2453, %v2449
        %v2818 = vpack.c.b16 %v2454, %v2450
        %v2819 = vpack.c.b16 %v2455, %v2451
        %v2820 = vpack.c.b16 %v2460, %v2456
        %v2821 = vpack.c.b16 %v2461, %v2457
        %v2822 = vpack.c.b16 %v2462, %v2458
        %v2823 = vpack.c.b16 %v2463, %v2459
        %v2824 = vpack.c.b16 %v2468, %v2464
        %v2825 = vpack.c.b16 %v2469, %v2465
        %v2826 = vpack.c.b16 %v2470, %v2466
        %v2827 = vpack.c.b16 %v2471, %v2467
        %v2828 = vpack.c.b16 %v2476, %v2472
        %v2829 = vpack.c.b16 %v2477, %v2473
        %v2830 = vpack.c.b16 %v2478, %v2474
        %v2831 = vpack.c.b16 %v2479, %v2475
        %v2832 = vpack.c.b16 %v2484, %v2480
        %v2833 = vpack.c.b16 %v2485, %v2481
        %v2834 = vpack.c.b16 %v2486, %v2482
        %v2835 = vpack.c.b16 %v2487, %v2483
        %v2836 = vpack.c.b16 %v2492, %v2488
        %v2837 = vpack.c.b16 %v2493, %v2489
        %v2838 = vpack.c.b16 %v2494, %v2490
        %v2839 = vpack.c.b16 %v2495, %v2491
        %v2840 = vpack.c.b16 %v2500, %v2496
        %v2841 = vpack.c.b16 %v2501, %v2497
        %v2842 = vpack.c.b16 %v2502, %v2498
        %v2843 = vpack.c.b16 %v2503, %v2499
        %v2844 = vpack.c.b16 %v2508, %v2504
        %v2845 = vpack.c.b16 %v2509, %v2505
        %v2846 = vpack.c.b16 %v2510, %v2506
        %v2847 = vpack.c.b16 %v2511, %v2507
        %v2848 = vpack.c.b16 %v2516, %v2512
        %v2849 = vpack.c.b16 %v2517, %v2513
        %v2850 = vpack.c.b16 %v2518, %v2514
        %v2851 = vpack.c.b16 %v2519, %v2515
        %v2852 = vpack.c.b16 %v2524, %v2520
        %v2853 = vpack.c.b16 %v2525, %v2521
        %v2854 = vpack.c.b16 %v2526, %v2522
        %v2855 = vpack.c.b16 %v2527, %v2523
        %v2856 = vpack.c.b16 %v2532, %v2528
        %v2857 = vpack.c.b16 %v2533, %v2529
        %v2858 = vpack.c.b16 %v2534, %v2530
        %v2859 = vpack.c.b16 %v2535, %v2531
        %v2860 = vpack.c.b16 %v2540, %v2536
        %v2861 = vpack.c.b16 %v2541, %v2537
        %v2862 = vpack.c.b16 %v2542, %v2538
        %v2863 = vpack.c.b16 %v2543, %v2539
        %v2864 = vpack.c.b16 %v2548, %v2544
        %v2865 = vpack.c.b16 %v2549, %v2545
        %v2866 = vpack.c.b16 %v2550, %v2546
        %v2867 = vpack.c.b16 %v2551, %v2547
        %v2868 = vpack.c.b16 %v2556, %v2552
        %v2869 = vpack.c.b16 %v2557, %v2553
        %v2870 = vpack.c.b16 %v2558, %v2554
        %v2871 = vpack.c.b16 %v2559, %v2555
        %v2872 = vpack.c.b16 %v2564, %v2560
        %v2873 = vpack.c.b16 %v2565, %v2561
        %v2874 = vpack.c.b16 %v2566, %v2562
        %v2875 = vpack.c.b16 %v2567, %v2563
        %v2876 = vpack.c.b16 %v2572, %v2568
        %v2877 = vpack.c.b16 %v2573, %v2569
        %v2878 = vpack.c.b16 %v2574, %v2570
        %v2879 = vpack.c.b16 %v2575, %v2571
        %v2880 = vpack.c.b16 %v2580, %v2576
        %v2881 = vpack.c.b16 %v2581, %v2577
        %v2882 = vpack.c.b16 %v2582, %v2578
        %v2883 = vpack.c.b16 %v2583, %v2579
        %v2884 = vpack.c.b16 %v2588, %v2584
        %v2885 = vpack.c.b16 %v2589, %v2585
        %v2886 = vpack.c.b16 %v2590, %v2586
        %v2887 = vpack.c.b16 %v2591, %v2587
        %v2888 = vpack.c.b16 %v2596, %v2592
        %v2889 = vpack.c.b16 %v2597, %v2593
        %v2890 = vpack.c.b16 %v2598, %v2594
        %v2891 = vpack.c.b16 %v2599, %v2595
        %v2892 = vpack.c.b16 %v2604, %v2600
        %v2893 = vpack.c.b16 %v2605, %v2601
        %v2894 = vpack.c.b16 %v2606, %v2602
        %v2895 = vpack.c.b16 %v2607, %v2603
        %v2896 = vpack.c.b16 %v2612, %v2608
        %v2897 = vpack.c.b16 %v2613, %v2609
        %v2898 = vpack.c.b16 %v2614, %v2610
        %v2899 = vpack.c.b16 %v2615, %v2611
        %v2900 = vpack.c.b16 %v2620, %v2616
        %v2901 = vpack.c.b16 %v2621, %v2617
        %v2902 = vpack.c.b16 %v2622, %v2618
        %v2903 = vpack.c.b16 %v2623, %v2619
        %v2904 = vpack.c.b16 %v2628, %v2624
        %v2905 = vpack.c.b16 %v2629, %v2625
        %v2906 = vpack.c.b16 %v2630, %v2626
        %v2907 = vpack.c.b16 %v2631, %v2627
        %v2908 = vpack.c.b16 %v2636, %v2632
        %v2909 = vpack.c.b16 %v2637, %v2633
        %v2910 = vpack.c.b16 %v2638, %v2634
        %v2911 = vpack.c.b16 %v2639, %v2635
        %v2912 = vpack.c.b16 %v2644, %v2640
        %v2913 = vpack.c.b16 %v2645, %v2641
        %v2914 = vpack.c.b16 %v2646, %v2642
        %v2915 = vpack.c.b16 %v2647, %v2643
        %v2916 = vpack.c.b16 %v2652, %v2648
        %v2917 = vpack.c.b16 %v2653, %v2649
        %v2918 = vpack.c.b16 %v2654, %v2650
        %v2919 = vpack.c.b16 %v2655, %v2651
        %v2920 = vpack.c.b16 %v2660, %v2656
        %v2921 = vpack.c.b16 %v2661, %v2657
        %v2922 = vpack.c.b16 %v2662, %v2658
        %v2923 = vpack.c.b16 %v2663, %v2659
        %v2924 = vpack.c.b16 %v2668, %v2664
        %v2925 = vpack.c.b16 %v2669, %v2665
        %v2926 = vpack.c.b16 %v2670, %v2666
        %v2927 = vpack.c.b16 %v2671, %v2667
        %v2928 = vpack.c.b16 %v2676, %v2672
        %v2929 = vpack.c.b16 %v2677, %v2673
        %v2930 = vpack.c.b16 %v2678, %v2674
        %v2931 = vpack.c.b16 %v2679, %v2675
        %v2932 = vpack.c.b16 %v2684, %v2680
        %v2933 = vpack.c.b16 %v2685, %v2681
        %v2934 = vpack.c.b16 %v2686, %v2682
        %v2935 = vpack.c.b16 %v2687, %v2683
        %v2936 = vpack.c.b16 %v2692, %v2688
        %v2937 = vpack.c.b16 %v2693, %v2689
        %v2938 = vpack.c.b16 %v2694, %v2690
        %v2939 = vpack.c.b16 %v2695, %v2691
        %v2940 = vpack.c.b16 %v2700, %v2696
        %v2941 = vpack.c.b16 %v2701, %v2697
        %v2942 = vpack.c.b16 %v2702, %v2698
        %v2943 = vpack.c.b16 %v2703, %v2699
        %v2944 = vpack.c.b16 %v2708, %v2704
        %v2945 = vpack.c.b16 %v2709, %v2705
        %v2946 = vpack.c.b16 %v2710, %v2706
        %v2947 = vpack.c.b16 %v2711, %v2707
        %v2948 = vpack.c.b16 %v2716, %v2712
        %v2949 = vpack.c.b16 %v2717, %v2713
        %v2950 = vpack.c.b16 %v2718, %v2714
        %v2951 = vpack.c.b16 %v2719, %v2715
        %v2952 = vpack.c.b16 %v2724, %v2720
        %v2953 = vpack.c.b16 %v2725, %v2721
        %v2954 = vpack.c.b16 %v2726, %v2722
        %v2955 = vpack.c.b16 %v2727, %v2723
        %v2956 = vpack.c.b16 %v2732, %v2728
        %v2957 = vpack.c.b16 %v2733, %v2729
        %v2958 = vpack.c.b16 %v2734, %v2730
        %v2959 = vpack.c.b16 %v2735, %v2731
        %v2960 = vpack.c.b16 %v2740, %v2736
        %v2961 = vpack.c.b16 %v2741, %v2737
        %v2962 = vpack.c.b16 %v2742, %v2738
        %v2963 = vpack.c.b16 %v2743, %v2739
        %v2964 = vpack.c.b16 %v2748, %v2744
        %v2965 = vpack.c.b16 %v2749, %v2745
        %v2966 = vpack.c.b16 %v2750, %v2746
        %v2967 = vpack.c.b16 %v2751, %v2747
        %v2968 = vpack.c.b16 %v2756, %v2752
        %v2969 = vpack.c.b16 %v2757, %v2753
        %v2970 = vpack.c.b16 %v2758, %v2754
        %v2971 = vpack.c.b16 %v2759, %v2755
        %v2972 = vpack.c.b16 %v2764, %v2760
        %v2973 = vpack.c.b16 %v2765, %v2761
        %v2974 = vpack.c.b16 %v2766, %v2762
        %v2975 = vpack.c.b16 %v2767, %v2763
        %v2976 = vpack.c.b16 %v2772, %v2768
        %v2977 = vpack.c.b16 %v2773, %v2769
        %v2978 = vpack.c.b16 %v2774, %v2770
        %v2979 = vpack.c.b16 %v2775, %v2771
        %v2980 = vpack.c.b16 %v2780, %v2776
        %v2981 = vpack.c.b16 %v2781, %v2777
        %v2982 = vpack.c.b16 %v2782, %v2778
        %v2983 = vpack.c.b16 %v2783, %v2779
        %v2984 = vpack.c.b16 %v2788, %v2784
        %v2985 = vpack.c.b16 %v2789, %v2785
        %v2986 = vpack.c.b16 %v2790, %v2786
        %v2987 = vpack.c.b16 %v2791, %v2787
        %v2988 = vpack.c.b16 %v2796, %v2792
        %v2989 = vpack.c.b16 %v2797, %v2793
        %v2990 = vpack.c.b16 %v2798, %v2794
        %v2991 = vpack.c.b16 %v2799, %v2795
        %3184 = vmatprep.subr.bf16.mxu0 %v2801
        %3185 = vmatpush1.bf16.msra.mxu0 %v2800
        %3186 = vmatprep.subr.bf16.mxu0 %v2805
        %3187 = vmatpush1.bf16.msra.mxu0 %v2804
        %3188 = vmatprep.subr.bf16.mxu0 %v2809
        %3189 = vmatpush1.bf16.msra.mxu0 %v2808
        %3190 = vmatprep.subr.bf16.mxu0 %v2813
        %3191 = vmatpush1.bf16.msra.mxu0 %v2812
        %3192 = vmatprep.subr.bf16.mxu0 %v2817
        %3193 = vmatpush1.bf16.msra.mxu0 %v2816
        %3194 = vmatprep.subr.bf16.mxu0 %v2821
        %3195 = vmatpush1.bf16.msra.mxu0 %v2820
        %3196 = vmatprep.subr.bf16.mxu0 %v2825
        %3197 = vmatpush1.bf16.msra.mxu0 %v2824
        %3198 = vmatprep.subr.bf16.mxu0 %v2829
        %3199 = vmatpush1.bf16.msra.mxu0 %v2828
        %3200 = vmatprep.subr.bf16.mxu0 %v2833
        %3201 = vmatpush1.bf16.msra.mxu0 %v2832
        %3202 = vmatprep.subr.bf16.mxu0 %v2837
        %3203 = vmatpush1.bf16.msra.mxu0 %v2836
        %3204 = vmatprep.subr.bf16.mxu0 %v2841
        %3205 = vmatpush1.bf16.msra.mxu0 %v2840
        %3206 = vmatprep.subr.bf16.mxu0 %v2845
        %3207 = vmatpush1.bf16.msra.mxu0 %v2844
        %3208 = vmatprep.subr.bf16.mxu0 %v2849
        %3209 = vmatpush1.bf16.msra.mxu0 %v2848
        %3210 = vmatprep.subr.bf16.mxu0 %v2853
        %3211 = vmatpush1.bf16.msra.mxu0 %v2852
        %3212 = vmatprep.subr.bf16.mxu0 %v2857
        %3213 = vmatpush1.bf16.msra.mxu0 %v2856
        %3214 = vmatprep.subr.bf16.mxu0 %v2861
        %3215 = vmatpush1.bf16.msra.mxu0 %v2860
        %3216 = vmatprep.mubr.bf16.mxu0 %v2208
        %3217 = vmatmul.mubr.bf16.gmra.mrb[0].mxu0 %v2194
        %v3218 = vpop.f32.mrb[0].mxu0
        %v3219 = vadd.f32 0.0, %v3218
        %v3220 = vpop.f32.mrb[0].mxu0
        %v3221 = vadd.f32 0.0, %v3220
        %v3222 = vpop.f32.mrb[0].mxu0
        %v3223 = vpop.f32.mrb[0].mxu0
        %3224 = vdwg.mxu0
        %3225 = vmatprep.subr.bf16.mxu0 %v2865
        %3226 = vmatpush1.bf16.msra.mxu0 %v2864
        %3227 = vmatprep.subr.bf16.mxu0 %v2869
        %3228 = vmatpush1.bf16.msra.mxu0 %v2868
        %3229 = vmatprep.subr.bf16.mxu0 %v2873
        %3230 = vmatpush1.bf16.msra.mxu0 %v2872
        %3231 = vmatprep.subr.bf16.mxu0 %v2877
        %3232 = vmatpush1.bf16.msra.mxu0 %v2876
        %3233 = vmatprep.subr.bf16.mxu0 %v2881
        %3234 = vmatpush1.bf16.msra.mxu0 %v2880
        %3235 = vmatprep.subr.bf16.mxu0 %v2885
        %3236 = vmatpush1.bf16.msra.mxu0 %v2884
        %3237 = vmatprep.subr.bf16.mxu0 %v2889
        %3238 = vmatpush1.bf16.msra.mxu0 %v2888
        %3239 = vmatprep.subr.bf16.mxu0 %v2893
        %3240 = vmatpush1.bf16.msra.mxu0 %v2892
        %3241 = vmatprep.subr.bf16.mxu0 %v2897
        %3242 = vmatpush1.bf16.msra.mxu0 %v2896
        %3243 = vmatprep.subr.bf16.mxu0 %v2901
        %3244 = vmatpush1.bf16.msra.mxu0 %v2900
        %3245 = vmatprep.subr.bf16.mxu0 %v2905
        %3246 = vmatpush1.bf16.msra.mxu0 %v2904
        %3247 = vmatprep.subr.bf16.mxu0 %v2909
        %3248 = vmatpush1.bf16.msra.mxu0 %v2908
        %3249 = vmatprep.subr.bf16.mxu0 %v2913
        %3250 = vmatpush1.bf16.msra.mxu0 %v2912
        %3251 = vmatprep.subr.bf16.mxu0 %v2917
        %3252 = vmatpush1.bf16.msra.mxu0 %v2916
        %3253 = vmatprep.subr.bf16.mxu0 %v2921
        %3254 = vmatpush1.bf16.msra.mxu0 %v2920
        %3255 = vmatprep.subr.bf16.mxu0 %v2925
        %3256 = vmatpush1.bf16.msra.mxu0 %v2924
        %3257 = vmatprep.mubr.bf16.mxu0 %v2217
        %3258 = vmatmul.mubr.bf16.gmra.mrb[0].mxu0 %v2216
        %v3259 = vpop.f32.mrb[0].mxu0
        %v3260 = vadd.f32 %v3219, %v3259
        %v3261 = vpop.f32.mrb[0].mxu0
        %v3262 = vadd.f32 %v3221, %v3261
        %v3263 = vpop.f32.mrb[0].mxu0
        %v3264 = vpop.f32.mrb[0].mxu0
        %3265 = vdwg.mxu0
        %3266 = vmatprep.subr.bf16.mxu0 %v2929
        %3267 = vmatpush1.bf16.msra.mxu0 %v2928
        %3268 = vmatprep.subr.bf16.mxu0 %v2933
        %3269 = vmatpush1.bf16.msra.mxu0 %v2932
        %3270 = vmatprep.subr.bf16.mxu0 %v2937
        %3271 = vmatpush1.bf16.msra.mxu0 %v2936
        %3272 = vmatprep.subr.bf16.mxu0 %v2941
        %3273 = vmatpush1.bf16.msra.mxu0 %v2940
        %3274 = vmatprep.subr.bf16.mxu0 %v2945
        %3275 = vmatpush1.bf16.msra.mxu0 %v2944
        %3276 = vmatprep.subr.bf16.mxu0 %v2949
        %3277 = vmatpush1.bf16.msra.mxu0 %v2948
        %3278 = vmatprep.subr.bf16.mxu0 %v2953
        %3279 = vmatpush1.bf16.msra.mxu0 %v2952
        %3280 = vmatprep.subr.bf16.mxu0 %v2957
        %3281 = vmatpush1.bf16.msra.mxu0 %v2956
        %3282 = vmatprep.subr.bf16.mxu0 %v2961
        %3283 = vmatpush1.bf16.msra.mxu0 %v2960
        %3284 = vmatprep.subr.bf16.mxu0 %v2965
        %3285 = vmatpush1.bf16.msra.mxu0 %v2964
        %3286 = vmatprep.subr.bf16.mxu0 %v2969
        %3287 = vmatpush1.bf16.msra.mxu0 %v2968
        %3288 = vmatprep.subr.bf16.mxu0 %v2973
        %3289 = vmatpush1.bf16.msra.mxu0 %v2972
        %3290 = vmatprep.subr.bf16.mxu0 %v2977
        %3291 = vmatpush1.bf16.msra.mxu0 %v2976
        %3292 = vmatprep.subr.bf16.mxu0 %v2981
        %3293 = vmatpush1.bf16.msra.mxu0 %v2980
        %3294 = vmatprep.subr.bf16.mxu0 %v2985
        %3295 = vmatpush1.bf16.msra.mxu0 %v2984
        %3296 = vmatprep.subr.bf16.mxu0 %v2989
        %3297 = vmatpush1.bf16.msra.mxu0 %v2988
        %3298 = vmatprep.mubr.bf16.mxu0 %v2215
        %3299 = vmatmul.mubr.bf16.gmra.mrb[0].mxu0 %v2201
        %v3300 = vpop.f32.mrb[0].mxu0
        %v3301 = vadd.f32 %v3260, %v3300
        %v3302 = vpop.f32.mrb[0].mxu0
        %v3303 = vadd.f32 %v3262, %v3302
        %v3304 = vpop.f32.mrb[0].mxu0
        %v3305 = vpop.f32.mrb[0].mxu0
        %3306 = vdwg.mxu0
        %3307 = vmatprep.subr.bf16.mxu0 %v2803
        %3308 = vmatpush1.bf16.msra.mxu0 %v2802
        %3309 = vmatprep.subr.bf16.mxu0 %v2807
        %3310 = vmatpush1.bf16.msra.mxu0 %v2806
        %3311 = vmatprep.subr.bf16.mxu0 %v2811
        %3312 = vmatpush1.bf16.msra.mxu0 %v2810
        %3313 = vmatprep.subr.bf16.mxu0 %v2815
        %3314 = vmatpush1.bf16.msra.mxu0 %v2814
        %3315 = vmatprep.subr.bf16.mxu0 %v2819
        %3316 = vmatpush1.bf16.msra.mxu0 %v2818
        %3317 = vmatprep.subr.bf16.mxu0 %v2823
        %3318 = vmatpush1.bf16.msra.mxu0 %v2822
        %3319 = vmatprep.subr.bf16.mxu0 %v2827
        %3320 = vmatpush1.bf16.msra.mxu0 %v2826
        %3321 = vmatprep.subr.bf16.mxu0 %v2831
        %3322 = vmatpush1.bf16.msra.mxu0 %v2830
        %3323 = vmatprep.subr.bf16.mxu0 %v2835
        %3324 = vmatpush1.bf16.msra.mxu0 %v2834
        %3325 = vmatprep.subr.bf16.mxu0 %v2839
        %3326 = vmatpush1.bf16.msra.mxu0 %v2838
        %3327 = vmatprep.subr.bf16.mxu0 %v2843
        %3328 = vmatpush1.bf16.msra.mxu0 %v2842
        %3329 = vmatprep.subr.bf16.mxu0 %v2847
        %3330 = vmatpush1.bf16.msra.mxu0 %v2846
        %3331 = vmatprep.subr.bf16.mxu0 %v2851
        %3332 = vmatpush1.bf16.msra.mxu0 %v2850
        %3333 = vmatprep.subr.bf16.mxu0 %v2855
        %3334 = vmatpush1.bf16.msra.mxu0 %v2854
        %3335 = vmatprep.subr.bf16.mxu0 %v2859
        %3336 = vmatpush1.bf16.msra.mxu0 %v2858
        %3337 = vmatprep.subr.bf16.mxu0 %v2863
        %3338 = vmatpush1.bf16.msra.mxu0 %v2862
        %3339 = vmatprep.mubr.bf16.mxu0 %v2208
        %3340 = vmatmul.mubr.bf16.gmra.mrb[0].mxu0 %v2194
        %v3341 = vpop.f32.mrb[0].mxu0
        %v3342 = vadd.f32 0.0, %v3341
        %v3343 = vpop.f32.mrb[0].mxu0
        %v3344 = vadd.f32 0.0, %v3343
        %v3345 = vpop.f32.mrb[0].mxu0
        %v3346 = vpop.f32.mrb[0].mxu0
        %3347 = vdwg.mxu0
        %3348 = vmatprep.subr.bf16.mxu0 %v2867
        %3349 = vmatpush1.bf16.msra.mxu0 %v2866
        %3350 = vmatprep.subr.bf16.mxu0 %v2871
        %3351 = vmatpush1.bf16.msra.mxu0 %v2870
        %3352 = vmatprep.subr.bf16.mxu0 %v2875
        %3353 = vmatpush1.bf16.msra.mxu0 %v2874
        %3354 = vmatprep.subr.bf16.mxu0 %v2879
        %3355 = vmatpush1.bf16.msra.mxu0 %v2878
        %3356 = vmatprep.subr.bf16.mxu0 %v2883
        %3357 = vmatpush1.bf16.msra.mxu0 %v2882
        %3358 = vmatprep.subr.bf16.mxu0 %v2887
        %3359 = vmatpush1.bf16.msra.mxu0 %v2886
        %3360 = vmatprep.subr.bf16.mxu0 %v2891
        %3361 = vmatpush1.bf16.msra.mxu0 %v2890
        %3362 = vmatprep.subr.bf16.mxu0 %v2895
        %3363 = vmatpush1.bf16.msra.mxu0 %v2894
        %3364 = vmatprep.subr.bf16.mxu0 %v2899
        %3365 = vmatpush1.bf16.msra.mxu0 %v2898
        %3366 = vmatprep.subr.bf16.mxu0 %v2903
        %3367 = vmatpush1.bf16.msra.mxu0 %v2902
        %3368 = vmatprep.subr.bf16.mxu0 %v2907
        %3369 = vmatpush1.bf16.msra.mxu0 %v2906
        %3370 = vmatprep.subr.bf16.mxu0 %v2911
        %3371 = vmatpush1.bf16.msra.mxu0 %v2910
        %3372 = vmatprep.subr.bf16.mxu0 %v2915
        %3373 = vmatpush1.bf16.msra.mxu0 %v2914
        %3374 = vmatprep.subr.bf16.mxu0 %v2919
        %3375 = vmatpush1.bf16.msra.mxu0 %v2918
        %3376 = vmatprep.subr.bf16.mxu0 %v2923
        %3377 = vmatpush1.bf16.msra.mxu0 %v2922
        %3378 = vmatprep.subr.bf16.mxu0 %v2927
        %3379 = vmatpush1.bf16.msra.mxu0 %v2926
        %3380 = vmatprep.mubr.bf16.mxu0 %v2217
        %3381 = vmatmul.mubr.bf16.gmra.mrb[0].mxu0 %v2216
        %v3382 = vpop.f32.mrb[0].mxu0
        %v3383 = vadd.f32 %v3342, %v3382
        %v3384 = vpop.f32.mrb[0].mxu0
        %v3385 = vadd.f32 %v3344, %v3384
        %v3386 = vpop.f32.mrb[0].mxu0
        %v3387 = vpop.f32.mrb[0].mxu0
        %3388 = vdwg.mxu0
        %3389 = vmatprep.subr.bf16.mxu0 %v2931
        %3390 = vmatpush1.bf16.msra.mxu0 %v2930
        %3391 = vmatprep.subr.bf16.mxu0 %v2935
        %3392 = vmatpush1.bf16.msra.mxu0 %v2934
        %3393 = vmatprep.subr.bf16.mxu0 %v2939
        %3394 = vmatpush1.bf16.msra.mxu0 %v2938
        %3395 = vmatprep.subr.bf16.mxu0 %v2943
        %3396 = vmatpush1.bf16.msra.mxu0 %v2942
        %3397 = vmatprep.subr.bf16.mxu0 %v2947
        %3398 = vmatpush1.bf16.msra.mxu0 %v2946
        %3399 = vmatprep.subr.bf16.mxu0 %v2951
        %3400 = vmatpush1.bf16.msra.mxu0 %v2950
        %3401 = vmatprep.subr.bf16.mxu0 %v2955
        %3402 = vmatpush1.bf16.msra.mxu0 %v2954
        %3403 = vmatprep.subr.bf16.mxu0 %v2959
        %3404 = vmatpush1.bf16.msra.mxu0 %v2958
        %3405 = vmatprep.subr.bf16.mxu0 %v2963
        %3406 = vmatpush1.bf16.msra.mxu0 %v2962
        %3407 = vmatprep.subr.bf16.mxu0 %v2967
        %3408 = vmatpush1.bf16.msra.mxu0 %v2966
        %3409 = vmatprep.subr.bf16.mxu0 %v2971
        %3410 = vmatpush1.bf16.msra.mxu0 %v2970
        %3411 = vmatprep.subr.bf16.mxu0 %v2975
        %3412 = vmatpush1.bf16.msra.mxu0 %v2974
        %3413 = vmatprep.subr.bf16.mxu0 %v2979
        %3414 = vmatpush1.bf16.msra.mxu0 %v2978
        %3415 = vmatprep.subr.bf16.mxu0 %v2983
        %3416 = vmatpush1.bf16.msra.mxu0 %v2982
        %3417 = vmatprep.subr.bf16.mxu0 %v2987
        %3418 = vmatpush1.bf16.msra.mxu0 %v2986
        %3419 = vmatprep.subr.bf16.mxu0 %v2991
        %3420 = vmatpush1.bf16.msra.mxu0 %v2990
        %3421 = vmatprep.mubr.bf16.mxu0 %v2215
        %3422 = vmatmul.mubr.bf16.gmra.mrb[0].mxu0 %v2201
        %v3423 = vpop.f32.mrb[0].mxu0
        %v3424 = vadd.f32 %v3383, %v3423
        %v3425 = vpop.f32.mrb[0].mxu0
        %v3426 = vadd.f32 %v3385, %v3425
        %v3427 = vpop.f32.mrb[0].mxu0
        %v3428 = vpop.f32.mrb[0].mxu0
        %3429 = vdwg.mxu0
        %v3431 = vcombine.high %v333, %v333
        %v3433 = vunpack.c.l.s4 1966171168
        %v3434 = vunpack.c.0.s8 %v3433
        %v3435 = vlaneseq
        %v3436 = vshrl.u32 %v3435, 7
        %v3437 = vsub.s32 %v3434, %v3436
        %v3438 = vrot.slane %v333, %v3437
        %v3440 = vunpack.c.l.s4 1966171168
        %v3441 = vunpack.c.0.s8 %v3440
        %v3442 = vlaneseq
        %v3443 = vshrl.u32 %v3442, 7
        %v3444 = vsub.s32 %v3441, %v3443
        %v3445 = vrot.slane %v3431, %v3444
        %v3446 = vcombine.high %v3438, %v3438
        %v3447 = vcombine.high %v3445, %v3445
        %v3449 = vunpack.c.l.s4 1966171168
        %v3450 = vunpack.c.0.s8 %v3449
        %v3451 = vlaneseq
        %v3452 = vshrl.u32 %v3451, 7
        %v3453 = vsub.s32 %v3450, %v3452
        %v3454 = vrot.slane %v3438, %v3453
        %v3456 = vunpack.c.l.s4 1966171168
        %v3457 = vunpack.c.0.s8 %v3456
        %v3458 = vlaneseq
        %v3459 = vshrl.u32 %v3458, 7
        %v3460 = vsub.s32 %v3457, %v3459
        %v3461 = vrot.slane %v3445, %v3460
        %v3463 = vunpack.c.l.s4 1966171168
        %v3464 = vunpack.c.0.s8 %v3463
        %v3465 = vlaneseq
        %v3466 = vshrl.u32 %v3465, 7
        %v3467 = vsub.s32 %v3464, %v3466
        %v3468 = vrot.slane %v3446, %v3467
        %v3470 = vunpack.c.l.s4 1966171168
        %v3471 = vunpack.c.0.s8 %v3470
        %v3472 = vlaneseq
        %v3473 = vshrl.u32 %v3472, 7
        %v3474 = vsub.s32 %v3471, %v3473
        %v3475 = vrot.slane %v3447, %v3474
        %v3476 = vcombine.high %v3454, %v3454
        %v3477 = vcombine.high %v3468, %v3468
        %v3676 = vunpack.c.l.b16 %v718
        %v3677 = vunpack.c.h.b16 %v718
        %v3678 = vunpack.c.l.b16 %v719
        %v3679 = vunpack.c.h.b16 %v719
        %v3680 = vunpack.c.l.b16 %v720
        %v3681 = vunpack.c.h.b16 %v720
        %v3682 = vunpack.c.l.b16 %v721
        %v3683 = vunpack.c.h.b16 %v721
        %v3684 = vunpack.c.l.b16 %v722
        %v3685 = vunpack.c.h.b16 %v722
        %v3686 = vunpack.c.l.b16 %v723
        %v3687 = vunpack.c.h.b16 %v723
        %v3688 = vunpack.c.l.b16 %v724
        %v3689 = vunpack.c.h.b16 %v724
        %v3690 = vunpack.c.l.b16 %v725
        %v3691 = vunpack.c.h.b16 %v725
        %v3692 = vunpack.c.l.b16 %v726
        %v3693 = vunpack.c.h.b16 %v726
        %v3694 = vunpack.c.l.b16 %v727
        %v3695 = vunpack.c.h.b16 %v727
        %v3696 = vunpack.c.l.b16 %v728
        %v3697 = vunpack.c.h.b16 %v728
        %v3698 = vunpack.c.l.b16 %v729
        %v3699 = vunpack.c.h.b16 %v729
        %v3700 = vunpack.c.l.b16 %v730
        %v3701 = vunpack.c.h.b16 %v730
        %v3702 = vunpack.c.l.b16 %v731
        %v3703 = vunpack.c.h.b16 %v731
        %v3704 = vunpack.c.l.b16 %v732
        %v3705 = vunpack.c.h.b16 %v732
        %v3706 = vunpack.c.l.b16 %v733
        %v3707 = vunpack.c.h.b16 %v733
        %v3708 = vunpack.c.l.b16 %v734
        %v3709 = vunpack.c.h.b16 %v734
        %v3710 = vunpack.c.l.b16 %v735
        %v3711 = vunpack.c.h.b16 %v735
        %v3712 = vunpack.c.l.b16 %v736
        %v3713 = vunpack.c.h.b16 %v736
        %v3714 = vunpack.c.l.b16 %v737
        %v3715 = vunpack.c.h.b16 %v737
        %v3716 = vunpack.c.l.b16 %v738
        %v3717 = vunpack.c.h.b16 %v738
        %v3718 = vunpack.c.l.b16 %v739
        %v3719 = vunpack.c.h.b16 %v739
        %v3720 = vunpack.c.l.b16 %v740
        %v3721 = vunpack.c.h.b16 %v740
        %v3722 = vunpack.c.l.b16 %v741
        %v3723 = vunpack.c.h.b16 %v741
        %v3724 = vunpack.c.l.b16 %v742
        %v3725 = vunpack.c.h.b16 %v742
        %v3726 = vunpack.c.l.b16 %v743
        %v3727 = vunpack.c.h.b16 %v743
        %v3728 = vunpack.c.l.b16 %v744
        %v3729 = vunpack.c.h.b16 %v744
        %v3730 = vunpack.c.l.b16 %v745
        %v3731 = vunpack.c.h.b16 %v745
        %v3732 = vunpack.c.l.b16 %v746
        %v3733 = vunpack.c.h.b16 %v746
        %v3734 = vunpack.c.l.b16 %v747
        %v3735 = vunpack.c.h.b16 %v747
        %v3736 = vunpack.c.l.b16 %v748
        %v3737 = vunpack.c.h.b16 %v748
        %v3738 = vunpack.c.l.b16 %v749
        %v3739 = vunpack.c.h.b16 %v749
        %v3740 = vunpack.c.l.b16 %v750
        %v3741 = vunpack.c.h.b16 %v750
        %v3742 = vunpack.c.l.b16 %v751
        %v3743 = vunpack.c.h.b16 %v751
        %v3744 = vunpack.c.l.b16 %v752
        %v3745 = vunpack.c.h.b16 %v752
        %v3746 = vunpack.c.l.b16 %v753
        %v3747 = vunpack.c.h.b16 %v753
        %v3748 = vunpack.c.l.b16 %v754
        %v3749 = vunpack.c.h.b16 %v754
        %v3750 = vunpack.c.l.b16 %v755
        %v3751 = vunpack.c.h.b16 %v755
        %v3752 = vunpack.c.l.b16 %v756
        %v3753 = vunpack.c.h.b16 %v756
        %v3754 = vunpack.c.l.b16 %v757
        %v3755 = vunpack.c.h.b16 %v757
        %v3756 = vunpack.c.l.b16 %v758
        %v3757 = vunpack.c.h.b16 %v758
        %v3758 = vunpack.c.l.b16 %v759
        %v3759 = vunpack.c.h.b16 %v759
        %v3760 = vunpack.c.l.b16 %v760
        %v3761 = vunpack.c.h.b16 %v760
        %v3762 = vunpack.c.l.b16 %v761
        %v3763 = vunpack.c.h.b16 %v761
        %v3764 = vunpack.c.l.b16 %v762
        %v3765 = vunpack.c.h.b16 %v762
        %v3766 = vunpack.c.l.b16 %v763
        %v3767 = vunpack.c.h.b16 %v763
        %v3768 = vunpack.c.l.b16 %v764
        %v3769 = vunpack.c.h.b16 %v764
        %v3770 = vunpack.c.l.b16 %v765
        %v3771 = vunpack.c.h.b16 %v765
        %v3772 = vunpack.c.l.b16 %v766
        %v3773 = vunpack.c.h.b16 %v766
        %v3774 = vunpack.c.l.b16 %v767
        %v3775 = vunpack.c.h.b16 %v767
        %v3776 = vunpack.c.l.b16 %v768
        %v3777 = vunpack.c.h.b16 %v768
        %v3778 = vunpack.c.l.b16 %v769
        %v3779 = vunpack.c.h.b16 %v769
        %v3780 = vunpack.c.l.b16 %v770
        %v3781 = vunpack.c.h.b16 %v770
        %v3782 = vunpack.c.l.b16 %v771
        %v3783 = vunpack.c.h.b16 %v771
        %v3784 = vunpack.c.l.b16 %v772
        %v3785 = vunpack.c.h.b16 %v772
        %v3786 = vunpack.c.l.b16 %v773
        %v3787 = vunpack.c.h.b16 %v773
        %v3788 = vunpack.c.l.b16 %v774
        %v3789 = vunpack.c.h.b16 %v774
        %v3790 = vunpack.c.l.b16 %v775
        %v3791 = vunpack.c.h.b16 %v775
        %v3792 = vunpack.c.l.b16 %v776
        %v3793 = vunpack.c.h.b16 %v776
        %v3794 = vunpack.c.l.b16 %v777
        %v3795 = vunpack.c.h.b16 %v777
        %v3796 = vunpack.c.l.b16 %v778
        %v3797 = vunpack.c.h.b16 %v778
        %v3798 = vunpack.c.l.b16 %v779
        %v3799 = vunpack.c.h.b16 %v779
        %v3800 = vunpack.c.l.b16 %v780
        %v3801 = vunpack.c.h.b16 %v780
        %v3802 = vunpack.c.l.b16 %v781
        %v3803 = vunpack.c.h.b16 %v781
        %v3804 = vunpack.c.l.b16 %v782
        %v3805 = vunpack.c.h.b16 %v782
        %v3806 = vunpack.c.l.b16 %v783
        %v3807 = vunpack.c.h.b16 %v783
        %v3808 = vunpack.c.l.b16 %v784
        %v3809 = vunpack.c.h.b16 %v784
        %v3810 = vunpack.c.l.b16 %v785
        %v3811 = vunpack.c.h.b16 %v785
        %v3812 = vunpack.c.l.b16 %v786
        %v3813 = vunpack.c.h.b16 %v786
        %v3814 = vunpack.c.l.b16 %v787
        %v3815 = vunpack.c.h.b16 %v787
        %v3816 = vunpack.c.l.b16 %v788
        %v3817 = vunpack.c.h.b16 %v788
        %v3818 = vunpack.c.l.b16 %v789
        %v3819 = vunpack.c.h.b16 %v789
        %v3820 = vunpack.c.l.b16 %v790
        %v3821 = vunpack.c.h.b16 %v790
        %v3822 = vunpack.c.l.b16 %v791
        %v3823 = vunpack.c.h.b16 %v791
        %v3824 = vunpack.c.l.b16 %v792
        %v3825 = vunpack.c.h.b16 %v792
        %v3826 = vunpack.c.l.b16 %v793
        %v3827 = vunpack.c.h.b16 %v793
        %v3828 = vunpack.c.l.b16 %v794
        %v3829 = vunpack.c.h.b16 %v794
        %v3830 = vunpack.c.l.b16 %v795
        %v3831 = vunpack.c.h.b16 %v795
        %v3832 = vunpack.c.l.b16 %v796
        %v3833 = vunpack.c.h.b16 %v796
        %v3834 = vunpack.c.l.b16 %v797
        %v3835 = vunpack.c.h.b16 %v797
        %v3836 = vunpack.c.l.b16 %v798
        %v3837 = vunpack.c.h.b16 %v798
        %v3838 = vunpack.c.l.b16 %v799
        %v3839 = vunpack.c.h.b16 %v799
        %v3840 = vunpack.c.l.b16 %v800
        %v3841 = vunpack.c.h.b16 %v800
        %v3842 = vunpack.c.l.b16 %v801
        %v3843 = vunpack.c.h.b16 %v801
        %v3844 = vunpack.c.l.b16 %v802
        %v3845 = vunpack.c.h.b16 %v802
        %v3846 = vunpack.c.l.b16 %v803
        %v3847 = vunpack.c.h.b16 %v803
        %v3848 = vunpack.c.l.b16 %v804
        %v3849 = vunpack.c.h.b16 %v804
        %v3850 = vunpack.c.l.b16 %v805
        %v3851 = vunpack.c.h.b16 %v805
        %v3852 = vunpack.c.l.b16 %v806
        %v3853 = vunpack.c.h.b16 %v806
        %v3854 = vunpack.c.l.b16 %v807
        %v3855 = vunpack.c.h.b16 %v807
        %v3856 = vunpack.c.l.b16 %v808
        %v3857 = vunpack.c.h.b16 %v808
        %v3858 = vunpack.c.l.b16 %v809
        %v3859 = vunpack.c.h.b16 %v809
        %v3860 = vunpack.c.l.b16 %v810
        %v3861 = vunpack.c.h.b16 %v810
        %v3862 = vunpack.c.l.b16 %v811
        %v3863 = vunpack.c.h.b16 %v811
        %v3864 = vunpack.c.l.b16 %v812
        %v3865 = vunpack.c.h.b16 %v812
        %v3866 = vunpack.c.l.b16 %v813
        %v3867 = vunpack.c.h.b16 %v813
        %v3868 = vunpack.c.l.b16 %v814
        %v3869 = vunpack.c.h.b16 %v814
        %v3870 = vunpack.c.l.b16 %v815
        %v3871 = vunpack.c.h.b16 %v815
        %v3872 = vunpack.c.l.b16 %v816
        %v3873 = vunpack.c.h.b16 %v816
        %v3874 = vunpack.c.l.b16 %v817
        %v3875 = vunpack.c.h.b16 %v817
        %v3876 = vunpack.c.l.b16 %v818
        %v3877 = vunpack.c.h.b16 %v818
        %v3878 = vunpack.c.l.b16 %v819
        %v3879 = vunpack.c.h.b16 %v819
        %v3880 = vunpack.c.l.b16 %v820
        %v3881 = vunpack.c.h.b16 %v820
        %v3882 = vunpack.c.l.b16 %v821
        %v3883 = vunpack.c.h.b16 %v821
        %v3884 = vunpack.c.l.b16 %v822
        %v3885 = vunpack.c.h.b16 %v822
        %v3886 = vunpack.c.l.b16 %v823
        %v3887 = vunpack.c.h.b16 %v823
        %v3888 = vunpack.c.l.b16 %v824
        %v3889 = vunpack.c.h.b16 %v824
        %v3890 = vunpack.c.l.b16 %v825
        %v3891 = vunpack.c.h.b16 %v825
        %v3892 = vunpack.c.l.b16 %v826
        %v3893 = vunpack.c.h.b16 %v826
        %v3894 = vunpack.c.l.b16 %v827
        %v3895 = vunpack.c.h.b16 %v827
        %v3896 = vunpack.c.l.b16 %v828
        %v3897 = vunpack.c.h.b16 %v828
        %v3898 = vunpack.c.l.b16 %v829
        %v3899 = vunpack.c.h.b16 %v829
        %v3900 = vunpack.c.l.b16 %v830
        %v3901 = vunpack.c.h.b16 %v830
        %v3902 = vunpack.c.l.b16 %v831
        %v3903 = vunpack.c.h.b16 %v831
        %v3904 = vunpack.c.l.b16 %v832
        %v3905 = vunpack.c.h.b16 %v832
        %v3906 = vunpack.c.l.b16 %v833
        %v3907 = vunpack.c.h.b16 %v833
        %v3908 = vunpack.c.l.b16 %v834
        %v3909 = vunpack.c.h.b16 %v834
        %v3910 = vunpack.c.l.b16 %v835
        %v3911 = vunpack.c.h.b16 %v835
        %v3912 = vunpack.c.l.b16 %v836
        %v3913 = vunpack.c.h.b16 %v836
        %v3914 = vunpack.c.l.b16 %v837
        %v3915 = vunpack.c.h.b16 %v837
        %v3916 = vunpack.c.l.b16 %v838
        %v3917 = vunpack.c.h.b16 %v838
        %v3918 = vunpack.c.l.b16 %v839
        %v3919 = vunpack.c.h.b16 %v839
        %v3920 = vunpack.c.l.b16 %v840
        %v3921 = vunpack.c.h.b16 %v840
        %v3922 = vunpack.c.l.b16 %v841
        %v3923 = vunpack.c.h.b16 %v841
        %v3924 = vunpack.c.l.b16 %v842
        %v3925 = vunpack.c.h.b16 %v842
        %v3926 = vunpack.c.l.b16 %v843
        %v3927 = vunpack.c.h.b16 %v843
        %v3928 = vunpack.c.l.b16 %v844
        %v3929 = vunpack.c.h.b16 %v844
        %v3930 = vunpack.c.l.b16 %v845
        %v3931 = vunpack.c.h.b16 %v845
        %v3932 = vunpack.c.l.b16 %v846
        %v3933 = vunpack.c.h.b16 %v846
        %v3934 = vunpack.c.l.b16 %v847
        %v3935 = vunpack.c.h.b16 %v847
        %v3936 = vunpack.c.l.b16 %v848
        %v3937 = vunpack.c.h.b16 %v848
        %v3938 = vunpack.c.l.b16 %v849
        %v3939 = vunpack.c.h.b16 %v849
        %v3940 = vunpack.c.l.b16 %v850
        %v3941 = vunpack.c.h.b16 %v850
        %v3942 = vunpack.c.l.b16 %v851
        %v3943 = vunpack.c.h.b16 %v851
        %v3944 = vunpack.c.l.b16 %v852
        %v3945 = vunpack.c.h.b16 %v852
        %v3946 = vunpack.c.l.b16 %v853
        %v3947 = vunpack.c.h.b16 %v853
        %v3948 = vunpack.c.l.b16 %v854
        %v3949 = vunpack.c.h.b16 %v854
        %v3950 = vunpack.c.l.b16 %v855
        %v3951 = vunpack.c.h.b16 %v855
        %v3952 = vunpack.c.l.b16 %v856
        %v3953 = vunpack.c.h.b16 %v856
        %v3954 = vunpack.c.l.b16 %v857
        %v3955 = vunpack.c.h.b16 %v857
        %v3956 = vunpack.c.l.b16 %v858
        %v3957 = vunpack.c.h.b16 %v858
        %v3958 = vunpack.c.l.b16 %v859
        %v3959 = vunpack.c.h.b16 %v859
        %v3960 = vunpack.c.l.b16 %v860
        %v3961 = vunpack.c.h.b16 %v860
        %v3962 = vunpack.c.l.b16 %v861
        %v3963 = vunpack.c.h.b16 %v861
        %v3964 = vunpack.c.l.b16 %v862
        %v3965 = vunpack.c.h.b16 %v862
        %v3966 = vunpack.c.l.b16 %v863
        %v3967 = vunpack.c.h.b16 %v863
        %v3968 = vunpack.c.l.b16 %v864
        %v3969 = vunpack.c.h.b16 %v864
        %v3970 = vunpack.c.l.b16 %v865
        %v3971 = vunpack.c.h.b16 %v865
        %v3972 = vunpack.c.l.b16 %v866
        %v3973 = vunpack.c.h.b16 %v866
        %v3974 = vunpack.c.l.b16 %v867
        %v3975 = vunpack.c.h.b16 %v867
        %v3976 = vunpack.c.l.b16 %v868
        %v3977 = vunpack.c.h.b16 %v868
        %v3978 = vunpack.c.l.b16 %v869
        %v3979 = vunpack.c.h.b16 %v869
        %v3980 = vunpack.c.l.b16 %v870
        %v3981 = vunpack.c.h.b16 %v870
        %v3982 = vunpack.c.l.b16 %v871
        %v3983 = vunpack.c.h.b16 %v871
        %v3984 = vunpack.c.l.b16 %v872
        %v3985 = vunpack.c.h.b16 %v872
        %v3986 = vunpack.c.l.b16 %v873
        %v3987 = vunpack.c.h.b16 %v873
        %v3988 = vunpack.c.l.b16 %v874
        %v3989 = vunpack.c.h.b16 %v874
        %v3990 = vunpack.c.l.b16 %v875
        %v3991 = vunpack.c.h.b16 %v875
        %v3992 = vunpack.c.l.b16 %v876
        %v3993 = vunpack.c.h.b16 %v876
        %v3994 = vunpack.c.l.b16 %v877
        %v3995 = vunpack.c.h.b16 %v877
        %v3996 = vunpack.c.l.b16 %v878
        %v3997 = vunpack.c.h.b16 %v878
        %v3998 = vunpack.c.l.b16 %v879
        %v3999 = vunpack.c.h.b16 %v879
        %v4000 = vunpack.c.l.b16 %v880
        %v4001 = vunpack.c.h.b16 %v880
        %v4002 = vunpack.c.l.b16 %v881
        %v4003 = vunpack.c.h.b16 %v881
        %v4004 = vunpack.c.l.b16 %v882
        %v4005 = vunpack.c.h.b16 %v882
        %v4006 = vunpack.c.l.b16 %v883
        %v4007 = vunpack.c.h.b16 %v883
        %v4008 = vunpack.c.l.b16 %v884
        %v4009 = vunpack.c.h.b16 %v884
        %v4010 = vunpack.c.l.b16 %v885
        %v4011 = vunpack.c.h.b16 %v885
        %v4012 = vunpack.c.l.b16 %v886
        %v4013 = vunpack.c.h.b16 %v886
        %v4014 = vunpack.c.l.b16 %v887
        %v4015 = vunpack.c.h.b16 %v887
        %v4016 = vunpack.c.l.b16 %v888
        %v4017 = vunpack.c.h.b16 %v888
        %v4018 = vunpack.c.l.b16 %v889
        %v4019 = vunpack.c.h.b16 %v889
        %v4020 = vunpack.c.l.b16 %v890
        %v4021 = vunpack.c.h.b16 %v890
        %v4022 = vunpack.c.l.b16 %v891
        %v4023 = vunpack.c.h.b16 %v891
        %v4024 = vunpack.c.l.b16 %v892
        %v4025 = vunpack.c.h.b16 %v892
        %v4026 = vunpack.c.l.b16 %v893
        %v4027 = vunpack.c.h.b16 %v893
        %v4028 = vunpack.c.l.b16 %v894
        %v4029 = vunpack.c.h.b16 %v894
        %v4030 = vunpack.c.l.b16 %v895
        %v4031 = vunpack.c.h.b16 %v895
        %v4032 = vunpack.c.l.b16 %v896
        %v4033 = vunpack.c.h.b16 %v896
        %v4034 = vunpack.c.l.b16 %v897
        %v4035 = vunpack.c.h.b16 %v897
        %v4036 = vunpack.c.l.b16 %v898
        %v4037 = vunpack.c.h.b16 %v898
        %v4038 = vunpack.c.l.b16 %v899
        %v4039 = vunpack.c.h.b16 %v899
        %v4040 = vunpack.c.l.b16 %v900
        %v4041 = vunpack.c.h.b16 %v900
        %v4042 = vunpack.c.l.b16 %v901
        %v4043 = vunpack.c.h.b16 %v901
        %v4044 = vunpack.c.l.b16 %v902
        %v4045 = vunpack.c.h.b16 %v902
        %v4046 = vunpack.c.l.b16 %v903
        %v4047 = vunpack.c.h.b16 %v903
        %v4048 = vunpack.c.l.b16 %v904
        %v4049 = vunpack.c.h.b16 %v904
        %v4050 = vunpack.c.l.b16 %v905
        %v4051 = vunpack.c.h.b16 %v905
        %v4052 = vunpack.c.l.b16 %v906
        %v4053 = vunpack.c.h.b16 %v906
        %v4054 = vunpack.c.l.b16 %v907
        %v4055 = vunpack.c.h.b16 %v907
        %v4056 = vunpack.c.l.b16 %v908
        %v4057 = vunpack.c.h.b16 %v908
        %v4058 = vunpack.c.l.b16 %v909
        %v4059 = vunpack.c.h.b16 %v909
        %v4060 = vpack.c.b16 %v3680, %v3676
        %v4061 = vpack.c.b16 %v3681, %v3677
        %v4062 = vpack.c.b16 %v3682, %v3678
        %v4063 = vpack.c.b16 %v3683, %v3679
        %v4064 = vpack.c.b16 %v3688, %v3684
        %v4065 = vpack.c.b16 %v3689, %v3685
        %v4066 = vpack.c.b16 %v3690, %v3686
        %v4067 = vpack.c.b16 %v3691, %v3687
        %v4068 = vpack.c.b16 %v3696, %v3692
        %v4069 = vpack.c.b16 %v3697, %v3693
        %v4070 = vpack.c.b16 %v3698, %v3694
        %v4071 = vpack.c.b16 %v3699, %v3695
        %v4072 = vpack.c.b16 %v3704, %v3700
        %v4073 = vpack.c.b16 %v3705, %v3701
        %v4074 = vpack.c.b16 %v3706, %v3702
        %v4075 = vpack.c.b16 %v3707, %v3703
        %v4076 = vpack.c.b16 %v3712, %v3708
        %v4077 = vpack.c.b16 %v3713, %v3709
        %v4078 = vpack.c.b16 %v3714, %v3710
        %v4079 = vpack.c.b16 %v3715, %v3711
        %v4080 = vpack.c.b16 %v3720, %v3716
        %v4081 = vpack.c.b16 %v3721, %v3717
        %v4082 = vpack.c.b16 %v3722, %v3718
        %v4083 = vpack.c.b16 %v3723, %v3719
        %v4084 = vpack.c.b16 %v3728, %v3724
        %v4085 = vpack.c.b16 %v3729, %v3725
        %v4086 = vpack.c.b16 %v3730, %v3726
        %v4087 = vpack.c.b16 %v3731, %v3727
        %v4088 = vpack.c.b16 %v3736, %v3732
        %v4089 = vpack.c.b16 %v3737, %v3733
        %v4090 = vpack.c.b16 %v3738, %v3734
        %v4091 = vpack.c.b16 %v3739, %v3735
        %v4092 = vpack.c.b16 %v3744, %v3740
        %v4093 = vpack.c.b16 %v3745, %v3741
        %v4094 = vpack.c.b16 %v3746, %v3742
        %v4095 = vpack.c.b16 %v3747, %v3743
        %v4096 = vpack.c.b16 %v3752, %v3748
        %v4097 = vpack.c.b16 %v3753, %v3749
        %v4098 = vpack.c.b16 %v3754, %v3750
        %v4099 = vpack.c.b16 %v3755, %v3751
        %v4100 = vpack.c.b16 %v3760, %v3756
        %v4101 = vpack.c.b16 %v3761, %v3757
        %v4102 = vpack.c.b16 %v3762, %v3758
        %v4103 = vpack.c.b16 %v3763, %v3759
        %v4104 = vpack.c.b16 %v3768, %v3764
        %v4105 = vpack.c.b16 %v3769, %v3765
        %v4106 = vpack.c.b16 %v3770, %v3766
        %v4107 = vpack.c.b16 %v3771, %v3767
        %v4108 = vpack.c.b16 %v3776, %v3772
        %v4109 = vpack.c.b16 %v3777, %v3773
        %v4110 = vpack.c.b16 %v3778, %v3774
        %v4111 = vpack.c.b16 %v3779, %v3775
        %v4112 = vpack.c.b16 %v3784, %v3780
        %v4113 = vpack.c.b16 %v3785, %v3781
        %v4114 = vpack.c.b16 %v3786, %v3782
        %v4115 = vpack.c.b16 %v3787, %v3783
        %v4116 = vpack.c.b16 %v3792, %v3788
        %v4117 = vpack.c.b16 %v3793, %v3789
        %v4118 = vpack.c.b16 %v3794, %v3790
        %v4119 = vpack.c.b16 %v3795, %v3791
        %v4120 = vpack.c.b16 %v3800, %v3796
        %v4121 = vpack.c.b16 %v3801, %v3797
        %v4122 = vpack.c.b16 %v3802, %v3798
        %v4123 = vpack.c.b16 %v3803, %v3799
        %v4124 = vpack.c.b16 %v3808, %v3804
        %v4125 = vpack.c.b16 %v3809, %v3805
        %v4126 = vpack.c.b16 %v3810, %v3806
        %v4127 = vpack.c.b16 %v3811, %v3807
        %v4128 = vpack.c.b16 %v3816, %v3812
        %v4129 = vpack.c.b16 %v3817, %v3813
        %v4130 = vpack.c.b16 %v3818, %v3814
        %v4131 = vpack.c.b16 %v3819, %v3815
        %v4132 = vpack.c.b16 %v3824, %v3820
        %v4133 = vpack.c.b16 %v3825, %v3821
        %v4134 = vpack.c.b16 %v3826, %v3822
        %v4135 = vpack.c.b16 %v3827, %v3823
        %v4136 = vpack.c.b16 %v3832, %v3828
        %v4137 = vpack.c.b16 %v3833, %v3829
        %v4138 = vpack.c.b16 %v3834, %v3830
        %v4139 = vpack.c.b16 %v3835, %v3831
        %v4140 = vpack.c.b16 %v3840, %v3836
        %v4141 = vpack.c.b16 %v3841, %v3837
        %v4142 = vpack.c.b16 %v3842, %v3838
        %v4143 = vpack.c.b16 %v3843, %v3839
        %v4144 = vpack.c.b16 %v3848, %v3844
        %v4145 = vpack.c.b16 %v3849, %v3845
        %v4146 = vpack.c.b16 %v3850, %v3846
        %v4147 = vpack.c.b16 %v3851, %v3847
        %v4148 = vpack.c.b16 %v3856, %v3852
        %v4149 = vpack.c.b16 %v3857, %v3853
        %v4150 = vpack.c.b16 %v3858, %v3854
        %v4151 = vpack.c.b16 %v3859, %v3855
        %v4152 = vpack.c.b16 %v3864, %v3860
        %v4153 = vpack.c.b16 %v3865, %v3861
        %v4154 = vpack.c.b16 %v3866, %v3862
        %v4155 = vpack.c.b16 %v3867, %v3863
        %v4156 = vpack.c.b16 %v3872, %v3868
        %v4157 = vpack.c.b16 %v3873, %v3869
        %v4158 = vpack.c.b16 %v3874, %v3870
        %v4159 = vpack.c.b16 %v3875, %v3871
        %v4160 = vpack.c.b16 %v3880, %v3876
        %v4161 = vpack.c.b16 %v3881, %v3877
        %v4162 = vpack.c.b16 %v3882, %v3878
        %v4163 = vpack.c.b16 %v3883, %v3879
        %v4164 = vpack.c.b16 %v3888, %v3884
        %v4165 = vpack.c.b16 %v3889, %v3885
        %v4166 = vpack.c.b16 %v3890, %v3886
        %v4167 = vpack.c.b16 %v3891, %v3887
        %v4168 = vpack.c.b16 %v3896, %v3892
        %v4169 = vpack.c.b16 %v3897, %v3893
        %v4170 = vpack.c.b16 %v3898, %v3894
        %v4171 = vpack.c.b16 %v3899, %v3895
        %v4172 = vpack.c.b16 %v3904, %v3900
        %v4173 = vpack.c.b16 %v3905, %v3901
        %v4174 = vpack.c.b16 %v3906, %v3902
        %v4175 = vpack.c.b16 %v3907, %v3903
        %v4176 = vpack.c.b16 %v3912, %v3908
        %v4177 = vpack.c.b16 %v3913, %v3909
        %v4178 = vpack.c.b16 %v3914, %v3910
        %v4179 = vpack.c.b16 %v3915, %v3911
        %v4180 = vpack.c.b16 %v3920, %v3916
        %v4181 = vpack.c.b16 %v3921, %v3917
        %v4182 = vpack.c.b16 %v3922, %v3918
        %v4183 = vpack.c.b16 %v3923, %v3919
        %v4184 = vpack.c.b16 %v3928, %v3924
        %v4185 = vpack.c.b16 %v3929, %v3925
        %v4186 = vpack.c.b16 %v3930, %v3926
        %v4187 = vpack.c.b16 %v3931, %v3927
        %v4188 = vpack.c.b16 %v3936, %v3932
        %v4189 = vpack.c.b16 %v3937, %v3933
        %v4190 = vpack.c.b16 %v3938, %v3934
        %v4191 = vpack.c.b16 %v3939, %v3935
        %v4192 = vpack.c.b16 %v3944, %v3940
        %v4193 = vpack.c.b16 %v3945, %v3941
        %v4194 = vpack.c.b16 %v3946, %v3942
        %v4195 = vpack.c.b16 %v3947, %v3943
        %v4196 = vpack.c.b16 %v3952, %v3948
        %v4197 = vpack.c.b16 %v3953, %v3949
        %v4198 = vpack.c.b16 %v3954, %v3950
        %v4199 = vpack.c.b16 %v3955, %v3951
        %v4200 = vpack.c.b16 %v3960, %v3956
        %v4201 = vpack.c.b16 %v3961, %v3957
        %v4202 = vpack.c.b16 %v3962, %v3958
        %v4203 = vpack.c.b16 %v3963, %v3959
        %v4204 = vpack.c.b16 %v3968, %v3964
        %v4205 = vpack.c.b16 %v3969, %v3965
        %v4206 = vpack.c.b16 %v3970, %v3966
        %v4207 = vpack.c.b16 %v3971, %v3967
        %v4208 = vpack.c.b16 %v3976, %v3972
        %v4209 = vpack.c.b16 %v3977, %v3973
        %v4210 = vpack.c.b16 %v3978, %v3974
        %v4211 = vpack.c.b16 %v3979, %v3975
        %v4212 = vpack.c.b16 %v3984, %v3980
        %v4213 = vpack.c.b16 %v3985, %v3981
        %v4214 = vpack.c.b16 %v3986, %v3982
        %v4215 = vpack.c.b16 %v3987, %v3983
        %v4216 = vpack.c.b16 %v3992, %v3988
        %v4217 = vpack.c.b16 %v3993, %v3989
        %v4218 = vpack.c.b16 %v3994, %v3990
        %v4219 = vpack.c.b16 %v3995, %v3991
        %v4220 = vpack.c.b16 %v4000, %v3996
        %v4221 = vpack.c.b16 %v4001, %v3997
        %v4222 = vpack.c.b16 %v4002, %v3998
        %v4223 = vpack.c.b16 %v4003, %v3999
        %v4224 = vpack.c.b16 %v4008, %v4004
        %v4225 = vpack.c.b16 %v4009, %v4005
        %v4226 = vpack.c.b16 %v4010, %v4006
        %v4227 = vpack.c.b16 %v4011, %v4007
        %v4228 = vpack.c.b16 %v4016, %v4012
        %v4229 = vpack.c.b16 %v4017, %v4013
        %v4230 = vpack.c.b16 %v4018, %v4014
        %v4231 = vpack.c.b16 %v4019, %v4015
        %v4232 = vpack.c.b16 %v4024, %v4020
        %v4233 = vpack.c.b16 %v4025, %v4021
        %v4234 = vpack.c.b16 %v4026, %v4022
        %v4235 = vpack.c.b16 %v4027, %v4023
        %v4236 = vpack.c.b16 %v4032, %v4028
        %v4237 = vpack.c.b16 %v4033, %v4029
        %v4238 = vpack.c.b16 %v4034, %v4030
        %v4239 = vpack.c.b16 %v4035, %v4031
        %v4240 = vpack.c.b16 %v4040, %v4036
        %v4241 = vpack.c.b16 %v4041, %v4037
        %v4242 = vpack.c.b16 %v4042, %v4038
        %v4243 = vpack.c.b16 %v4043, %v4039
        %v4244 = vpack.c.b16 %v4048, %v4044
        %v4245 = vpack.c.b16 %v4049, %v4045
        %v4246 = vpack.c.b16 %v4050, %v4046
        %v4247 = vpack.c.b16 %v4051, %v4047
        %v4248 = vpack.c.b16 %v4056, %v4052
        %v4249 = vpack.c.b16 %v4057, %v4053
        %v4250 = vpack.c.b16 %v4058, %v4054
        %v4251 = vpack.c.b16 %v4059, %v4055
        %4444 = vmatprep.subr.bf16.mxu0 %v4061
        %4445 = vmatpush1.bf16.msra.mxu0 %v4060
        %4446 = vmatprep.subr.bf16.mxu0 %v4065
        %4447 = vmatpush1.bf16.msra.mxu0 %v4064
        %4448 = vmatprep.subr.bf16.mxu0 %v4069
        %4449 = vmatpush1.bf16.msra.mxu0 %v4068
        %4450 = vmatprep.subr.bf16.mxu0 %v4073
        %4451 = vmatpush1.bf16.msra.mxu0 %v4072
        %4452 = vmatprep.subr.bf16.mxu0 %v4077
        %4453 = vmatpush1.bf16.msra.mxu0 %v4076
        %4454 = vmatprep.subr.bf16.mxu0 %v4081
        %4455 = vmatpush1.bf16.msra.mxu0 %v4080
        %4456 = vmatprep.subr.bf16.mxu0 %v4085
        %4457 = vmatpush1.bf16.msra.mxu0 %v4084
        %4458 = vmatprep.subr.bf16.mxu0 %v4089
        %4459 = vmatpush1.bf16.msra.mxu0 %v4088
        %4460 = vmatprep.subr.bf16.mxu0 %v4093
        %4461 = vmatpush1.bf16.msra.mxu0 %v4092
        %4462 = vmatprep.subr.bf16.mxu0 %v4097
        %4463 = vmatpush1.bf16.msra.mxu0 %v4096
        %4464 = vmatprep.subr.bf16.mxu0 %v4101
        %4465 = vmatpush1.bf16.msra.mxu0 %v4100
        %4466 = vmatprep.subr.bf16.mxu0 %v4105
        %4467 = vmatpush1.bf16.msra.mxu0 %v4104
        %4468 = vmatprep.subr.bf16.mxu0 %v4109
        %4469 = vmatpush1.bf16.msra.mxu0 %v4108
        %4470 = vmatprep.subr.bf16.mxu0 %v4113
        %4471 = vmatpush1.bf16.msra.mxu0 %v4112
        %4472 = vmatprep.subr.bf16.mxu0 %v4117
        %4473 = vmatpush1.bf16.msra.mxu0 %v4116
        %4474 = vmatprep.subr.bf16.mxu0 %v4121
        %4475 = vmatpush1.bf16.msra.mxu0 %v4120
        %4476 = vmatprep.mubr.bf16.mxu0 %v3468
        %4477 = vmatmul.mubr.bf16.gmra.mrb[0].mxu0 %v3454
        %v4478 = vpop.f32.mrb[0].mxu0
        %v4479 = vadd.f32 0.0, %v4478
        %v4480 = vpop.f32.mrb[0].mxu0
        %v4481 = vadd.f32 0.0, %v4480
        %v4482 = vpop.f32.mrb[0].mxu0
        %v4483 = vpop.f32.mrb[0].mxu0
        %4484 = vdwg.mxu0
        %4485 = vmatprep.subr.bf16.mxu0 %v4125
        %4486 = vmatpush1.bf16.msra.mxu0 %v4124
        %4487 = vmatprep.subr.bf16.mxu0 %v4129
        %4488 = vmatpush1.bf16.msra.mxu0 %v4128
        %4489 = vmatprep.subr.bf16.mxu0 %v4133
        %4490 = vmatpush1.bf16.msra.mxu0 %v4132
        %4491 = vmatprep.subr.bf16.mxu0 %v4137
        %4492 = vmatpush1.bf16.msra.mxu0 %v4136
        %4493 = vmatprep.subr.bf16.mxu0 %v4141
        %4494 = vmatpush1.bf16.msra.mxu0 %v4140
        %4495 = vmatprep.subr.bf16.mxu0 %v4145
        %4496 = vmatpush1.bf16.msra.mxu0 %v4144
        %4497 = vmatprep.subr.bf16.mxu0 %v4149
        %4498 = vmatpush1.bf16.msra.mxu0 %v4148
        %4499 = vmatprep.subr.bf16.mxu0 %v4153
        %4500 = vmatpush1.bf16.msra.mxu0 %v4152
        %4501 = vmatprep.subr.bf16.mxu0 %v4157
        %4502 = vmatpush1.bf16.msra.mxu0 %v4156
        %4503 = vmatprep.subr.bf16.mxu0 %v4161
        %4504 = vmatpush1.bf16.msra.mxu0 %v4160
        %4505 = vmatprep.subr.bf16.mxu0 %v4165
        %4506 = vmatpush1.bf16.msra.mxu0 %v4164
        %4507 = vmatprep.subr.bf16.mxu0 %v4169
        %4508 = vmatpush1.bf16.msra.mxu0 %v4168
        %4509 = vmatprep.subr.bf16.mxu0 %v4173
        %4510 = vmatpush1.bf16.msra.mxu0 %v4172
        %4511 = vmatprep.subr.bf16.mxu0 %v4177
        %4512 = vmatpush1.bf16.msra.mxu0 %v4176
        %4513 = vmatprep.subr.bf16.mxu0 %v4181
        %4514 = vmatpush1.bf16.msra.mxu0 %v4180
        %4515 = vmatprep.subr.bf16.mxu0 %v4185
        %4516 = vmatpush1.bf16.msra.mxu0 %v4184
        %4517 = vmatprep.mubr.bf16.mxu0 %v3477
        %4518 = vmatmul.mubr.bf16.gmra.mrb[0].mxu0 %v3476
        %v4519 = vpop.f32.mrb[0].mxu0
        %v4520 = vadd.f32 %v4479, %v4519
        %v4521 = vpop.f32.mrb[0].mxu0
        %v4522 = vadd.f32 %v4481, %v4521
        %v4523 = vpop.f32.mrb[0].mxu0
        %v4524 = vpop.f32.mrb[0].mxu0
        %4525 = vdwg.mxu0
        %4526 = vmatprep.subr.bf16.mxu0 %v4189
        %4527 = vmatpush1.bf16.msra.mxu0 %v4188
        %4528 = vmatprep.subr.bf16.mxu0 %v4193
        %4529 = vmatpush1.bf16.msra.mxu0 %v4192
        %4530 = vmatprep.subr.bf16.mxu0 %v4197
        %4531 = vmatpush1.bf16.msra.mxu0 %v4196
        %4532 = vmatprep.subr.bf16.mxu0 %v4201
        %4533 = vmatpush1.bf16.msra.mxu0 %v4200
        %4534 = vmatprep.subr.bf16.mxu0 %v4205
        %4535 = vmatpush1.bf16.msra.mxu0 %v4204
        %4536 = vmatprep.subr.bf16.mxu0 %v4209
        %4537 = vmatpush1.bf16.msra.mxu0 %v4208
        %4538 = vmatprep.subr.bf16.mxu0 %v4213
        %4539 = vmatpush1.bf16.msra.mxu0 %v4212
        %4540 = vmatprep.subr.bf16.mxu0 %v4217
        %4541 = vmatpush1.bf16.msra.mxu0 %v4216
        %4542 = vmatprep.subr.bf16.mxu0 %v4221
        %4543 = vmatpush1.bf16.msra.mxu0 %v4220
        %4544 = vmatprep.subr.bf16.mxu0 %v4225
        %4545 = vmatpush1.bf16.msra.mxu0 %v4224
        %4546 = vmatprep.subr.bf16.mxu0 %v4229
        %4547 = vmatpush1.bf16.msra.mxu0 %v4228
        %4548 = vmatprep.subr.bf16.mxu0 %v4233
        %4549 = vmatpush1.bf16.msra.mxu0 %v4232
        %4550 = vmatprep.subr.bf16.mxu0 %v4237
        %4551 = vmatpush1.bf16.msra.mxu0 %v4236
        %4552 = vmatprep.subr.bf16.mxu0 %v4241
        %4553 = vmatpush1.bf16.msra.mxu0 %v4240
        %4554 = vmatprep.subr.bf16.mxu0 %v4245
        %4555 = vmatpush1.bf16.msra.mxu0 %v4244
        %4556 = vmatprep.subr.bf16.mxu0 %v4249
        %4557 = vmatpush1.bf16.msra.mxu0 %v4248
        %4558 = vmatprep.mubr.bf16.mxu0 %v3475
        %4559 = vmatmul.mubr.bf16.gmra.mrb[0].mxu0 %v3461
        %v4560 = vpop.f32.mrb[0].mxu0
        %v4561 = vadd.f32 %v4520, %v4560
        %v4562 = vpop.f32.mrb[0].mxu0
        %v4563 = vadd.f32 %v4522, %v4562
        %v4564 = vpop.f32.mrb[0].mxu0
        %v4565 = vpop.f32.mrb[0].mxu0
        %4566 = vdwg.mxu0
        %4567 = vmatprep.subr.bf16.mxu0 %v4063
        %4568 = vmatpush1.bf16.msra.mxu0 %v4062
        %4569 = vmatprep.subr.bf16.mxu0 %v4067
        %4570 = vmatpush1.bf16.msra.mxu0 %v4066
        %4571 = vmatprep.subr.bf16.mxu0 %v4071
        %4572 = vmatpush1.bf16.msra.mxu0 %v4070
        %4573 = vmatprep.subr.bf16.mxu0 %v4075
        %4574 = vmatpush1.bf16.msra.mxu0 %v4074
        %4575 = vmatprep.subr.bf16.mxu0 %v4079
        %4576 = vmatpush1.bf16.msra.mxu0 %v4078
        %4577 = vmatprep.subr.bf16.mxu0 %v4083
        %4578 = vmatpush1.bf16.msra.mxu0 %v4082
        %4579 = vmatprep.subr.bf16.mxu0 %v4087
        %4580 = vmatpush1.bf16.msra.mxu0 %v4086
        %4581 = vmatprep.subr.bf16.mxu0 %v4091
        %4582 = vmatpush1.bf16.msra.mxu0 %v4090
        %4583 = vmatprep.subr.bf16.mxu0 %v4095
        %4584 = vmatpush1.bf16.msra.mxu0 %v4094
        %4585 = vmatprep.subr.bf16.mxu0 %v4099
        %4586 = vmatpush1.bf16.msra.mxu0 %v4098
        %4587 = vmatprep.subr.bf16.mxu0 %v4103
        %4588 = vmatpush1.bf16.msra.mxu0 %v4102
        %4589 = vmatprep.subr.bf16.mxu0 %v4107
        %4590 = vmatpush1.bf16.msra.mxu0 %v4106
        %4591 = vmatprep.subr.bf16.mxu0 %v4111
        %4592 = vmatpush1.bf16.msra.mxu0 %v4110
        %4593 = vmatprep.subr.bf16.mxu0 %v4115
        %4594 = vmatpush1.bf16.msra.mxu0 %v4114
        %4595 = vmatprep.subr.bf16.mxu0 %v4119
        %4596 = vmatpush1.bf16.msra.mxu0 %v4118
        %4597 = vmatprep.subr.bf16.mxu0 %v4123
        %4598 = vmatpush1.bf16.msra.mxu0 %v4122
        %4599 = vmatprep.mubr.bf16.mxu0 %v3468
        %4600 = vmatmul.mubr.bf16.gmra.mrb[0].mxu0 %v3454
        %v4601 = vpop.f32.mrb[0].mxu0
        %v4602 = vadd.f32 0.0, %v4601
        %v4603 = vpop.f32.mrb[0].mxu0
        %v4604 = vadd.f32 0.0, %v4603
        %v4605 = vpop.f32.mrb[0].mxu0
        %v4606 = vpop.f32.mrb[0].mxu0
        %4607 = vdwg.mxu0
        %4608 = vmatprep.subr.bf16.mxu0 %v4127
        %4609 = vmatpush1.bf16.msra.mxu0 %v4126
        %4610 = vmatprep.subr.bf16.mxu0 %v4131
        %4611 = vmatpush1.bf16.msra.mxu0 %v4130
        %4612 = vmatprep.subr.bf16.mxu0 %v4135
        %4613 = vmatpush1.bf16.msra.mxu0 %v4134
        %4614 = vmatprep.subr.bf16.mxu0 %v4139
        %4615 = vmatpush1.bf16.msra.mxu0 %v4138
        %4616 = vmatprep.subr.bf16.mxu0 %v4143
        %4617 = vmatpush1.bf16.msra.mxu0 %v4142
        %4618 = vmatprep.subr.bf16.mxu0 %v4147
        %4619 = vmatpush1.bf16.msra.mxu0 %v4146
        %4620 = vmatprep.subr.bf16.mxu0 %v4151
        %4621 = vmatpush1.bf16.msra.mxu0 %v4150
        %4622 = vmatprep.subr.bf16.mxu0 %v4155
        %4623 = vmatpush1.bf16.msra.mxu0 %v4154
        %4624 = vmatprep.subr.bf16.mxu0 %v4159
        %4625 = vmatpush1.bf16.msra.mxu0 %v4158
        %4626 = vmatprep.subr.bf16.mxu0 %v4163
        %4627 = vmatpush1.bf16.msra.mxu0 %v4162
        %4628 = vmatprep.subr.bf16.mxu0 %v4167
        %4629 = vmatpush1.bf16.msra.mxu0 %v4166
        %4630 = vmatprep.subr.bf16.mxu0 %v4171
        %4631 = vmatpush1.bf16.msra.mxu0 %v4170
        %4632 = vmatprep.subr.bf16.mxu0 %v4175
        %4633 = vmatpush1.bf16.msra.mxu0 %v4174
        %4634 = vmatprep.subr.bf16.mxu0 %v4179
        %4635 = vmatpush1.bf16.msra.mxu0 %v4178
        %4636 = vmatprep.subr.bf16.mxu0 %v4183
        %4637 = vmatpush1.bf16.msra.mxu0 %v4182
        %4638 = vmatprep.subr.bf16.mxu0 %v4187
        %4639 = vmatpush1.bf16.msra.mxu0 %v4186
        %4640 = vmatprep.mubr.bf16.mxu0 %v3477
        %4641 = vmatmul.mubr.bf16.gmra.mrb[0].mxu0 %v3476
        %v4642 = vpop.f32.mrb[0].mxu0
        %v4643 = vadd.f32 %v4602, %v4642
        %v4644 = vpop.f32.mrb[0].mxu0
        %v4645 = vadd.f32 %v4604, %v4644
        %v4646 = vpop.f32.mrb[0].mxu0
        %v4647 = vpop.f32.mrb[0].mxu0
        %4648 = vdwg.mxu0
        %4649 = vmatprep.subr.bf16.mxu0 %v4191
        %4650 = vmatpush1.bf16.msra.mxu0 %v4190
        %4651 = vmatprep.subr.bf16.mxu0 %v4195
        %4652 = vmatpush1.bf16.msra.mxu0 %v4194
        %4653 = vmatprep.subr.bf16.mxu0 %v4199
        %4654 = vmatpush1.bf16.msra.mxu0 %v4198
        %4655 = vmatprep.subr.bf16.mxu0 %v4203
        %4656 = vmatpush1.bf16.msra.mxu0 %v4202
        %4657 = vmatprep.subr.bf16.mxu0 %v4207
        %4658 = vmatpush1.bf16.msra.mxu0 %v4206
        %4659 = vmatprep.subr.bf16.mxu0 %v4211
        %4660 = vmatpush1.bf16.msra.mxu0 %v4210
        %4661 = vmatprep.subr.bf16.mxu0 %v4215
        %4662 = vmatpush1.bf16.msra.mxu0 %v4214
        %4663 = vmatprep.subr.bf16.mxu0 %v4219
        %4664 = vmatpush1.bf16.msra.mxu0 %v4218
        %4665 = vmatprep.subr.bf16.mxu0 %v4223
        %4666 = vmatpush1.bf16.msra.mxu0 %v4222
        %4667 = vmatprep.subr.bf16.mxu0 %v4227
        %4668 = vmatpush1.bf16.msra.mxu0 %v4226
        %4669 = vmatprep.subr.bf16.mxu0 %v4231
        %4670 = vmatpush1.bf16.msra.mxu0 %v4230
        %4671 = vmatprep.subr.bf16.mxu0 %v4235
        %4672 = vmatpush1.bf16.msra.mxu0 %v4234
        %4673 = vmatprep.subr.bf16.mxu0 %v4239
        %4674 = vmatpush1.bf16.msra.mxu0 %v4238
        %4675 = vmatprep.subr.bf16.mxu0 %v4243
        %4676 = vmatpush1.bf16.msra.mxu0 %v4242
        %4677 = vmatprep.subr.bf16.mxu0 %v4247
        %4678 = vmatpush1.bf16.msra.mxu0 %v4246
        %4679 = vmatprep.subr.bf16.mxu0 %v4251
        %4680 = vmatpush1.bf16.msra.mxu0 %v4250
        %4681 = vmatprep.mubr.bf16.mxu0 %v3475
        %4682 = vmatmul.mubr.bf16.gmra.mrb[0].mxu0 %v3461
        %v4683 = vpop.f32.mrb[0].mxu0
        %v4684 = vadd.f32 %v4643, %v4683
        %v4685 = vpop.f32.mrb[0].mxu0
        %v4686 = vadd.f32 %v4645, %v4685
        %v4687 = vpop.f32.mrb[0].mxu0
        %v4688 = vpop.f32.mrb[0].mxu0
        %4689 = vdwg.mxu0
        %v4702 = vcombine.low %v2041, %v2043
        %v4703 = vcombine.low %v2164, %v2166
        %v4705 = vunpack.c.l.s4 1983009808
        %v4706 = vunpack.c.0.s8 %v4705
        %v4707 = vlaneseq
        %v4708 = vshrl.u32 %v4707, 7
        %v4709 = vsub.s32 %v4706, %v4708
        %v4710 = vrot.slane %v4702, %v4709
        %v4712 = vunpack.c.l.s4 1983009808
        %v4713 = vunpack.c.0.s8 %v4712
        %v4714 = vlaneseq
        %v4715 = vshrl.u32 %v4714, 7
        %v4716 = vsub.s32 %v4713, %v4715
        %v4717 = vrot.slane %v4703, %v4716
        %v4718 = vcombine.low %v4710, %v4717
        %v4719 = vcombine.low %v3301, %v3303
        %v4720 = vcombine.low %v3424, %v3426
        %v4722 = vunpack.c.l.s4 1983009808
        %v4723 = vunpack.c.0.s8 %v4722
        %v4724 = vlaneseq
        %v4725 = vshrl.u32 %v4724, 7
        %v4726 = vsub.s32 %v4723, %v4725
        %v4727 = vrot.slane %v4719, %v4726
        %v4729 = vunpack.c.l.s4 1983009808
        %v4730 = vunpack.c.0.s8 %v4729
        %v4731 = vlaneseq
        %v4732 = vshrl.u32 %v4731, 7
        %v4733 = vsub.s32 %v4730, %v4732
        %v4734 = vrot.slane %v4720, %v4733
        %v4735 = vcombine.low %v4727, %v4734
        %v4736 = vcombine.low %v4561, %v4563
        %v4737 = vcombine.low %v4684, %v4686
        %v4739 = vunpack.c.l.s4 1983009808
        %v4740 = vunpack.c.0.s8 %v4739
        %v4741 = vlaneseq
        %v4742 = vshrl.u32 %v4741, 7
        %v4743 = vsub.s32 %v4740, %v4742
        %v4744 = vrot.slane %v4736, %v4743
        %v4746 = vunpack.c.l.s4 1983009808
        %v4747 = vunpack.c.0.s8 %v4746
        %v4748 = vlaneseq
        %v4749 = vshrl.u32 %v4748, 7
        %v4750 = vsub.s32 %v4747, %v4749
        %v4751 = vrot.slane %v4737, %v4750
        %v4752 = vcombine.low %v4744, %v4751
        %v4756 = vadd.f32 %v328, %v4718
        %v4757 = vadd.f32 %v329, %v4735
        %v4758 = vadd.f32 %v330, %v4752
        %4759 = vst [vmem:[#allocation2] sm:$0xff] %v4756
        %4760 = vst [vmem:[#allocation2 + $0x8] sm:$0xff] %v4757
        %4761 = vst [vmem:[#allocation2 + $0x10] sm:$0xff] %v4758
        // Predicated region
        $region57: #{tpu_custom_call.1} parent=35 // pred_check
          %p4762 = pneg %p315
        $region58: #{tpu_custom_call.1} parent=35 // pred_check_branch
          %4764 = sbr.rel (%p4762) target = $region60
        $region59: #{tpu_custom_call.1} parent=35 // pred_region
          %v4765 = vld [vmem:[#allocation2] sm:$0xff]
          %v4766 = vld [vmem:[#allocation2 + $0x8] sm:$0xff]
          %v4767 = vld [vmem:[#allocation2 + $0x10] sm:$0xff]
          %v4768 = vld [vmem:[%s280] sm:$0xf]
          %v4769 = vld [vmem:[%s280 + $0x4] sm:$0xf]
          %v4770 = vld [vmem:[%s280 + $0x8] sm:$0xf]
          %v4774 = vlaneseq
          %v4775 = vshrl.u32 %v4774, 7
          %v4776 = vsub.s32 0, %v4775
          %v4777 = vrot.slane %v4768, %v4776
          %v4778 = vlaneseq
          %v4779 = vshrl.u32 %v4778, 7
          %v4780 = vsub.s32 1, %v4779
          %v4781 = vrot.slane %v4768, %v4780
          %v4782 = vlaneseq
          %v4783 = vshrl.u32 %v4782, 7
          %v4784 = vsub.s32 2, %v4783
          %v4785 = vrot.slane %v4768, %v4784
          %v4786 = vlaneseq
          %v4787 = vshrl.u32 %v4786, 7
          %v4788 = vsub.s32 3, %v4787
          %v4789 = vrot.slane %v4768, %v4788
          %v4790 = vlaneseq
          %v4791 = vshrl.u32 %v4790, 7
          %v4792 = vsub.s32 0, %v4791
          %v4793 = vrot.slane %v4769, %v4792
          %v4794 = vlaneseq
          %v4795 = vshrl.u32 %v4794, 7
          %v4796 = vsub.s32 1, %v4795
          %v4797 = vrot.slane %v4769, %v4796
          %v4798 = vlaneseq
          %v4799 = vshrl.u32 %v4798, 7
          %v4800 = vsub.s32 2, %v4799
          %v4801 = vrot.slane %v4769, %v4800
          %v4802 = vlaneseq
          %v4803 = vshrl.u32 %v4802, 7
          %v4804 = vsub.s32 3, %v4803
          %v4805 = vrot.slane %v4769, %v4804
          %v4806 = vlaneseq
          %v4807 = vshrl.u32 %v4806, 7
          %v4808 = vsub.s32 0, %v4807
          %v4809 = vrot.slane %v4770, %v4808
          %v4810 = vlaneseq
          %v4811 = vshrl.u32 %v4810, 7
          %v4812 = vsub.s32 1, %v4811
          %v4813 = vrot.slane %v4770, %v4812
          %v4814 = vlaneseq
          %v4815 = vshrl.u32 %v4814, 7
          %v4816 = vsub.s32 2, %v4815
          %v4817 = vrot.slane %v4770, %v4816
          %v4818 = vlaneseq
          %v4819 = vshrl.u32 %v4818, 7
          %v4820 = vsub.s32 3, %v4819
          %v4821 = vrot.slane %v4770, %v4820
          %v4822 = vcombine.low %v4777, %v4781
          %v4823 = vcombine.low %v4785, %v4789
          %v4825 = vunpack.c.l.s4 1983009808
          %v4826 = vunpack.c.0.s8 %v4825
          %v4827 = vlaneseq
          %v4828 = vshrl.u32 %v4827, 7
          %v4829 = vsub.s32 %v4826, %v4828
          %v4830 = vrot.slane %v4822, %v4829
          %v4832 = vunpack.c.l.s4 1983009808
          %v4833 = vunpack.c.0.s8 %v4832
          %v4834 = vlaneseq
          %v4835 = vshrl.u32 %v4834, 7
          %v4836 = vsub.s32 %v4833, %v4835
          %v4837 = vrot.slane %v4823, %v4836
          %v4838 = vcombine.low %v4830, %v4837
          %v4839 = vcombine.low %v4793, %v4797
          %v4840 = vcombine.low %v4801, %v4805
          %v4842 = vunpack.c.l.s4 1983009808
          %v4843 = vunpack.c.0.s8 %v4842
          %v4844 = vlaneseq
          %v4845 = vshrl.u32 %v4844, 7
          %v4846 = vsub.s32 %v4843, %v4845
          %v4847 = vrot.slane %v4839, %v4846
          %v4849 = vunpack.c.l.s4 1983009808
          %v4850 = vunpack.c.0.s8 %v4849
          %v4851 = vlaneseq
          %v4852 = vshrl.u32 %v4851, 7
          %v4853 = vsub.s32 %v4850, %v4852
          %v4854 = vrot.slane %v4840, %v4853
          %v4855 = vcombine.low %v4847, %v4854
          %v4856 = vcombine.low %v4809, %v4813
          %v4857 = vcombine.low %v4817, %v4821
          %v4859 = vunpack.c.l.s4 1983009808
          %v4860 = vunpack.c.0.s8 %v4859
          %v4861 = vlaneseq
          %v4862 = vshrl.u32 %v4861, 7
          %v4863 = vsub.s32 %v4860, %v4862
          %v4864 = vrot.slane %v4856, %v4863
          %v4866 = vunpack.c.l.s4 1983009808
          %v4867 = vunpack.c.0.s8 %v4866
          %v4868 = vlaneseq
          %v4869 = vshrl.u32 %v4868, 7
          %v4870 = vsub.s32 %v4867, %v4869
          %v4871 = vrot.slane %v4857, %v4870
          %v4872 = vcombine.low %v4864, %v4871
          %v4876 = vadd.f32 %v4765, %v4838
          %v4877 = vadd.f32 %v4766, %v4855
          %v4878 = vadd.f32 %v4767, %v4872
          %v4882 = vcombine.high %v4876, %v4876
          %v4884 = vunpack.c.l.s4 1983009808
          %v4885 = vunpack.c.0.s8 %v4884
          %v4886 = vlaneseq
          %v4887 = vshrl.u32 %v4886, 7
          %v4888 = vsub.s32 %v4885, %v4887
          %v4889 = vrot.slane %v4876, %v4888
          %v4891 = vunpack.c.l.s4 1983009808
          %v4892 = vunpack.c.0.s8 %v4891
          %v4893 = vlaneseq
          %v4894 = vshrl.u32 %v4893, 7
          %v4895 = vsub.s32 %v4892, %v4894
          %v4896 = vrot.slane %v4882, %v4895
          %v4897 = vcombine.high %v4889, %v4889
          %v4898 = vcombine.high %v4896, %v4896
          %v4899 = vcombine.high %v4877, %v4877
          %v4901 = vunpack.c.l.s4 1983009808
          %v4902 = vunpack.c.0.s8 %v4901
          %v4903 = vlaneseq
          %v4904 = vshrl.u32 %v4903, 7
          %v4905 = vsub.s32 %v4902, %v4904
          %v4906 = vrot.slane %v4877, %v4905
          %v4908 = vunpack.c.l.s4 1983009808
          %v4909 = vunpack.c.0.s8 %v4908
          %v4910 = vlaneseq
          %v4911 = vshrl.u32 %v4910, 7
          %v4912 = vsub.s32 %v4909, %v4911
          %v4913 = vrot.slane %v4899, %v4912
          %v4914 = vcombine.high %v4906, %v4906
          %v4915 = vcombine.high %v4913, %v4913
          %v4916 = vcombine.high %v4878, %v4878
          %v4918 = vunpack.c.l.s4 1983009808
          %v4919 = vunpack.c.0.s8 %v4918
          %v4920 = vlaneseq
          %v4921 = vshrl.u32 %v4920, 7
          %v4922 = vsub.s32 %v4919, %v4921
          %v4923 = vrot.slane %v4878, %v4922
          %v4925 = vunpack.c.l.s4 1983009808
          %v4926 = vunpack.c.0.s8 %v4925
          %v4927 = vlaneseq
          %v4928 = vshrl.u32 %v4927, 7
          %v4929 = vsub.s32 %v4926, %v4928
          %v4930 = vrot.slane %v4916, %v4929
          %v4931 = vcombine.high %v4923, %v4923
          %v4932 = vcombine.high %v4930, %v4930
          %v4945 = vpack.c.bf16 %v4889, %v4889
          %v4946 = vpack.c.bf16 %v4897, %v4897
          %v4947 = vpack.c.bf16 %v4896, %v4896
          %v4948 = vpack.c.bf16 %v4898, %v4898
          %v4949 = vpack.c.bf16 %v4906, %v4906
          %v4950 = vpack.c.bf16 %v4914, %v4914
          %v4951 = vpack.c.bf16 %v4913, %v4913
          %v4952 = vpack.c.bf16 %v4915, %v4915
          %v4953 = vpack.c.bf16 %v4923, %v4923
          %v4954 = vpack.c.bf16 %v4931, %v4931
          %v4955 = vpack.c.bf16 %v4930, %v4930
          %v4956 = vpack.c.bf16 %v4932, %v4932
          %s4957 = smul.u32 %s25, 2
          %s4958 = sadd.s32 %s4957, %s26
          %s4959 = smul.u32 %s4958, 512
          %s4960 = sshra.s32 %s4959, 3
          %s4961 = sand.u32 %s4959, 7
          %s4962 = smul.addr %s4960, 4
          %s4963 = scalar_lea.vmem %s3, %s4962
          %v4964 = vld [vmem:[%s4963] sm:$0xf]
          %v4965 = vld [vmem:[%s4963 + $0x4] sm:$0xf]
          %v4966 = vld [vmem:[%s4963 + $0x8] sm:$0xf]
          %v4967 = vld [vmem:[%s4963 + $0xc] sm:$0xf]
          %v4968 = vld [vmem:[%s4963 + $0x10] sm:$0xf]
          %v4969 = vld [vmem:[%s4963 + $0x14] sm:$0xf]
          %v4970 = vld [vmem:[%s4963 + $0x18] sm:$0xf]
          %v4971 = vld [vmem:[%s4963 + $0x1c] sm:$0xf]
          %v4972 = vld [vmem:[%s4963 + $0x20] sm:$0xf]
          %v4973 = vld [vmem:[%s4963 + $0x24] sm:$0xf]
          %v4974 = vld [vmem:[%s4963 + $0x28] sm:$0xf]
          %v4975 = vld [vmem:[%s4963 + $0x2c] sm:$0xf]
          %v4976 = vld [vmem:[%s4963 + $0x30] sm:$0xf]
          %v4977 = vld [vmem:[%s4963 + $0x34] sm:$0xf]
          %v4978 = vld [vmem:[%s4963 + $0x38] sm:$0xf]
          %v4979 = vld [vmem:[%s4963 + $0x3c] sm:$0xf]
          %v4980 = vld [vmem:[%s4963 + $0x40] sm:$0xf]
          %v4981 = vld [vmem:[%s4963 + $0x44] sm:$0xf]
          %v4982 = vld [vmem:[%s4963 + $0x48] sm:$0xf]
          %v4983 = vld [vmem:[%s4963 + $0x4c] sm:$0xf]
          %v4984 = vld [vmem:[%s4963 + $0x50] sm:$0xf]
          %v4985 = vld [vmem:[%s4963 + $0x54] sm:$0xf]
          %v4986 = vld [vmem:[%s4963 + $0x58] sm:$0xf]
          %v4987 = vld [vmem:[%s4963 + $0x5c] sm:$0xf]
          %v4988 = vld [vmem:[%s4963 + $0x60] sm:$0xf]
          %v4989 = vld [vmem:[%s4963 + $0x64] sm:$0xf]
          %v4990 = vld [vmem:[%s4963 + $0x68] sm:$0xf]
          %v4991 = vld [vmem:[%s4963 + $0x6c] sm:$0xf]
          %v4992 = vld [vmem:[%s4963 + $0x70] sm:$0xf]
          %v4993 = vld [vmem:[%s4963 + $0x74] sm:$0xf]
          %v4994 = vld [vmem:[%s4963 + $0x78] sm:$0xf]
          %v4995 = vld [vmem:[%s4963 + $0x7c] sm:$0xf]
          %v4996 = vld [vmem:[%s4963 + $0x80] sm:$0xf]
          %v4997 = vld [vmem:[%s4963 + $0x84] sm:$0xf]
          %v4998 = vld [vmem:[%s4963 + $0x88] sm:$0xf]
          %v4999 = vld [vmem:[%s4963 + $0x8c] sm:$0xf]
          %v5000 = vld [vmem:[%s4963 + $0x90] sm:$0xf]
          %v5001 = vld [vmem:[%s4963 + $0x94] sm:$0xf]
          %v5002 = vld [vmem:[%s4963 + $0x98] sm:$0xf]
          %v5003 = vld [vmem:[%s4963 + $0x9c] sm:$0xf]
          %v5004 = vld [vmem:[%s4963 + $0xa0] sm:$0xf]
          %v5005 = vld [vmem:[%s4963 + $0xa4] sm:$0xf]
          %v5006 = vld [vmem:[%s4963 + $0xa8] sm:$0xf]
          %v5007 = vld [vmem:[%s4963 + $0xac] sm:$0xf]
          %v5008 = vld [vmem:[%s4963 + $0xb0] sm:$0xf]
          %v5009 = vld [vmem:[%s4963 + $0xb4] sm:$0xf]
          %v5010 = vld [vmem:[%s4963 + $0xb8] sm:$0xf]
          %v5011 = vld [vmem:[%s4963 + $0xbc] sm:$0xf]
          %v5012 = vld [vmem:[%s4963 + $0xc0] sm:$0xf]
          %v5013 = vld [vmem:[%s4963 + $0xc4] sm:$0xf]
          %v5014 = vld [vmem:[%s4963 + $0xc8] sm:$0xf]
          %v5015 = vld [vmem:[%s4963 + $0xcc] sm:$0xf]
          %v5016 = vld [vmem:[%s4963 + $0xd0] sm:$0xf]
          %v5017 = vld [vmem:[%s4963 + $0xd4] sm:$0xf]
          %v5018 = vld [vmem:[%s4963 + $0xd8] sm:$0xf]
          %v5019 = vld [vmem:[%s4963 + $0xdc] sm:$0xf]
          %v5020 = vld [vmem:[%s4963 + $0xe0] sm:$0xf]
          %v5021 = vld [vmem:[%s4963 + $0xe4] sm:$0xf]
          %v5022 = vld [vmem:[%s4963 + $0xe8] sm:$0xf]
          %v5023 = vld [vmem:[%s4963 + $0xec] sm:$0xf]
          %v5024 = vld [vmem:[%s4963 + $0xf0] sm:$0xf]
          %v5025 = vld [vmem:[%s4963 + $0xf4] sm:$0xf]
          %v5026 = vld [vmem:[%s4963 + $0xf8] sm:$0xf]
          %v5027 = vld [vmem:[%s4963 + $0xfc] sm:$0xf]
          %s5028 = sadd.s32 %s4959, 1024
          %s5029 = sshra.s32 %s5028, 3
          %s5030 = sand.u32 %s5028, 7
          %s5031 = smul.addr %s5029, 4
          %s5032 = scalar_lea.vmem %s3, %s5031
          %v5033 = vld [vmem:[%s5032] sm:$0xf]
          %v5034 = vld [vmem:[%s5032 + $0x4] sm:$0xf]
          %v5035 = vld [vmem:[%s5032 + $0x8] sm:$0xf]
          %v5036 = vld [vmem:[%s5032 + $0xc] sm:$0xf]
          %v5037 = vld [vmem:[%s5032 + $0x10] sm:$0xf]
          %v5038 = vld [vmem:[%s5032 + $0x14] sm:$0xf]
          %v5039 = vld [vmem:[%s5032 + $0x18] sm:$0xf]
          %v5040 = vld [vmem:[%s5032 + $0x1c] sm:$0xf]
          %v5041 = vld [vmem:[%s5032 + $0x20] sm:$0xf]
          %v5042 = vld [vmem:[%s5032 + $0x24] sm:$0xf]
          %v5043 = vld [vmem:[%s5032 + $0x28] sm:$0xf]
          %v5044 = vld [vmem:[%s5032 + $0x2c] sm:$0xf]
          %v5045 = vld [vmem:[%s5032 + $0x30] sm:$0xf]
          %v5046 = vld [vmem:[%s5032 + $0x34] sm:$0xf]
          %v5047 = vld [vmem:[%s5032 + $0x38] sm:$0xf]
          %v5048 = vld [vmem:[%s5032 + $0x3c] sm:$0xf]
          %v5049 = vld [vmem:[%s5032 + $0x40] sm:$0xf]
          %v5050 = vld [vmem:[%s5032 + $0x44] sm:$0xf]
          %v5051 = vld [vmem:[%s5032 + $0x48] sm:$0xf]
          %v5052 = vld [vmem:[%s5032 + $0x4c] sm:$0xf]
          %v5053 = vld [vmem:[%s5032 + $0x50] sm:$0xf]
          %v5054 = vld [vmem:[%s5032 + $0x54] sm:$0xf]
          %v5055 = vld [vmem:[%s5032 + $0x58] sm:$0xf]
          %v5056 = vld [vmem:[%s5032 + $0x5c] sm:$0xf]
          %v5057 = vld [vmem:[%s5032 + $0x60] sm:$0xf]
          %v5058 = vld [vmem:[%s5032 + $0x64] sm:$0xf]
          %v5059 = vld [vmem:[%s5032 + $0x68] sm:$0xf]
          %v5060 = vld [vmem:[%s5032 + $0x6c] sm:$0xf]
          %v5061 = vld [vmem:[%s5032 + $0x70] sm:$0xf]
          %v5062 = vld [vmem:[%s5032 + $0x74] sm:$0xf]
          %v5063 = vld [vmem:[%s5032 + $0x78] sm:$0xf]
          %v5064 = vld [vmem:[%s5032 + $0x7c] sm:$0xf]
          %v5065 = vld [vmem:[%s5032 + $0x80] sm:$0xf]
          %v5066 = vld [vmem:[%s5032 + $0x84] sm:$0xf]
          %v5067 = vld [vmem:[%s5032 + $0x88] sm:$0xf]
          %v5068 = vld [vmem:[%s5032 + $0x8c] sm:$0xf]
          %v5069 = vld [vmem:[%s5032 + $0x90] sm:$0xf]
          %v5070 = vld [vmem:[%s5032 + $0x94] sm:$0xf]
          %v5071 = vld [vmem:[%s5032 + $0x98] sm:$0xf]
          %v5072 = vld [vmem:[%s5032 + $0x9c] sm:$0xf]
          %v5073 = vld [vmem:[%s5032 + $0xa0] sm:$0xf]
          %v5074 = vld [vmem:[%s5032 + $0xa4] sm:$0xf]
          %v5075 = vld [vmem:[%s5032 + $0xa8] sm:$0xf]
          %v5076 = vld [vmem:[%s5032 + $0xac] sm:$0xf]
          %v5077 = vld [vmem:[%s5032 + $0xb0] sm:$0xf]
          %v5078 = vld [vmem:[%s5032 + $0xb4] sm:$0xf]
          %v5079 = vld [vmem:[%s5032 + $0xb8] sm:$0xf]
          %v5080 = vld [vmem:[%s5032 + $0xbc] sm:$0xf]
          %v5081 = vld [vmem:[%s5032 + $0xc0] sm:$0xf]
          %v5082 = vld [vmem:[%s5032 + $0xc4] sm:$0xf]
          %v5083 = vld [vmem:[%s5032 + $0xc8] sm:$0xf]
          %v5084 = vld [vmem:[%s5032 + $0xcc] sm:$0xf]
          %v5085 = vld [vmem:[%s5032 + $0xd0] sm:$0xf]
          %v5086 = vld [vmem:[%s5032 + $0xd4] sm:$0xf]
          %v5087 = vld [vmem:[%s5032 + $0xd8] sm:$0xf]
          %v5088 = vld [vmem:[%s5032 + $0xdc] sm:$0xf]
          %v5089 = vld [vmem:[%s5032 + $0xe0] sm:$0xf]
          %v5090 = vld [vmem:[%s5032 + $0xe4] sm:$0xf]
          %v5091 = vld [vmem:[%s5032 + $0xe8] sm:$0xf]
          %v5092 = vld [vmem:[%s5032 + $0xec] sm:$0xf]
          %v5093 = vld [vmem:[%s5032 + $0xf0] sm:$0xf]
          %v5094 = vld [vmem:[%s5032 + $0xf4] sm:$0xf]
          %v5095 = vld [vmem:[%s5032 + $0xf8] sm:$0xf]
          %v5096 = vld [vmem:[%s5032 + $0xfc] sm:$0xf]
          %v5161 = vunpack.c.l.b16 %v5033
          %v5162 = vunpack.c.l.b16 %v5034
          %v5163 = vunpack.c.l.b16 %v5035
          %v5164 = vunpack.c.l.b16 %v5036
          %v5165 = vunpack.c.l.b16 %v5037
          %v5166 = vunpack.c.l.b16 %v5038
          %v5167 = vunpack.c.l.b16 %v5039
          %v5168 = vunpack.c.l.b16 %v5040
          %v5169 = vunpack.c.l.b16 %v5041
          %v5170 = vunpack.c.l.b16 %v5042
          %v5171 = vunpack.c.l.b16 %v5043
          %v5172 = vunpack.c.l.b16 %v5044
          %v5173 = vunpack.c.l.b16 %v5045
          %v5174 = vunpack.c.l.b16 %v5046
          %v5175 = vunpack.c.l.b16 %v5047
          %v5176 = vunpack.c.l.b16 %v5048
          %v5177 = vunpack.c.l.b16 %v5049
          %v5178 = vunpack.c.l.b16 %v5050
          %v5179 = vunpack.c.l.b16 %v5051
          %v5180 = vunpack.c.l.b16 %v5052
          %v5181 = vunpack.c.l.b16 %v5053
          %v5182 = vunpack.c.l.b16 %v5054
          %v5183 = vunpack.c.l.b16 %v5055
          %v5184 = vunpack.c.l.b16 %v5056
          %v5185 = vunpack.c.l.b16 %v5057
          %v5186 = vunpack.c.l.b16 %v5058
          %v5187 = vunpack.c.l.b16 %v5059
          %v5188 = vunpack.c.l.b16 %v5060
          %v5189 = vunpack.c.l.b16 %v5061
          %v5190 = vunpack.c.l.b16 %v5062
          %v5191 = vunpack.c.l.b16 %v5063
          %v5192 = vunpack.c.l.b16 %v5064
          %v5193 = vunpack.c.l.b16 %v5065
          %v5194 = vunpack.c.l.b16 %v5066
          %v5195 = vunpack.c.l.b16 %v5067
          %v5196 = vunpack.c.l.b16 %v5068
          %v5197 = vunpack.c.l.b16 %v5069
          %v5198 = vunpack.c.l.b16 %v5070
          %v5199 = vunpack.c.l.b16 %v5071
          %v5200 = vunpack.c.l.b16 %v5072
          %v5201 = vunpack.c.l.b16 %v5073
          %v5202 = vunpack.c.l.b16 %v5074
          %v5203 = vunpack.c.l.b16 %v5075
          %v5204 = vunpack.c.l.b16 %v5076
          %v5205 = vunpack.c.l.b16 %v5077
          %v5206 = vunpack.c.l.b16 %v5078
          %v5207 = vunpack.c.l.b16 %v5079
          %v5208 = vunpack.c.l.b16 %v5080
          %v5209 = vunpack.c.l.b16 %v5081
          %v5210 = vunpack.c.l.b16 %v5082
          %v5211 = vunpack.c.l.b16 %v5083
          %v5212 = vunpack.c.l.b16 %v5084
          %v5213 = vunpack.c.l.b16 %v5085
          %v5214 = vunpack.c.l.b16 %v5086
          %v5215 = vunpack.c.l.b16 %v5087
          %v5216 = vunpack.c.l.b16 %v5088
          %v5217 = vunpack.c.l.b16 %v5089
          %v5218 = vunpack.c.l.b16 %v5090
          %v5219 = vunpack.c.l.b16 %v5091
          %v5220 = vunpack.c.l.b16 %v5092
          %v5221 = vunpack.c.l.b16 %v5093
          %v5222 = vunpack.c.l.b16 %v5094
          %v5223 = vunpack.c.l.b16 %v5095
          %v5224 = vunpack.c.l.b16 %v5096
          %v5225 = vpack.c.b16 %v5162, %v5161
          %v5226 = vpack.c.b16 %v5164, %v5163
          %v5227 = vpack.c.b16 %v5166, %v5165
          %v5228 = vpack.c.b16 %v5168, %v5167
          %v5229 = vpack.c.b16 %v5170, %v5169
          %v5230 = vpack.c.b16 %v5172, %v5171
          %v5231 = vpack.c.b16 %v5174, %v5173
          %v5232 = vpack.c.b16 %v5176, %v5175
          %v5233 = vpack.c.b16 %v5178, %v5177
          %v5234 = vpack.c.b16 %v5180, %v5179
          %v5235 = vpack.c.b16 %v5182, %v5181
          %v5236 = vpack.c.b16 %v5184, %v5183
          %v5237 = vpack.c.b16 %v5186, %v5185
          %v5238 = vpack.c.b16 %v5188, %v5187
          %v5239 = vpack.c.b16 %v5190, %v5189
          %v5240 = vpack.c.b16 %v5192, %v5191
          %v5241 = vpack.c.b16 %v5194, %v5193
          %v5242 = vpack.c.b16 %v5196, %v5195
          %v5243 = vpack.c.b16 %v5198, %v5197
          %v5244 = vpack.c.b16 %v5200, %v5199
          %v5245 = vpack.c.b16 %v5202, %v5201
          %v5246 = vpack.c.b16 %v5204, %v5203
          %v5247 = vpack.c.b16 %v5206, %v5205
          %v5248 = vpack.c.b16 %v5208, %v5207
          %v5249 = vpack.c.b16 %v5210, %v5209
          %v5250 = vpack.c.b16 %v5212, %v5211
          %v5251 = vpack.c.b16 %v5214, %v5213
          %v5252 = vpack.c.b16 %v5216, %v5215
          %v5253 = vpack.c.b16 %v5218, %v5217
          %v5254 = vpack.c.b16 %v5220, %v5219
          %v5255 = vpack.c.b16 %v5222, %v5221
          %v5256 = vpack.c.b16 %v5224, %v5223
          %5289 = vmatprep.subr.bf16.mxu0 0
          %5290 = vmatpush1.bf16.msra.mxu0 %v5225
          %5291 = vmatprep.subr.bf16.mxu0 0
          %5292 = vmatpush1.bf16.msra.mxu0 %v5226
          %5293 = vmatprep.subr.bf16.mxu0 0
          %5294 = vmatpush1.bf16.msra.mxu0 %v5227
          %5295 = vmatprep.subr.bf16.mxu0 0
          %5296 = vmatpush1.bf16.msra.mxu0 %v5228
          %5297 = vmatprep.subr.bf16.mxu0 0
          %5298 = vmatpush1.bf16.msra.mxu0 %v5229
          %5299 = vmatprep.subr.bf16.mxu0 0
          %5300 = vmatpush1.bf16.msra.mxu0 %v5230
          %5301 = vmatprep.subr.bf16.mxu0 0
          %5302 = vmatpush1.bf16.msra.mxu0 %v5231
          %5303 = vmatprep.subr.bf16.mxu0 0
          %5304 = vmatpush1.bf16.msra.mxu0 %v5232
          %5305 = vmatprep.subr.bf16.mxu0 0
          %5306 = vmatpush1.bf16.msra.mxu0 %v5233
          %5307 = vmatprep.subr.bf16.mxu0 0
          %5308 = vmatpush1.bf16.msra.mxu0 %v5234
          %5309 = vmatprep.subr.bf16.mxu0 0
          %5310 = vmatpush1.bf16.msra.mxu0 %v5235
          %5311 = vmatprep.subr.bf16.mxu0 0
          %5312 = vmatpush1.bf16.msra.mxu0 %v5236
          %5313 = vmatprep.subr.bf16.mxu0 0
          %5314 = vmatpush1.bf16.msra.mxu0 %v5237
          %5315 = vmatprep.subr.bf16.mxu0 0
          %5316 = vmatpush1.bf16.msra.mxu0 %v5238
          %5317 = vmatprep.subr.bf16.mxu0 0
          %5318 = vmatpush1.bf16.msra.mxu0 %v5239
          %5319 = vmatprep.subr.bf16.mxu0 0
          %5320 = vmatpush1.bf16.msra.mxu0 %v5240
          %5321 = vmatprep.mubr.bf16.mxu0 %v4950
          %5322 = vmatmul.mubr.bf16.gmra.mrb[0].mxu0 %v4949
          %v5323 = vpop.f32.mrb[0].mxu0
          %v5324 = vadd.f32 0.0, %v5323
          %v5325 = vpop.f32.mrb[0].mxu0
          %v5326 = vpop.f32.mrb[0].mxu0
          %v5327 = vpop.f32.mrb[0].mxu0
          %5328 = vdwg.mxu0
          %5329 = vmatprep.subr.bf16.mxu0 0
          %5330 = vmatpush1.bf16.msra.mxu0 %v5241
          %5331 = vmatprep.subr.bf16.mxu0 0
          %5332 = vmatpush1.bf16.msra.mxu0 %v5242
          %5333 = vmatprep.subr.bf16.mxu0 0
          %5334 = vmatpush1.bf16.msra.mxu0 %v5243
          %5335 = vmatprep.subr.bf16.mxu0 0
          %5336 = vmatpush1.bf16.msra.mxu0 %v5244
          %5337 = vmatprep.subr.bf16.mxu0 0
          %5338 = vmatpush1.bf16.msra.mxu0 %v5245
          %5339 = vmatprep.subr.bf16.mxu0 0
          %5340 = vmatpush1.bf16.msra.mxu0 %v5246
          %5341 = vmatprep.subr.bf16.mxu0 0
          %5342 = vmatpush1.bf16.msra.mxu0 %v5247
          %5343 = vmatprep.subr.bf16.mxu0 0
          %5344 = vmatpush1.bf16.msra.mxu0 %v5248
          %5345 = vmatprep.subr.bf16.mxu0 0
          %5346 = vmatpush1.bf16.msra.mxu0 %v5249
          %5347 = vmatprep.subr.bf16.mxu0 0
          %5348 = vmatpush1.bf16.msra.mxu0 %v5250
          %5349 = vmatprep.subr.bf16.mxu0 0
          %5350 = vmatpush1.bf16.msra.mxu0 %v5251
          %5351 = vmatprep.subr.bf16.mxu0 0
          %5352 = vmatpush1.bf16.msra.mxu0 %v5252
          %5353 = vmatprep.subr.bf16.mxu0 0
          %5354 = vmatpush1.bf16.msra.mxu0 %v5253
          %5355 = vmatprep.subr.bf16.mxu0 0
          %5356 = vmatpush1.bf16.msra.mxu0 %v5254
          %5357 = vmatprep.subr.bf16.mxu0 0
          %5358 = vmatpush1.bf16.msra.mxu0 %v5255
          %5359 = vmatprep.subr.bf16.mxu0 0
          %5360 = vmatpush1.bf16.msra.mxu0 %v5256
          %5361 = vmatprep.mubr.bf16.mxu0 %v4952
          %5362 = vmatmul.mubr.bf16.gmra.mrb[0].mxu0 %v4951
          %v5363 = vpop.f32.mrb[0].mxu0
          %v5364 = vadd.f32 %v5324, %v5363
          %v5365 = vpop.f32.mrb[0].mxu0
          %v5366 = vpop.f32.mrb[0].mxu0
          %v5367 = vpop.f32.mrb[0].mxu0
          %5368 = vdwg.mxu0
          %v5433 = vunpack.c.l.b16 %v4964
          %v5434 = vunpack.c.l.b16 %v4965
          %v5435 = vunpack.c.l.b16 %v4966
          %v5436 = vunpack.c.l.b16 %v4967
          %v5437 = vunpack.c.l.b16 %v4968
          %v5438 = vunpack.c.l.b16 %v4969
          %v5439 = vunpack.c.l.b16 %v4970
          %v5440 = vunpack.c.l.b16 %v4971
          %v5441 = vunpack.c.l.b16 %v4972
          %v5442 = vunpack.c.l.b16 %v4973
          %v5443 = vunpack.c.l.b16 %v4974
          %v5444 = vunpack.c.l.b16 %v4975
          %v5445 = vunpack.c.l.b16 %v4976
          %v5446 = vunpack.c.l.b16 %v4977
          %v5447 = vunpack.c.l.b16 %v4978
          %v5448 = vunpack.c.l.b16 %v4979
          %v5449 = vunpack.c.l.b16 %v4980
          %v5450 = vunpack.c.l.b16 %v4981
          %v5451 = vunpack.c.l.b16 %v4982
          %v5452 = vunpack.c.l.b16 %v4983
          %v5453 = vunpack.c.l.b16 %v4984
          %v5454 = vunpack.c.l.b16 %v4985
          %v5455 = vunpack.c.l.b16 %v4986
          %v5456 = vunpack.c.l.b16 %v4987
          %v5457 = vunpack.c.l.b16 %v4988
          %v5458 = vunpack.c.l.b16 %v4989
          %v5459 = vunpack.c.l.b16 %v4990
          %v5460 = vunpack.c.l.b16 %v4991
          %v5461 = vunpack.c.l.b16 %v4992
          %v5462 = vunpack.c.l.b16 %v4993
          %v5463 = vunpack.c.l.b16 %v4994
          %v5464 = vunpack.c.l.b16 %v4995
          %v5465 = vunpack.c.l.b16 %v4996
          %v5466 = vunpack.c.l.b16 %v4997
          %v5467 = vunpack.c.l.b16 %v4998
          %v5468 = vunpack.c.l.b16 %v4999
          %v5469 = vunpack.c.l.b16 %v5000
          %v5470 = vunpack.c.l.b16 %v5001
          %v5471 = vunpack.c.l.b16 %v5002
          %v5472 = vunpack.c.l.b16 %v5003
          %v5473 = vunpack.c.l.b16 %v5004
          %v5474 = vunpack.c.l.b16 %v5005
          %v5475 = vunpack.c.l.b16 %v5006
          %v5476 = vunpack.c.l.b16 %v5007
          %v5477 = vunpack.c.l.b16 %v5008
          %v5478 = vunpack.c.l.b16 %v5009
          %v5479 = vunpack.c.l.b16 %v5010
          %v5480 = vunpack.c.l.b16 %v5011
          %v5481 = vunpack.c.l.b16 %v5012
          %v5482 = vunpack.c.l.b16 %v5013
          %v5483 = vunpack.c.l.b16 %v5014
          %v5484 = vunpack.c.l.b16 %v5015
          %v5485 = vunpack.c.l.b16 %v5016
          %v5486 = vunpack.c.l.b16 %v5017
          %v5487 = vunpack.c.l.b16 %v5018
          %v5488 = vunpack.c.l.b16 %v5019
          %v5489 = vunpack.c.l.b16 %v5020
          %v5490 = vunpack.c.l.b16 %v5021
          %v5491 = vunpack.c.l.b16 %v5022
          %v5492 = vunpack.c.l.b16 %v5023
          %v5493 = vunpack.c.l.b16 %v5024
          %v5494 = vunpack.c.l.b16 %v5025
          %v5495 = vunpack.c.l.b16 %v5026
          %v5496 = vunpack.c.l.b16 %v5027
          %v5497 = vpack.c.b16 %v5434, %v5433
          %v5498 = vpack.c.b16 %v5436, %v5435
          %v5499 = vpack.c.b16 %v5438, %v5437
          %v5500 = vpack.c.b16 %v5440, %v5439
          %v5501 = vpack.c.b16 %v5442, %v5441
          %v5502 = vpack.c.b16 %v5444, %v5443
          %v5503 = vpack.c.b16 %v5446, %v5445
          %v5504 = vpack.c.b16 %v5448, %v5447
          %v5505 = vpack.c.b16 %v5450, %v5449
          %v5506 = vpack.c.b16 %v5452, %v5451
          %v5507 = vpack.c.b16 %v5454, %v5453
          %v5508 = vpack.c.b16 %v5456, %v5455
          %v5509 = vpack.c.b16 %v5458, %v5457
          %v5510 = vpack.c.b16 %v5460, %v5459
          %v5511 = vpack.c.b16 %v5462, %v5461
          %v5512 = vpack.c.b16 %v5464, %v5463
          %v5513 = vpack.c.b16 %v5466, %v5465
          %v5514 = vpack.c.b16 %v5468, %v5467
          %v5515 = vpack.c.b16 %v5470, %v5469
          %v5516 = vpack.c.b16 %v5472, %v5471
          %v5517 = vpack.c.b16 %v5474, %v5473
          %v5518 = vpack.c.b16 %v5476, %v5475
          %v5519 = vpack.c.b16 %v5478, %v5477
          %v5520 = vpack.c.b16 %v5480, %v5479
          %v5521 = vpack.c.b16 %v5482, %v5481
          %v5522 = vpack.c.b16 %v5484, %v5483
          %v5523 = vpack.c.b16 %v5486, %v5485
          %v5524 = vpack.c.b16 %v5488, %v5487
          %v5525 = vpack.c.b16 %v5490, %v5489
          %v5526 = vpack.c.b16 %v5492, %v5491
          %v5527 = vpack.c.b16 %v5494, %v5493
          %v5528 = vpack.c.b16 %v5496, %v5495
          %5561 = vmatprep.subr.bf16.mxu0 0
          %5562 = vmatpush1.bf16.msra.mxu0 %v5497
          %5563 = vmatprep.subr.bf16.mxu0 0
          %5564 = vmatpush1.bf16.msra.mxu0 %v5498
          %5565 = vmatprep.subr.bf16.mxu0 0
          %5566 = vmatpush1.bf16.msra.mxu0 %v5499
          %5567 = vmatprep.subr.bf16.mxu0 0
          %5568 = vmatpush1.bf16.msra.mxu0 %v5500
          %5569 = vmatprep.subr.bf16.mxu0 0
          %5570 = vmatpush1.bf16.msra.mxu0 %v5501
          %5571 = vmatprep.subr.bf16.mxu0 0
          %5572 = vmatpush1.bf16.msra.mxu0 %v5502
          %5573 = vmatprep.subr.bf16.mxu0 0
          %5574 = vmatpush1.bf16.msra.mxu0 %v5503
          %5575 = vmatprep.subr.bf16.mxu0 0
          %5576 = vmatpush1.bf16.msra.mxu0 %v5504
          %5577 = vmatprep.subr.bf16.mxu0 0
          %5578 = vmatpush1.bf16.msra.mxu0 %v5505
          %5579 = vmatprep.subr.bf16.mxu0 0
          %5580 = vmatpush1.bf16.msra.mxu0 %v5506
          %5581 = vmatprep.subr.bf16.mxu0 0
          %5582 = vmatpush1.bf16.msra.mxu0 %v5507
          %5583 = vmatprep.subr.bf16.mxu0 0
          %5584 = vmatpush1.bf16.msra.mxu0 %v5508
          %5585 = vmatprep.subr.bf16.mxu0 0
          %5586 = vmatpush1.bf16.msra.mxu0 %v5509
          %5587 = vmatprep.subr.bf16.mxu0 0
          %5588 = vmatpush1.bf16.msra.mxu0 %v5510
          %5589 = vmatprep.subr.bf16.mxu0 0
          %5590 = vmatpush1.bf16.msra.mxu0 %v5511
          %5591 = vmatprep.subr.bf16.mxu0 0
          %5592 = vmatpush1.bf16.msra.mxu0 %v5512
          %5593 = vmatprep.mubr.bf16.mxu0 %v4946
          %5594 = vmatmul.mubr.bf16.gmra.mrb[0].mxu0 %v4945
          %v5595 = vpop.f32.mrb[0].mxu0
          %v5596 = vadd.f32 %v5364, %v5595
          %v5597 = vpop.f32.mrb[0].mxu0
          %v5598 = vpop.f32.mrb[0].mxu0
          %v5599 = vpop.f32.mrb[0].mxu0
          %5600 = vdwg.mxu0
          %5601 = vmatprep.subr.bf16.mxu0 0
          %5602 = vmatpush1.bf16.msra.mxu0 %v5513
          %5603 = vmatprep.subr.bf16.mxu0 0
          %5604 = vmatpush1.bf16.msra.mxu0 %v5514
          %5605 = vmatprep.subr.bf16.mxu0 0
          %5606 = vmatpush1.bf16.msra.mxu0 %v5515
          %5607 = vmatprep.subr.bf16.mxu0 0
          %5608 = vmatpush1.bf16.msra.mxu0 %v5516
          %5609 = vmatprep.subr.bf16.mxu0 0
          %5610 = vmatpush1.bf16.msra.mxu0 %v5517
          %5611 = vmatprep.subr.bf16.mxu0 0
          %5612 = vmatpush1.bf16.msra.mxu0 %v5518
          %5613 = vmatprep.subr.bf16.mxu0 0
          %5614 = vmatpush1.bf16.msra.mxu0 %v5519
          %5615 = vmatprep.subr.bf16.mxu0 0
          %5616 = vmatpush1.bf16.msra.mxu0 %v5520
          %5617 = vmatprep.subr.bf16.mxu0 0
          %5618 = vmatpush1.bf16.msra.mxu0 %v5521
          %5619 = vmatprep.subr.bf16.mxu0 0
          %5620 = vmatpush1.bf16.msra.mxu0 %v5522
          %5621 = vmatprep.subr.bf16.mxu0 0
          %5622 = vmatpush1.bf16.msra.mxu0 %v5523
          %5623 = vmatprep.subr.bf16.mxu0 0
          %5624 = vmatpush1.bf16.msra.mxu0 %v5524
          %5625 = vmatprep.subr.bf16.mxu0 0
          %5626 = vmatpush1.bf16.msra.mxu0 %v5525
          %5627 = vmatprep.subr.bf16.mxu0 0
          %5628 = vmatpush1.bf16.msra.mxu0 %v5526
          %5629 = vmatprep.subr.bf16.mxu0 0
          %5630 = vmatpush1.bf16.msra.mxu0 %v5527
          %5631 = vmatprep.subr.bf16.mxu0 0
          %5632 = vmatpush1.bf16.msra.mxu0 %v5528
          %5633 = vmatprep.mubr.bf16.mxu0 %v4948
          %5634 = vmatmul.mubr.bf16.gmra.mrb[0].mxu0 %v4947
          %v5635 = vpop.f32.mrb[0].mxu0
          %v5636 = vadd.f32 %v5596, %v5635
          %v5637 = vpop.f32.mrb[0].mxu0
          %v5638 = vpop.f32.mrb[0].mxu0
          %v5639 = vpop.f32.mrb[0].mxu0
          %5640 = vdwg.mxu0
          %s5641 = sadd.s32 %s4959, 2048
          %s5642 = sshra.s32 %s5641, 3
          %s5643 = sand.u32 %s5641, 7
          %s5644 = smul.addr %s5642, 4
          %s5645 = scalar_lea.vmem %s3, %s5644
          %v5646 = vld [vmem:[%s5645] sm:$0xf]
          %v5647 = vld [vmem:[%s5645 + $0x4] sm:$0xf]
          %v5648 = vld [vmem:[%s5645 + $0x8] sm:$0xf]
          %v5649 = vld [vmem:[%s5645 + $0xc] sm:$0xf]
          %v5650 = vld [vmem:[%s5645 + $0x10] sm:$0xf]
          %v5651 = vld [vmem:[%s5645 + $0x14] sm:$0xf]
          %v5652 = vld [vmem:[%s5645 + $0x18] sm:$0xf]
          %v5653 = vld [vmem:[%s5645 + $0x1c] sm:$0xf]
          %v5654 = vld [vmem:[%s5645 + $0x20] sm:$0xf]
          %v5655 = vld [vmem:[%s5645 + $0x24] sm:$0xf]
          %v5656 = vld [vmem:[%s5645 + $0x28] sm:$0xf]
          %v5657 = vld [vmem:[%s5645 + $0x2c] sm:$0xf]
          %v5658 = vld [vmem:[%s5645 + $0x30] sm:$0xf]
          %v5659 = vld [vmem:[%s5645 + $0x34] sm:$0xf]
          %v5660 = vld [vmem:[%s5645 + $0x38] sm:$0xf]
          %v5661 = vld [vmem:[%s5645 + $0x3c] sm:$0xf]
          %v5662 = vld [vmem:[%s5645 + $0x40] sm:$0xf]
          %v5663 = vld [vmem:[%s5645 + $0x44] sm:$0xf]
          %v5664 = vld [vmem:[%s5645 + $0x48] sm:$0xf]
          %v5665 = vld [vmem:[%s5645 + $0x4c] sm:$0xf]
          %v5666 = vld [vmem:[%s5645 + $0x50] sm:$0xf]
          %v5667 = vld [vmem:[%s5645 + $0x54] sm:$0xf]
          %v5668 = vld [vmem:[%s5645 + $0x58] sm:$0xf]
          %v5669 = vld [vmem:[%s5645 + $0x5c] sm:$0xf]
          %v5670 = vld [vmem:[%s5645 + $0x60] sm:$0xf]
          %v5671 = vld [vmem:[%s5645 + $0x64] sm:$0xf]
          %v5672 = vld [vmem:[%s5645 + $0x68] sm:$0xf]
          %v5673 = vld [vmem:[%s5645 + $0x6c] sm:$0xf]
          %v5674 = vld [vmem:[%s5645 + $0x70] sm:$0xf]
          %v5675 = vld [vmem:[%s5645 + $0x74] sm:$0xf]
          %v5676 = vld [vmem:[%s5645 + $0x78] sm:$0xf]
          %v5677 = vld [vmem:[%s5645 + $0x7c] sm:$0xf]
          %v5678 = vld [vmem:[%s5645 + $0x80] sm:$0xf]
          %v5679 = vld [vmem:[%s5645 + $0x84] sm:$0xf]
          %v5680 = vld [vmem:[%s5645 + $0x88] sm:$0xf]
          %v5681 = vld [vmem:[%s5645 + $0x8c] sm:$0xf]
          %v5682 = vld [vmem:[%s5645 + $0x90] sm:$0xf]
          %v5683 = vld [vmem:[%s5645 + $0x94] sm:$0xf]
          %v5684 = vld [vmem:[%s5645 + $0x98] sm:$0xf]
          %v5685 = vld [vmem:[%s5645 + $0x9c] sm:$0xf]
          %v5686 = vld [vmem:[%s5645 + $0xa0] sm:$0xf]
          %v5687 = vld [vmem:[%s5645 + $0xa4] sm:$0xf]
          %v5688 = vld [vmem:[%s5645 + $0xa8] sm:$0xf]
          %v5689 = vld [vmem:[%s5645 + $0xac] sm:$0xf]
          %v5690 = vld [vmem:[%s5645 + $0xb0] sm:$0xf]
          %v5691 = vld [vmem:[%s5645 + $0xb4] sm:$0xf]
          %v5692 = vld [vmem:[%s5645 + $0xb8] sm:$0xf]
          %v5693 = vld [vmem:[%s5645 + $0xbc] sm:$0xf]
          %v5694 = vld [vmem:[%s5645 + $0xc0] sm:$0xf]
          %v5695 = vld [vmem:[%s5645 + $0xc4] sm:$0xf]
          %v5696 = vld [vmem:[%s5645 + $0xc8] sm:$0xf]
          %v5697 = vld [vmem:[%s5645 + $0xcc] sm:$0xf]
          %v5698 = vld [vmem:[%s5645 + $0xd0] sm:$0xf]
          %v5699 = vld [vmem:[%s5645 + $0xd4] sm:$0xf]
          %v5700 = vld [vmem:[%s5645 + $0xd8] sm:$0xf]
          %v5701 = vld [vmem:[%s5645 + $0xdc] sm:$0xf]
          %v5702 = vld [vmem:[%s5645 + $0xe0] sm:$0xf]
          %v5703 = vld [vmem:[%s5645 + $0xe4] sm:$0xf]
          %v5704 = vld [vmem:[%s5645 + $0xe8] sm:$0xf]
          %v5705 = vld [vmem:[%s5645 + $0xec] sm:$0xf]
          %v5706 = vld [vmem:[%s5645 + $0xf0] sm:$0xf]
          %v5707 = vld [vmem:[%s5645 + $0xf4] sm:$0xf]
          %v5708 = vld [vmem:[%s5645 + $0xf8] sm:$0xf]
          %v5709 = vld [vmem:[%s5645 + $0xfc] sm:$0xf]
          %v5774 = vunpack.c.l.b16 %v5646
          %v5775 = vunpack.c.l.b16 %v5647
          %v5776 = vunpack.c.l.b16 %v5648
          %v5777 = vunpack.c.l.b16 %v5649
          %v5778 = vunpack.c.l.b16 %v5650
          %v5779 = vunpack.c.l.b16 %v5651
          %v5780 = vunpack.c.l.b16 %v5652
          %v5781 = vunpack.c.l.b16 %v5653
          %v5782 = vunpack.c.l.b16 %v5654
          %v5783 = vunpack.c.l.b16 %v5655
          %v5784 = vunpack.c.l.b16 %v5656
          %v5785 = vunpack.c.l.b16 %v5657
          %v5786 = vunpack.c.l.b16 %v5658
          %v5787 = vunpack.c.l.b16 %v5659
          %v5788 = vunpack.c.l.b16 %v5660
          %v5789 = vunpack.c.l.b16 %v5661
          %v5790 = vunpack.c.l.b16 %v5662
          %v5791 = vunpack.c.l.b16 %v5663
          %v5792 = vunpack.c.l.b16 %v5664
          %v5793 = vunpack.c.l.b16 %v5665
          %v5794 = vunpack.c.l.b16 %v5666
          %v5795 = vunpack.c.l.b16 %v5667
          %v5796 = vunpack.c.l.b16 %v5668
          %v5797 = vunpack.c.l.b16 %v5669
          %v5798 = vunpack.c.l.b16 %v5670
          %v5799 = vunpack.c.l.b16 %v5671
          %v5800 = vunpack.c.l.b16 %v5672
          %v5801 = vunpack.c.l.b16 %v5673
          %v5802 = vunpack.c.l.b16 %v5674
          %v5803 = vunpack.c.l.b16 %v5675
          %v5804 = vunpack.c.l.b16 %v5676
          %v5805 = vunpack.c.l.b16 %v5677
          %v5806 = vunpack.c.l.b16 %v5678
          %v5807 = vunpack.c.l.b16 %v5679
          %v5808 = vunpack.c.l.b16 %v5680
          %v5809 = vunpack.c.l.b16 %v5681
          %v5810 = vunpack.c.l.b16 %v5682
          %v5811 = vunpack.c.l.b16 %v5683
          %v5812 = vunpack.c.l.b16 %v5684
          %v5813 = vunpack.c.l.b16 %v5685
          %v5814 = vunpack.c.l.b16 %v5686
          %v5815 = vunpack.c.l.b16 %v5687
          %v5816 = vunpack.c.l.b16 %v5688
          %v5817 = vunpack.c.l.b16 %v5689
          %v5818 = vunpack.c.l.b16 %v5690
          %v5819 = vunpack.c.l.b16 %v5691
          %v5820 = vunpack.c.l.b16 %v5692
          %v5821 = vunpack.c.l.b16 %v5693
          %v5822 = vunpack.c.l.b16 %v5694
          %v5823 = vunpack.c.l.b16 %v5695
          %v5824 = vunpack.c.l.b16 %v5696
          %v5825 = vunpack.c.l.b16 %v5697
          %v5826 = vunpack.c.l.b16 %v5698
          %v5827 = vunpack.c.l.b16 %v5699
          %v5828 = vunpack.c.l.b16 %v5700
          %v5829 = vunpack.c.l.b16 %v5701
          %v5830 = vunpack.c.l.b16 %v5702
          %v5831 = vunpack.c.l.b16 %v5703
          %v5832 = vunpack.c.l.b16 %v5704
          %v5833 = vunpack.c.l.b16 %v5705
          %v5834 = vunpack.c.l.b16 %v5706
          %v5835 = vunpack.c.l.b16 %v5707
          %v5836 = vunpack.c.l.b16 %v5708
          %v5837 = vunpack.c.l.b16 %v5709
          %v5838 = vpack.c.b16 %v5775, %v5774
          %v5839 = vpack.c.b16 %v5777, %v5776
          %v5840 = vpack.c.b16 %v5779, %v5778
          %v5841 = vpack.c.b16 %v5781, %v5780
          %v5842 = vpack.c.b16 %v5783, %v5782
          %v5843 = vpack.c.b16 %v5785, %v5784
          %v5844 = vpack.c.b16 %v5787, %v5786
          %v5845 = vpack.c.b16 %v5789, %v5788
          %v5846 = vpack.c.b16 %v5791, %v5790
          %v5847 = vpack.c.b16 %v5793, %v5792
          %v5848 = vpack.c.b16 %v5795, %v5794
          %v5849 = vpack.c.b16 %v5797, %v5796
          %v5850 = vpack.c.b16 %v5799, %v5798
          %v5851 = vpack.c.b16 %v5801, %v5800
          %v5852 = vpack.c.b16 %v5803, %v5802
          %v5853 = vpack.c.b16 %v5805, %v5804
          %v5854 = vpack.c.b16 %v5807, %v5806
          %v5855 = vpack.c.b16 %v5809, %v5808
          %v5856 = vpack.c.b16 %v5811, %v5810
          %v5857 = vpack.c.b16 %v5813, %v5812
          %v5858 = vpack.c.b16 %v5815, %v5814
          %v5859 = vpack.c.b16 %v5817, %v5816
          %v5860 = vpack.c.b16 %v5819, %v5818
          %v5861 = vpack.c.b16 %v5821, %v5820
          %v5862 = vpack.c.b16 %v5823, %v5822
          %v5863 = vpack.c.b16 %v5825, %v5824
          %v5864 = vpack.c.b16 %v5827, %v5826
          %v5865 = vpack.c.b16 %v5829, %v5828
          %v5866 = vpack.c.b16 %v5831, %v5830
          %v5867 = vpack.c.b16 %v5833, %v5832
          %v5868 = vpack.c.b16 %v5835, %v5834
          %v5869 = vpack.c.b16 %v5837, %v5836
          %5902 = vmatprep.subr.bf16.mxu0 0
          %5903 = vmatpush1.bf16.msra.mxu0 %v5838
          %5904 = vmatprep.subr.bf16.mxu0 0
          %5905 = vmatpush1.bf16.msra.mxu0 %v5839
          %5906 = vmatprep.subr.bf16.mxu0 0
          %5907 = vmatpush1.bf16.msra.mxu0 %v5840
          %5908 = vmatprep.subr.bf16.mxu0 0
          %5909 = vmatpush1.bf16.msra.mxu0 %v5841
          %5910 = vmatprep.subr.bf16.mxu0 0
          %5911 = vmatpush1.bf16.msra.mxu0 %v5842
          %5912 = vmatprep.subr.bf16.mxu0 0
          %5913 = vmatpush1.bf16.msra.mxu0 %v5843
          %5914 = vmatprep.subr.bf16.mxu0 0
          %5915 = vmatpush1.bf16.msra.mxu0 %v5844
          %5916 = vmatprep.subr.bf16.mxu0 0
          %5917 = vmatpush1.bf16.msra.mxu0 %v5845
          %5918 = vmatprep.subr.bf16.mxu0 0
          %5919 = vmatpush1.bf16.msra.mxu0 %v5846
          %5920 = vmatprep.subr.bf16.mxu0 0
          %5921 = vmatpush1.bf16.msra.mxu0 %v5847
          %5922 = vmatprep.subr.bf16.mxu0 0
          %5923 = vmatpush1.bf16.msra.mxu0 %v5848
          %5924 = vmatprep.subr.bf16.mxu0 0
          %5925 = vmatpush1.bf16.msra.mxu0 %v5849
          %5926 = vmatprep.subr.bf16.mxu0 0
          %5927 = vmatpush1.bf16.msra.mxu0 %v5850
          %5928 = vmatprep.subr.bf16.mxu0 0
          %5929 = vmatpush1.bf16.msra.mxu0 %v5851
          %5930 = vmatprep.subr.bf16.mxu0 0
          %5931 = vmatpush1.bf16.msra.mxu0 %v5852
          %5932 = vmatprep.subr.bf16.mxu0 0
          %5933 = vmatpush1.bf16.msra.mxu0 %v5853
          %5934 = vmatprep.mubr.bf16.mxu0 %v4954
          %5935 = vmatmul.mubr.bf16.gmra.mrb[0].mxu0 %v4953
          %v5936 = vpop.f32.mrb[0].mxu0
          %v5937 = vadd.f32 0.0, %v5936
          %v5938 = vpop.f32.mrb[0].mxu0
          %v5939 = vpop.f32.mrb[0].mxu0
          %v5940 = vpop.f32.mrb[0].mxu0
          %5941 = vdwg.mxu0
          %5942 = vmatprep.subr.bf16.mxu0 0
          %5943 = vmatpush1.bf16.msra.mxu0 %v5854
          %5944 = vmatprep.subr.bf16.mxu0 0
          %5945 = vmatpush1.bf16.msra.mxu0 %v5855
          %5946 = vmatprep.subr.bf16.mxu0 0
          %5947 = vmatpush1.bf16.msra.mxu0 %v5856
          %5948 = vmatprep.subr.bf16.mxu0 0
          %5949 = vmatpush1.bf16.msra.mxu0 %v5857
          %5950 = vmatprep.subr.bf16.mxu0 0
          %5951 = vmatpush1.bf16.msra.mxu0 %v5858
          %5952 = vmatprep.subr.bf16.mxu0 0
          %5953 = vmatpush1.bf16.msra.mxu0 %v5859
          %5954 = vmatprep.subr.bf16.mxu0 0
          %5955 = vmatpush1.bf16.msra.mxu0 %v5860
          %5956 = vmatprep.subr.bf16.mxu0 0
          %5957 = vmatpush1.bf16.msra.mxu0 %v5861
          %5958 = vmatprep.subr.bf16.mxu0 0
          %5959 = vmatpush1.bf16.msra.mxu0 %v5862
          %5960 = vmatprep.subr.bf16.mxu0 0
          %5961 = vmatpush1.bf16.msra.mxu0 %v5863
          %5962 = vmatprep.subr.bf16.mxu0 0
          %5963 = vmatpush1.bf16.msra.mxu0 %v5864
          %5964 = vmatprep.subr.bf16.mxu0 0
          %5965 = vmatpush1.bf16.msra.mxu0 %v5865
          %5966 = vmatprep.subr.bf16.mxu0 0
          %5967 = vmatpush1.bf16.msra.mxu0 %v5866
          %5968 = vmatprep.subr.bf16.mxu0 0
          %5969 = vmatpush1.bf16.msra.mxu0 %v5867
          %5970 = vmatprep.subr.bf16.mxu0 0
          %5971 = vmatpush1.bf16.msra.mxu0 %v5868
          %5972 = vmatprep.subr.bf16.mxu0 0
          %5973 = vmatpush1.bf16.msra.mxu0 %v5869
          %5974 = vmatprep.mubr.bf16.mxu0 %v4956
          %5975 = vmatmul.mubr.bf16.gmra.mrb[0].mxu0 %v4955
          %v5976 = vpop.f32.mrb[0].mxu0
          %v5977 = vadd.f32 %v5937, %v5976
          %v5978 = vpop.f32.mrb[0].mxu0
          %v5979 = vpop.f32.mrb[0].mxu0
          %v5980 = vpop.f32.mrb[0].mxu0
          %5981 = vdwg.mxu0
          %v5982 = vadd.f32 %v5636, %v5977
          %v5983 = vld [vmem:[#allocation9] sm:$0x3]
          %v5984 = vadd.f32 %v5983, %v5982
          %vm5985 = vcmask 9216
          %5986 = vst.msk [vmem:[#allocation9] sm:$0x3] %vm5985, %v5984
        $region60: #{tpu_custom_call.1} parent=35 // pred_fallthru
          _
        // Predicated region
        $region61: #{tpu_custom_call.1} parent=35 // pred_check
          %p5987 = pneg %p166
        $region62: #{tpu_custom_call.1} parent=35 // pred_check_branch
          %5989 = sbr.rel (%p5987) target = $region64
        $region63: #{tpu_custom_call.1} parent=35 // pred_region
          %s5991 = ssub.s32 32, 32
          %5992 = vsyncadd [#allocation5], %s5991
          %s5993 = smul.addr %s25, 32
          %s5994 = scalar_lea.hbm %s4, %s5993
          %s5996 = sshll.u32 [#allocation9], 4
          %s5997 = int_to_ptr.vmem [resolvable:$true] %s5996
          %5999 = dma.vmem_to_hbm [thread:$0]  %s5997, 32, %s5994, [#allocation5]
        $region64: #{tpu_custom_call.1} parent=35 // pred_fallthru
          _
        // Predicated region
        $region65: #{tpu_custom_call.1} parent=35 // pred_check
          %p6000 = pneg %p166
        $region66: #{tpu_custom_call.1} parent=35 // pred_check_branch
          %6002 = sbr.rel (%p6000) target = $region68
        $region67: #{tpu_custom_call.1} parent=35 // pred_region
          %6003 = dma.done [#allocation5], 32
        $region68: #{tpu_custom_call.1} parent=35 // pred_fallthru
          _
      $region36: #{tpu_custom_call.1} parent=5 // pred_fallthru
        _
      %p6004 = scmp.le.s32.totalorder 2, %s15
      // Predicated region
      $region69: #{tpu_custom_call.1} parent=5 // pred_check
        %p6005 = pneg %p6004
      $region70: #{tpu_custom_call.1} parent=5 // pred_check_branch
        %6007 = sbr.rel (%p6005) target = $region72
      $region71: #{tpu_custom_call.1} parent=5 // pred_region
        %s6008 = ssub.s32 %s15, 2
      $region72: #{tpu_custom_call.1} parent=5 // pred_fallthru
        _
    $region6: #{tpu_custom_call.1} parent=1 // loop_footer
      %s19 = sadd.s32 1, %s15
    $region7: #{tpu_custom_call.1} parent=1 // loop_footer_branch
      %14 = sbr.rel target = $region3
    $region8: #{tpu_custom_call.1} parent=1 // loop_exit
      _
    %6009 = vsyncpa [#allocation4], 1
    %s6010 = scalar_lea.sflag [#allocation4], 1
    %6011 = vsyncpa %s6010, 1
    %6012 = vsyncpa [#allocation7], 1
    %s6013 = scalar_lea.sflag [#allocation7], 1
    %6014 = vsyncpa %s6013, 1
    %6015 = vsyncpa [#allocation5], 1
    %s6016 = scalar_lea.sflag [#allocation5], 1
    %6017 = vsyncpa %s6016, 1

</llo_original>
